<compile_context>
chip_gen: v5e
topology: v5e:2x2
jax: 0.10.0
libtpu: 0.0.40
codegen_flags: <defaults>
</compile_context>

<pallas_src>
import functools

import jax
import jax.numpy as jnp
from jax.experimental import pallas as pl
from jax.experimental.pallas import tpu as pltpu

# ----------------------------------------------------------------------------
# Small config consistent with the module's forward semantics
# (max_volume_size must equal the actual input volume for the final .view).
# ----------------------------------------------------------------------------
BATCH      = 2
IN_CHANS   = 2
VOLUME     = 8          # D = H = W = max_volume_size
PATCH      = 4
EMBED_DIM  = 32
DEPTH      = 2
NUM_HEADS  = 4
MLP_RATIO  = 2.0
HIDDEN_DIM = int(EMBED_DIM * MLP_RATIO)
PARAM_DIM  = 10
EPS        = 1e-6       # norm_layer = partial(nn.LayerNorm, eps=1e-6)


# ----------------------------------------------------------------------------
# In-kernel helpers
# ----------------------------------------------------------------------------
def _vcat(parts, axis=0):
    return parts[0] if len(parts) == 1 else jnp.concatenate(parts, axis=axis)


def _layer_norm(x, g, b):
    mu = jnp.mean(x, axis=-1, keepdims=True)
    xc = x - mu
    var = jnp.mean(xc * xc, axis=-1, keepdims=True)
    return xc * jax.lax.rsqrt(var + EPS) * g + b


def _gelu_tanh(x):
    # tanh-based GELU: jnp.tanh lowers to the EUP slot (idle here).
    # TODO(synk): nn.GELU() default is the exact erf GELU; tanh form differs by
    # < 1e-3 absolute -- swap in lax.erf if exact parity is required.
    c = 0.7978845608028654  # sqrt(2/pi)
    return 0.5 * x * (1.0 + jnp.tanh(c * (x + 0.044715 * x * x * x)))


def _dot(a, w_t):
    # Activations @ pre-transposed weight (in_dim, out_dim): feeds the MXU
    # directly, no in-kernel RHS transpose.
    return jnp.dot(a, w_t, preferred_element_type=jnp.float32)


# ----------------------------------------------------------------------------
# Fused kernel: one grid step == `bb` batch elements, everything VMEM-resident.
# ----------------------------------------------------------------------------
def _fused_vit_kernel(xp_ref, pt_ref,
                      patch_w_ref, patch_b_ref, param_w_ref, param_b_ref,
                      ln1_w_ref, ln1_b_ref, qkv_w_ref, qkv_b_ref,
                      proj_w_ref, proj_b_ref, ln2_w_ref, ln2_b_ref,
                      fc1_w_ref, fc1_b_ref, fc2_w_ref, fc2_b_ref,
                      norm_w_ref, norm_b_ref, head_w_ref, head_b_ref,
                      o_ref, *, num_heads, depth, n_patches, bb):
    d = patch_w_ref.shape[1]
    hd = d // num_heads
    n_tok = n_patches + 1
    scale = float(hd) ** -0.5

    # ---- PatchEmbed3D: one batched (bb*n_patches, patch_in) @ (patch_in, d) --
    patches = _dot(xp_ref[...], patch_w_ref[...]) + patch_b_ref[...]
    # ---- ParameterEmbedding (assumed Linear(param_dim, embed_dim)) ----------
    pt = _vcat([pt_ref[b] for b in range(bb)], axis=0)          # (bb, param_dim)
    ptok = _dot(pt, param_w_ref[...]) + param_b_ref[...]        # (bb, d)

    # tokens = cat([patch_tokens, param_token], dim=1) per batch element,
    # stacked along rows -> (bb*n_tok, d).  Single concat, stays in vregs.
    rows = []
    for b in range(bb):
        rows.append(patches[b * n_patches:(b + 1) * n_patches])
        rows.append(ptok[b:b + 1])
    x = _vcat(rows, axis=0)

    # ---- transformer blocks (static unroll: depth / heads / bb are tiny) -----
    for l in range(depth):
        xn = _layer_norm(x, ln1_w_ref[l], ln1_b_ref[l])
        # Fused QKV projection: one matmul per layer, all heads + batch rows.
        qkv = _dot(xn, qkv_w_ref[l]) + qkv_b_ref[l]             # (bb*n_tok, 3d)
        attn_rows = []
        for b in range(bb):
            r0 = b * n_tok
            heads = []
            for h in range(num_heads):
                c0 = h * hd
                q = qkv[r0:r0 + n_tok, c0:c0 + hd]
                k = qkv[r0:r0 + n_tok, d + c0:d + c0 + hd]
                v = qkv[r0:r0 + n_tok, 2 * d + c0:2 * d + c0 + hd]
                s = jax.lax.dot_general(
                    q, k, (((1,), (1,)), ((), ())),
                    preferred_element_type=jnp.float32) * scale  # (n_tok, n_tok)
                s = s - jnp.max(s, axis=-1, keepdims=True)
                p = jnp.exp(s)
                p = p * pl.reciprocal(jnp.sum(p, axis=-1, keepdims=True),
                                      approx=True)
                heads.append(_dot(p, v))                          # (n_tok, hd)
            attn_rows.append(_vcat(heads, axis=1))                # (n_tok, d)
        attn = _vcat(attn_rows, axis=0)                           # (bb*n_tok, d)
        # Single output projection for all heads & batch elements.
        x = x + _dot(attn, proj_w_ref[l]) + proj_b_ref[l]

        xn2 = _layer_norm(x, ln2_w_ref[l], ln2_b_ref[l])
        h1 = _gelu_tanh(_dot(xn2, fc1_w_ref[l]) + fc1_b_ref[l])
        x = x + _dot(h1, fc2_w_ref[l]) + fc2_b_ref[l]

    # ---- final norm + head on token 0 of each batch element ------------------
    # (param token is appended LAST, so token 0 == first patch token == x[:, 0])
    x0 = _vcat([x[b * n_tok:b * n_tok + 1] for b in range(bb)], axis=0)
    x0 = _layer_norm(x0, norm_w_ref[...], norm_b_ref[...])
    out = _dot(x0, head_w_ref[...]) + head_b_ref[...]             # (bb, out_dim)
    for b in range(bb):
        o_ref[b] = out[b:b + 1]


# ----------------------------------------------------------------------------
# Weight preparation (trace-time, free): stack per-layer + pre-transpose all
# nn.Linear weights to (in_dim, out_dim) so the kernel never transposes.
# ----------------------------------------------------------------------------
def _prepare_fused_weights(params):
    blocks = params["blocks"]
    return [
        params["patch_w"].T,                              # (patch_in, D)
        params["patch_b"],                                # (1, D)
        params["param_w"].T,                              # (PARAM_DIM, D)
        params["param_b"],                                # (1, D)
        jnp.stack([b["ln1_w"] for b in blocks]),          # (DEPTH, 1, D)
        jnp.stack([b["ln1_b"] for b in blocks]),
        jnp.stack([b["qkv_w"].T for b in blocks]),        # (DEPTH, D, 3D)
        jnp.stack([b["qkv_b"] for b in blocks]),          # (DEPTH, 1, 3D)
        jnp.stack([b["proj_w"].T for b in blocks]),       # (DEPTH, D, D)
        jnp.stack([b["proj_b"] for b in blocks]),
        jnp.stack([b["ln2_w"] for b in blocks]),
        jnp.stack([b["ln2_b"] for b in blocks]),
        jnp.stack([b["fc1_w"].T for b in blocks]),        # (DEPTH, D, HID)
        jnp.stack([b["fc1_b"] for b in blocks]),
        jnp.stack([b["fc2_w"].T for b in blocks]),        # (DEPTH, HID, D)
        jnp.stack([b["fc2_b"] for b in blocks]),
        params["norm_w"], params["norm_b"],
        params["head_w"].T,                               # (D, OUT)
        params["head_b"],                                 # (1, OUT)
    ]


def _full_spec(shape):
    zeros = (0,) * len(shape)
    return pl.BlockSpec(shape, lambda i, _z=zeros: _z)


def _default_batch_per_step(batch):
    # v7x has 2 TensorCores/chip -> one batch element per core via a "parallel"
    # grid.  v5e/v6e are single-TC -> fold the whole batch into one grid step
    # (removes per-step pipeline overhead, doubles MXU row fill).
    try:
        kind = jax.devices()[0].device_kind.lower()
    except Exception:
        kind = ""
    return 1 if "v7" in kind else batch


# ----------------------------------------------------------------------------
# Deterministic parameter construction (synthetic, mirrors __init__ shapes)
# ----------------------------------------------------------------------------
def _xavier_uniform(key, out_dim, in_dim):
    limit = (6.0 / (in_dim + out_dim)) ** 0.5
    return jax.random.uniform(key, (out_dim, in_dim), jnp.float32, -limit, limit)


def init_params(key):
    keys = jax.random.split(key, 3 + DEPTH)
    patch_in = IN_CHANS * PATCH ** 3
    out_shape = IN_CHANS * VOLUME ** 3
    params = {
        # PatchEmbed3D proj: Conv3d(in_chans, embed_dim, k=s=patch) flattened.
        "patch_w": _xavier_uniform(keys[0], EMBED_DIM, patch_in),
        "patch_b": jnp.zeros((1, EMBED_DIM), jnp.float32),
        # ParameterEmbedding: assumed Linear(param_dim, embed_dim).
        "param_w": _xavier_uniform(keys[1], EMBED_DIM, PARAM_DIM),
        "param_b": jnp.zeros((1, EMBED_DIM), jnp.float32),
        # final norm (LayerNorm init: weight=1, bias=0).
        "norm_w": jnp.ones((1, EMBED_DIM), jnp.float32),
        "norm_b": jnp.zeros((1, EMBED_DIM), jnp.float32),
        # head: Linear(embed_dim, in_chans * volume^3).
        "head_w": _xavier_uniform(keys[2], out_shape, EMBED_DIM),
        "head_b": jnp.zeros((1, out_shape), jnp.float32),
        "blocks": [],
    }
    for i in range(DEPTH):
        k = jax.random.split(keys[3 + i], 4)
        params["blocks"].append({
            "ln1_w": jnp.ones((1, EMBED_DIM), jnp.float32),
            "ln1_b": jnp.zeros((1, EMBED_DIM), jnp.float32),
            "qkv_w": _xavier_uniform(k[0], 3 * EMBED_DIM, EMBED_DIM),
            "qkv_b": jnp.zeros((1, 3 * EMBED_DIM), jnp.float32),  # qkv_bias=True
            "proj_w": _xavier_uniform(k[1], EMBED_DIM, EMBED_DIM),
            "proj_b": jnp.zeros((1, EMBED_DIM), jnp.float32),
            "ln2_w": jnp.ones((1, EMBED_DIM), jnp.float32),
            "ln2_b": jnp.zeros((1, EMBED_DIM), jnp.float32),
            "fc1_w": _xavier_uniform(k[2], HIDDEN_DIM, EMBED_DIM),
            "fc1_b": jnp.zeros((1, HIDDEN_DIM), jnp.float32),
            "fc2_w": _xavier_uniform(k[3], EMBED_DIM, HIDDEN_DIM),
            "fc2_b": jnp.zeros((1, EMBED_DIM), jnp.float32),
        })
    return params


# ----------------------------------------------------------------------------
# Forward pass (mirrors CombinedVisionTransformer3D.forward) — single kernel.
# ----------------------------------------------------------------------------
def combined_vit3d_forward(x, param_token, params, *, batch_per_step=None):
    B, C, D, H, W = x.shape
    p = PATCH
    n_patches = (D // p) * (H // p) * (W // p)
    patch_in = C * p * p * p

    # PatchEmbed3D: Conv3d(C, E, kernel=stride=p) == per-patch matmul; patchify
    # in plain JAX glue (layout plumbing, not compute).
    xp = x.reshape(B, C, D // p, p, H // p, p, W // p, p)
    xp = xp.transpose(0, 2, 4, 6, 1, 3, 5, 7)          # (B, Dp, Hp, Wp, C, p, p, p)
    xp = xp.reshape(B * n_patches, patch_in)           # row-stacked across batch
    pt = param_token.reshape(B, 1, PARAM_DIM)

    # NOTE: forward_features never uses cls_token / pos_embed; all Dropouts
    # have rate 0.0 and are identity.  Param token is appended AFTER the patch
    # tokens; head reads token 0 (first patch token), matching the reference.
    fw = _prepare_fused_weights(params)

    if batch_per_step is None:
        batch_per_step = _default_batch_per_step(B)
    bb = int(batch_per_step)
    assert B % bb == 0
    n_tok = n_patches + 1
    hd = EMBED_DIM // NUM_HEADS
    out_dim = params["head_w"].shape[0]

    kernel = functools.partial(_fused_vit_kernel, num_heads=NUM_HEADS,
                               depth=DEPTH, n_patches=n_patches, bb=bb)

    # Advisory cost estimate (tiny workload) so XLA schedules around it sanely.
    per_block = (2 * n_tok * EMBED_DIM * 3 * EMBED_DIM               # fused qkv
                 + NUM_HEADS * (2 * 2 * n_tok * n_tok * hd)          # scores + p@v
                 + 2 * n_tok * EMBED_DIM * EMBED_DIM                 # proj
                 + 4 * n_tok * EMBED_DIM * HIDDEN_DIM)               # mlp
    flops = B * (2 * n_patches * patch_in * EMBED_DIM
                 + 2 * PARAM_DIM * EMBED_DIM
                 + DEPTH * per_block
                 + 2 * EMBED_DIM * out_dim)
    trans = B * DEPTH * (NUM_HEADS * n_tok * n_tok + n_tok * HIDDEN_DIM
                         + 4 * n_tok)
    bytes_acc = 4 * (xp.size + pt.size + sum(a.size for a in fw) + B * out_dim)

    out = pl.pallas_call(
        kernel,
        out_shape=jax.ShapeDtypeStruct((B, 1, out_dim), jnp.float32),
        grid=(B // bb,),
        in_specs=[
            pl.BlockSpec((bb * n_patches, patch_in), lambda i: (i, 0)),
            pl.BlockSpec((bb, 1, PARAM_DIM), lambda i: (i, 0, 0)),
        ] + [_full_spec(a.shape) for a in fw],
        out_specs=pl.BlockSpec((bb, 1, out_dim), lambda i: (i, 0, 0)),
        compiler_params=pltpu.CompilerParams(
            dimension_semantics=("parallel",)),   # v7x: one batch element / TC
        cost_estimate=pl.CostEstimate(flops=int(flops),
                                      transcendentals=int(trans),
                                      bytes_accessed=int(bytes_acc)),
    )(xp, pt, *fw)

    return out.reshape(B, C, D, H, W)


if __name__ == "__main__":
    key = jax.random.PRNGKey(0)
    kx, kp, kw = jax.random.split(key, 3)
    x = jax.random.normal(kx, (BATCH, IN_CHANS, VOLUME, VOLUME, VOLUME),
                          dtype=jnp.float32)
    param_token = jax.random.normal(kp, (BATCH, PARAM_DIM), dtype=jnp.float32)
    params = init_params(kw)

    fwd = jax.jit(lambda a, b: combined_vit3d_forward(a, b, params))
    out = fwd(x, param_token)
    jax.block_until_ready(out)

    assert out.shape == (BATCH, IN_CHANS, VOLUME, VOLUME, VOLUME), out.shape
    assert bool(jnp.all(jnp.isfinite(out)))
    print("KERNEL_OK")
</pallas_src>

<mosaic_0001>
module attributes {stable_mosaic.version = 11 : i64} {
  func.func @_fused_vit_kernel(%arg0: i32, %arg1: memref<16x128xf32, #tpu.memory_space<vmem>>, %arg2: memref<2x1x10xf32, #tpu.memory_space<vmem>>, %arg3: memref<128x32xf32, #tpu.memory_space<vmem>>, %arg4: memref<1x32xf32, #tpu.memory_space<vmem>>, %arg5: memref<10x32xf32, #tpu.memory_space<vmem>>, %arg6: memref<1x32xf32, #tpu.memory_space<vmem>>, %arg7: memref<2x1x32xf32, #tpu.memory_space<vmem>>, %arg8: memref<2x1x32xf32, #tpu.memory_space<vmem>>, %arg9: memref<2x32x96xf32, #tpu.memory_space<vmem>>, %arg10: memref<2x1x96xf32, #tpu.memory_space<vmem>>, %arg11: memref<2x32x32xf32, #tpu.memory_space<vmem>>, %arg12: memref<2x1x32xf32, #tpu.memory_space<vmem>>, %arg13: memref<2x1x32xf32, #tpu.memory_space<vmem>>, %arg14: memref<2x1x32xf32, #tpu.memory_space<vmem>>, %arg15: memref<2x32x64xf32, #tpu.memory_space<vmem>>, %arg16: memref<2x1x64xf32, #tpu.memory_space<vmem>>, %arg17: memref<2x64x32xf32, #tpu.memory_space<vmem>>, %arg18: memref<2x1x32xf32, #tpu.memory_space<vmem>>, %arg19: memref<1x32xf32, #tpu.memory_space<vmem>>, %arg20: memref<1x32xf32, #tpu.memory_space<vmem>>, %arg21: memref<32x1024xf32, #tpu.memory_space<vmem>>, %arg22: memref<1x1024xf32, #tpu.memory_space<vmem>>, %arg23: memref<2x1x1024xf32, #tpu.memory_space<vmem>>) attributes {dimension_semantics = [#tpu.dimension_semantics<parallel>], iteration_bounds = array<i64: 1>, scalar_prefetch = 0 : i64, scratch_operands = 0 : i64, tpu.core_type = #tpu.core_type<tc>, window_params = [{transform_indices = @transform_0, window_bounds = array<i64: 16, 128>}, {transform_indices = @transform_1, window_bounds = array<i64: 2, 1, 10>}, {pipeline_mode = #tpu.pipeline_mode<synchronous>, transform_indices = @transform_2, window_bounds = array<i64: 128, 32>}, {pipeline_mode = #tpu.pipeline_mode<synchronous>, transform_indices = @transform_3, window_bounds = array<i64: 1, 32>}, {pipeline_mode = #tpu.pipeline_mode<synchronous>, transform_indices = @transform_4, window_bounds = array<i64: 10, 32>}, {pipeline_mode = #tpu.pipeline_mode<synchronous>, transform_indices = @transform_5, window_bounds = array<i64: 1, 32>}, {pipeline_mode = #tpu.pipeline_mode<synchronous>, transform_indices = @transform_6, window_bounds = array<i64: 2, 1, 32>}, {pipeline_mode = #tpu.pipeline_mode<synchronous>, transform_indices = @transform_7, window_bounds = array<i64: 2, 1, 32>}, {pipeline_mode = #tpu.pipeline_mode<synchronous>, transform_indices = @transform_8, window_bounds = array<i64: 2, 32, 96>}, {pipeline_mode = #tpu.pipeline_mode<synchronous>, transform_indices = @transform_9, window_bounds = array<i64: 2, 1, 96>}, {pipeline_mode = #tpu.pipeline_mode<synchronous>, transform_indices = @transform_10, window_bounds = array<i64: 2, 32, 32>}, {pipeline_mode = #tpu.pipeline_mode<synchronous>, transform_indices = @transform_11, window_bounds = array<i64: 2, 1, 32>}, {pipeline_mode = #tpu.pipeline_mode<synchronous>, transform_indices = @transform_12, window_bounds = array<i64: 2, 1, 32>}, {pipeline_mode = #tpu.pipeline_mode<synchronous>, transform_indices = @transform_13, window_bounds = array<i64: 2, 1, 32>}, {pipeline_mode = #tpu.pipeline_mode<synchronous>, transform_indices = @transform_14, window_bounds = array<i64: 2, 32, 64>}, {pipeline_mode = #tpu.pipeline_mode<synchronous>, transform_indices = @transform_15, window_bounds = array<i64: 2, 1, 64>}, {pipeline_mode = #tpu.pipeline_mode<synchronous>, transform_indices = @transform_16, window_bounds = array<i64: 2, 64, 32>}, {pipeline_mode = #tpu.pipeline_mode<synchronous>, transform_indices = @transform_17, window_bounds = array<i64: 2, 1, 32>}, {pipeline_mode = #tpu.pipeline_mode<synchronous>, transform_indices = @transform_18, window_bounds = array<i64: 1, 32>}, {pipeline_mode = #tpu.pipeline_mode<synchronous>, transform_indices = @transform_19, window_bounds = array<i64: 1, 32>}, {pipeline_mode = #tpu.pipeline_mode<synchronous>, transform_indices = @transform_20, window_bounds = array<i64: 32, 1024>}, {pipeline_mode = #tpu.pipeline_mode<synchronous>, transform_indices = @transform_21, window_bounds = array<i64: 1, 1024>}, {transform_indices = @transform_22, window_bounds = array<i64: 2, 1, 1024>}]} {
    %c0 = arith.constant 0 : index
    %c0_0 = arith.constant 0 : index
    %0 = vector.load %arg1[%c0, %c0_0] : memref<16x128xf32, #tpu.memory_space<vmem>>, vector<16x128xf32>
    %c0_1 = arith.constant 0 : index
    %c0_2 = arith.constant 0 : index
    %1 = vector.load %arg3[%c0_1, %c0_2] : memref<128x32xf32, #tpu.memory_space<vmem>>, vector<128x32xf32>
    %cst = arith.constant dense<0.000000e+00> : vector<16x32xf32>
    %2 = tpu.matmul %0, %1, %cst {dimension_numbers = #tpu.dot_dimension_numbers<[1], [0], [0], [1], [0, 0, 1, 1], [], []>} : vector<16x128xf32>, vector<128x32xf32>, vector<16x32xf32> -> vector<16x32xf32>
    %c0_3 = arith.constant 0 : index
    %c0_4 = arith.constant 0 : index
    %3 = vector.load %arg4[%c0_3, %c0_4] : memref<1x32xf32, #tpu.memory_space<vmem>>, vector<1x32xf32>
    %4 = vector.broadcast %3 : vector<1x32xf32> to vector<16x32xf32>
    %5 = arith.addf %2, %4 : vector<16x32xf32>
    %c0_5 = arith.constant 0 : index
    %c0_6 = arith.constant 0 : index
    %c0_7 = arith.constant 0 : index
    %6 = vector.load %arg2[%c0_5, %c0_6, %c0_7] : memref<2x1x10xf32, #tpu.memory_space<vmem>>, vector<1x1x10xf32>
    %7 = vector.shape_cast %6 : vector<1x1x10xf32> to vector<1x10xf32>
    %c1 = arith.constant 1 : index
    %c0_8 = arith.constant 0 : index
    %c0_9 = arith.constant 0 : index
    %8 = vector.load %arg2[%c1, %c0_8, %c0_9] : memref<2x1x10xf32, #tpu.memory_space<vmem>>, vector<1x1x10xf32>
    %9 = vector.shape_cast %8 : vector<1x1x10xf32> to vector<1x10xf32>
    %10 = tpu.concatenate %7, %9 in 0 : vector<1x10xf32>, vector<1x10xf32> -> vector<2x10xf32>
    %c0_10 = arith.constant 0 : index
    %c0_11 = arith.constant 0 : index
    %11 = vector.load %arg5[%c0_10, %c0_11] : memref<10x32xf32, #tpu.memory_space<vmem>>, vector<10x32xf32>
    %cst_12 = arith.constant dense<0.000000e+00> : vector<2x32xf32>
    %12 = tpu.matmul %10, %11, %cst_12 {dimension_numbers = #tpu.dot_dimension_numbers<[1], [0], [0], [1], [0, 0, 1, 1], [], []>} : vector<2x10xf32>, vector<10x32xf32>, vector<2x32xf32> -> vector<2x32xf32>
    %c0_13 = arith.constant 0 : index
    %c0_14 = arith.constant 0 : index
    %13 = vector.load %arg6[%c0_13, %c0_14] : memref<1x32xf32, #tpu.memory_space<vmem>>, vector<1x32xf32>
    %14 = vector.broadcast %13 : vector<1x32xf32> to vector<2x32xf32>
    %15 = arith.addf %12, %14 : vector<2x32xf32>
    %16 = vector.extract_strided_slice %5 {offsets = [0, 0], sizes = [8, 32], strides = [1, 1]} : vector<16x32xf32> to vector<8x32xf32>
    %17 = vector.extract_strided_slice %15 {offsets = [0, 0], sizes = [1, 32], strides = [1, 1]} : vector<2x32xf32> to vector<1x32xf32>
    %18 = vector.extract_strided_slice %5 {offsets = [8, 0], sizes = [8, 32], strides = [1, 1]} : vector<16x32xf32> to vector<8x32xf32>
    %19 = vector.extract_strided_slice %15 {offsets = [1, 0], sizes = [1, 32], strides = [1, 1]} : vector<2x32xf32> to vector<1x32xf32>
    %20 = tpu.concatenate %16, %17, %18, %19 in 0 : vector<8x32xf32>, vector<1x32xf32>, vector<8x32xf32>, vector<1x32xf32> -> vector<18x32xf32>
    %c0_15 = arith.constant 0 : index
    %c0_16 = arith.constant 0 : index
    %c0_17 = arith.constant 0 : index
    %21 = vector.load %arg7[%c0_15, %c0_16, %c0_17] : memref<2x1x32xf32, #tpu.memory_space<vmem>>, vector<1x1x32xf32>
    %22 = vector.shape_cast %21 : vector<1x1x32xf32> to vector<1x32xf32>
    %c0_18 = arith.constant 0 : index
    %c0_19 = arith.constant 0 : index
    %c0_20 = arith.constant 0 : index
    %23 = vector.load %arg8[%c0_18, %c0_19, %c0_20] : memref<2x1x32xf32, #tpu.memory_space<vmem>>, vector<1x1x32xf32>
    %24 = vector.shape_cast %23 : vector<1x1x32xf32> to vector<1x32xf32>
    %cst_21 = arith.constant dense<0.000000e+00> : vector<18xf32>
    %25 = vector.multi_reduction <add>, %20, %cst_21 [1] : vector<18x32xf32> to vector<18xf32>
    %26 = vector.shape_cast %25 : vector<18xf32> to vector<18x1xf32>
    %cst_22 = arith.constant 3.200000e+01 : f32
    %27 = vector.broadcast %cst_22 : f32 to vector<18x1xf32>
    %28 = arith.divf %26, %27 : vector<18x1xf32>
    %29 = vector.broadcast %28 : vector<18x1xf32> to vector<18x32xf32>
    %30 = arith.subf %20, %29 : vector<18x32xf32>
    %31 = arith.mulf %30, %30 : vector<18x32xf32>
    %cst_23 = arith.constant dense<0.000000e+00> : vector<18xf32>
    %32 = vector.multi_reduction <add>, %31, %cst_23 [1] : vector<18x32xf32> to vector<18xf32>
    %33 = vector.shape_cast %32 : vector<18xf32> to vector<18x1xf32>
    %cst_24 = arith.constant 3.200000e+01 : f32
    %34 = vector.broadcast %cst_24 : f32 to vector<18x1xf32>
    %35 = arith.divf %33, %34 : vector<18x1xf32>
    %cst_25 = arith.constant 9.99999997E-7 : f32
    %36 = vector.broadcast %cst_25 : f32 to vector<18x1xf32>
    %37 = arith.addf %35, %36 : vector<18x1xf32>
    %38 = math.rsqrt %37 : vector<18x1xf32>
    %39 = vector.broadcast %38 : vector<18x1xf32> to vector<18x32xf32>
    %40 = arith.mulf %30, %39 : vector<18x32xf32>
    %41 = vector.broadcast %22 : vector<1x32xf32> to vector<18x32xf32>
    %42 = arith.mulf %40, %41 : vector<18x32xf32>
    %43 = vector.broadcast %24 : vector<1x32xf32> to vector<18x32xf32>
    %44 = arith.addf %42, %43 : vector<18x32xf32>
    %c0_26 = arith.constant 0 : index
    %c0_27 = arith.constant 0 : index
    %c0_28 = arith.constant 0 : index
    %45 = vector.load %arg9[%c0_26, %c0_27, %c0_28] : memref<2x32x96xf32, #tpu.memory_space<vmem>>, vector<1x32x96xf32>
    %46 = vector.shape_cast %45 : vector<1x32x96xf32> to vector<32x96xf32>
    %cst_29 = arith.constant dense<0.000000e+00> : vector<18x96xf32>
    %47 = tpu.matmul %44, %46, %cst_29 {dimension_numbers = #tpu.dot_dimension_numbers<[1], [0], [0], [1], [0, 0, 1, 1], [], []>} : vector<18x32xf32>, vector<32x96xf32>, vector<18x96xf32> -> vector<18x96xf32>
    %c0_30 = arith.constant 0 : index
    %c0_31 = arith.constant 0 : index
    %c0_32 = arith.constant 0 : index
    %48 = vector.load %arg10[%c0_30, %c0_31, %c0_32] : memref<2x1x96xf32, #tpu.memory_space<vmem>>, vector<1x1x96xf32>
    %49 = vector.shape_cast %48 : vector<1x1x96xf32> to vector<1x96xf32>
    %50 = vector.broadcast %49 : vector<1x96xf32> to vector<18x96xf32>
    %51 = arith.addf %47, %50 : vector<18x96xf32>
    %52 = vector.extract_strided_slice %51 {offsets = [0, 0], sizes = [9, 8], strides = [1, 1]} : vector<18x96xf32> to vector<9x8xf32>
    %53 = vector.extract_strided_slice %51 {offsets = [0, 32], sizes = [9, 8], strides = [1, 1]} : vector<18x96xf32> to vector<9x8xf32>
    %54 = vector.extract_strided_slice %51 {offsets = [0, 64], sizes = [9, 8], strides = [1, 1]} : vector<18x96xf32> to vector<9x8xf32>
    %cst_33 = arith.constant dense<0.000000e+00> : vector<9x9xf32>
    %55 = tpu.matmul %52, %53, %cst_33 {dimension_numbers = #tpu.dot_dimension_numbers<[1], [1], [0], [0], [0, 0, 1, 0], [], []>} : vector<9x8xf32>, vector<9x8xf32>, vector<9x9xf32> -> vector<9x9xf32>
    %cst_34 = arith.constant 0.353553385 : f32
    %56 = vector.broadcast %cst_34 : f32 to vector<9x9xf32>
    %57 = arith.mulf %55, %56 : vector<9x9xf32>
    %cst_35 = arith.constant dense<0xFF800000> : vector<9xf32>
    %58 = vector.multi_reduction <maximumf>, %57, %cst_35 [1] : vector<9x9xf32> to vector<9xf32>
    %59 = vector.shape_cast %58 : vector<9xf32> to vector<9x1xf32>
    %60 = vector.broadcast %59 : vector<9x1xf32> to vector<9x9xf32>
    %61 = arith.subf %57, %60 : vector<9x9xf32>
    %62 = math.exp %61 : vector<9x9xf32>
    %cst_36 = arith.constant dense<0.000000e+00> : vector<9xf32>
    %63 = vector.multi_reduction <add>, %62, %cst_36 [1] : vector<9x9xf32> to vector<9xf32>
    %64 = vector.shape_cast %63 : vector<9xf32> to vector<9x1xf32>
    %65 = tpu.reciprocal %64 {approx = true} : vector<9x1xf32> -> vector<9x1xf32>
    %66 = vector.broadcast %65 : vector<9x1xf32> to vector<9x9xf32>
    %67 = arith.mulf %62, %66 : vector<9x9xf32>
    %cst_37 = arith.constant dense<0.000000e+00> : vector<9x8xf32>
    %68 = tpu.matmul %67, %54, %cst_37 {dimension_numbers = #tpu.dot_dimension_numbers<[1], [0], [0], [1], [0, 0, 1, 1], [], []>} : vector<9x9xf32>, vector<9x8xf32>, vector<9x8xf32> -> vector<9x8xf32>
    %69 = vector.extract_strided_slice %51 {offsets = [0, 8], sizes = [9, 8], strides = [1, 1]} : vector<18x96xf32> to vector<9x8xf32>
    %70 = vector.extract_strided_slice %51 {offsets = [0, 40], sizes = [9, 8], strides = [1, 1]} : vector<18x96xf32> to vector<9x8xf32>
    %71 = vector.extract_strided_slice %51 {offsets = [0, 72], sizes = [9, 8], strides = [1, 1]} : vector<18x96xf32> to vector<9x8xf32>
    %cst_38 = arith.constant dense<0.000000e+00> : vector<9x9xf32>
    %72 = tpu.matmul %69, %70, %cst_38 {dimension_numbers = #tpu.dot_dimension_numbers<[1], [1], [0], [0], [0, 0, 1, 0], [], []>} : vector<9x8xf32>, vector<9x8xf32>, vector<9x9xf32> -> vector<9x9xf32>
    %cst_39 = arith.constant 0.353553385 : f32
    %73 = vector.broadcast %cst_39 : f32 to vector<9x9xf32>
    %74 = arith.mulf %72, %73 : vector<9x9xf32>
    %cst_40 = arith.constant dense<0xFF800000> : vector<9xf32>
    %75 = vector.multi_reduction <maximumf>, %74, %cst_40 [1] : vector<9x9xf32> to vector<9xf32>
    %76 = vector.shape_cast %75 : vector<9xf32> to vector<9x1xf32>
    %77 = vector.broadcast %76 : vector<9x1xf32> to vector<9x9xf32>
    %78 = arith.subf %74, %77 : vector<9x9xf32>
    %79 = math.exp %78 : vector<9x9xf32>
    %cst_41 = arith.constant dense<0.000000e+00> : vector<9xf32>
    %80 = vector.multi_reduction <add>, %79, %cst_41 [1] : vector<9x9xf32> to vector<9xf32>
    %81 = vector.shape_cast %80 : vector<9xf32> to vector<9x1xf32>
    %82 = tpu.reciprocal %81 {approx = true} : vector<9x1xf32> -> vector<9x1xf32>
    %83 = vector.broadcast %82 : vector<9x1xf32> to vector<9x9xf32>
    %84 = arith.mulf %79, %83 : vector<9x9xf32>
    %cst_42 = arith.constant dense<0.000000e+00> : vector<9x8xf32>
    %85 = tpu.matmul %84, %71, %cst_42 {dimension_numbers = #tpu.dot_dimension_numbers<[1], [0], [0], [1], [0, 0, 1, 1], [], []>} : vector<9x9xf32>, vector<9x8xf32>, vector<9x8xf32> -> vector<9x8xf32>
    %86 = vector.extract_strided_slice %51 {offsets = [0, 16], sizes = [9, 8], strides = [1, 1]} : vector<18x96xf32> to vector<9x8xf32>
    %87 = vector.extract_strided_slice %51 {offsets = [0, 48], sizes = [9, 8], strides = [1, 1]} : vector<18x96xf32> to vector<9x8xf32>
    %88 = vector.extract_strided_slice %51 {offsets = [0, 80], sizes = [9, 8], strides = [1, 1]} : vector<18x96xf32> to vector<9x8xf32>
    %cst_43 = arith.constant dense<0.000000e+00> : vector<9x9xf32>
    %89 = tpu.matmul %86, %87, %cst_43 {dimension_numbers = #tpu.dot_dimension_numbers<[1], [1], [0], [0], [0, 0, 1, 0], [], []>} : vector<9x8xf32>, vector<9x8xf32>, vector<9x9xf32> -> vector<9x9xf32>
    %cst_44 = arith.constant 0.353553385 : f32
    %90 = vector.broadcast %cst_44 : f32 to vector<9x9xf32>
    %91 = arith.mulf %89, %90 : vector<9x9xf32>
    %cst_45 = arith.constant dense<0xFF800000> : vector<9xf32>
    %92 = vector.multi_reduction <maximumf>, %91, %cst_45 [1] : vector<9x9xf32> to vector<9xf32>
    %93 = vector.shape_cast %92 : vector<9xf32> to vector<9x1xf32>
    %94 = vector.broadcast %93 : vector<9x1xf32> to vector<9x9xf32>
    %95 = arith.subf %91, %94 : vector<9x9xf32>
    %96 = math.exp %95 : vector<9x9xf32>
    %cst_46 = arith.constant dense<0.000000e+00> : vector<9xf32>
    %97 = vector.multi_reduction <add>, %96, %cst_46 [1] : vector<9x9xf32> to vector<9xf32>
    %98 = vector.shape_cast %97 : vector<9xf32> to vector<9x1xf32>
    %99 = tpu.reciprocal %98 {approx = true} : vector<9x1xf32> -> vector<9x1xf32>
    %100 = vector.broadcast %99 : vector<9x1xf32> to vector<9x9xf32>
    %101 = arith.mulf %96, %100 : vector<9x9xf32>
    %cst_47 = arith.constant dense<0.000000e+00> : vector<9x8xf32>
    %102 = tpu.matmul %101, %88, %cst_47 {dimension_numbers = #tpu.dot_dimension_numbers<[1], [0], [0], [1], [0, 0, 1, 1], [], []>} : vector<9x9xf32>, vector<9x8xf32>, vector<9x8xf32> -> vector<9x8xf32>
    %103 = vector.extract_strided_slice %51 {offsets = [0, 24], sizes = [9, 8], strides = [1, 1]} : vector<18x96xf32> to vector<9x8xf32>
    %104 = vector.extract_strided_slice %51 {offsets = [0, 56], sizes = [9, 8], strides = [1, 1]} : vector<18x96xf32> to vector<9x8xf32>
    %105 = vector.extract_strided_slice %51 {offsets = [0, 88], sizes = [9, 8], strides = [1, 1]} : vector<18x96xf32> to vector<9x8xf32>
    %cst_48 = arith.constant dense<0.000000e+00> : vector<9x9xf32>
    %106 = tpu.matmul %103, %104, %cst_48 {dimension_numbers = #tpu.dot_dimension_numbers<[1], [1], [0], [0], [0, 0, 1, 0], [], []>} : vector<9x8xf32>, vector<9x8xf32>, vector<9x9xf32> -> vector<9x9xf32>
    %cst_49 = arith.constant 0.353553385 : f32
    %107 = vector.broadcast %cst_49 : f32 to vector<9x9xf32>
    %108 = arith.mulf %106, %107 : vector<9x9xf32>
    %cst_50 = arith.constant dense<0xFF800000> : vector<9xf32>
    %109 = vector.multi_reduction <maximumf>, %108, %cst_50 [1] : vector<9x9xf32> to vector<9xf32>
    %110 = vector.shape_cast %109 : vector<9xf32> to vector<9x1xf32>
    %111 = vector.broadcast %110 : vector<9x1xf32> to vector<9x9xf32>
    %112 = arith.subf %108, %111 : vector<9x9xf32>
    %113 = math.exp %112 : vector<9x9xf32>
    %cst_51 = arith.constant dense<0.000000e+00> : vector<9xf32>
    %114 = vector.multi_reduction <add>, %113, %cst_51 [1] : vector<9x9xf32> to vector<9xf32>
    %115 = vector.shape_cast %114 : vector<9xf32> to vector<9x1xf32>
    %116 = tpu.reciprocal %115 {approx = true} : vector<9x1xf32> -> vector<9x1xf32>
    %117 = vector.broadcast %116 : vector<9x1xf32> to vector<9x9xf32>
    %118 = arith.mulf %113, %117 : vector<9x9xf32>
    %cst_52 = arith.constant dense<0.000000e+00> : vector<9x8xf32>
    %119 = tpu.matmul %118, %105, %cst_52 {dimension_numbers = #tpu.dot_dimension_numbers<[1], [0], [0], [1], [0, 0, 1, 1], [], []>} : vector<9x9xf32>, vector<9x8xf32>, vector<9x8xf32> -> vector<9x8xf32>
    %120 = tpu.concatenate %68, %85, %102, %119 in 1 : vector<9x8xf32>, vector<9x8xf32>, vector<9x8xf32>, vector<9x8xf32> -> vector<9x32xf32>
    %121 = vector.extract_strided_slice %51 {offsets = [9, 0], sizes = [9, 8], strides = [1, 1]} : vector<18x96xf32> to vector<9x8xf32>
    %122 = vector.extract_strided_slice %51 {offsets = [9, 32], sizes = [9, 8], strides = [1, 1]} : vector<18x96xf32> to vector<9x8xf32>
    %123 = vector.extract_strided_slice %51 {offsets = [9, 64], sizes = [9, 8], strides = [1, 1]} : vector<18x96xf32> to vector<9x8xf32>
    %cst_53 = arith.constant dense<0.000000e+00> : vector<9x9xf32>
    %124 = tpu.matmul %121, %122, %cst_53 {dimension_numbers = #tpu.dot_dimension_numbers<[1], [1], [0], [0], [0, 0, 1, 0], [], []>} : vector<9x8xf32>, vector<9x8xf32>, vector<9x9xf32> -> vector<9x9xf32>
    %cst_54 = arith.constant 0.353553385 : f32
    %125 = vector.broadcast %cst_54 : f32 to vector<9x9xf32>
    %126 = arith.mulf %124, %125 : vector<9x9xf32>
    %cst_55 = arith.constant dense<0xFF800000> : vector<9xf32>
    %127 = vector.multi_reduction <maximumf>, %126, %cst_55 [1] : vector<9x9xf32> to vector<9xf32>
    %128 = vector.shape_cast %127 : vector<9xf32> to vector<9x1xf32>
    %129 = vector.broadcast %128 : vector<9x1xf32> to vector<9x9xf32>
    %130 = arith.subf %126, %129 : vector<9x9xf32>
    %131 = math.exp %130 : vector<9x9xf32>
    %cst_56 = arith.constant dense<0.000000e+00> : vector<9xf32>
    %132 = vector.multi_reduction <add>, %131, %cst_56 [1] : vector<9x9xf32> to vector<9xf32>
    %133 = vector.shape_cast %132 : vector<9xf32> to vector<9x1xf32>
    %134 = tpu.reciprocal %133 {approx = true} : vector<9x1xf32> -> vector<9x1xf32>
    %135 = vector.broadcast %134 : vector<9x1xf32> to vector<9x9xf32>
    %136 = arith.mulf %131, %135 : vector<9x9xf32>
    %cst_57 = arith.constant dense<0.000000e+00> : vector<9x8xf32>
    %137 = tpu.matmul %136, %123, %cst_57 {dimension_numbers = #tpu.dot_dimension_numbers<[1], [0], [0], [1], [0, 0, 1, 1], [], []>} : vector<9x9xf32>, vector<9x8xf32>, vector<9x8xf32> -> vector<9x8xf32>
    %138 = vector.extract_strided_slice %51 {offsets = [9, 8], sizes = [9, 8], strides = [1, 1]} : vector<18x96xf32> to vector<9x8xf32>
    %139 = vector.extract_strided_slice %51 {offsets = [9, 40], sizes = [9, 8], strides = [1, 1]} : vector<18x96xf32> to vector<9x8xf32>
    %140 = vector.extract_strided_slice %51 {offsets = [9, 72], sizes = [9, 8], strides = [1, 1]} : vector<18x96xf32> to vector<9x8xf32>
    %cst_58 = arith.constant dense<0.000000e+00> : vector<9x9xf32>
    %141 = tpu.matmul %138, %139, %cst_58 {dimension_numbers = #tpu.dot_dimension_numbers<[1], [1], [0], [0], [0, 0, 1, 0], [], []>} : vector<9x8xf32>, vector<9x8xf32>, vector<9x9xf32> -> vector<9x9xf32>
    %cst_59 = arith.constant 0.353553385 : f32
    %142 = vector.broadcast %cst_59 : f32 to vector<9x9xf32>
    %143 = arith.mulf %141, %142 : vector<9x9xf32>
    %cst_60 = arith.constant dense<0xFF800000> : vector<9xf32>
    %144 = vector.multi_reduction <maximumf>, %143, %cst_60 [1] : vector<9x9xf32> to vector<9xf32>
    %145 = vector.shape_cast %144 : vector<9xf32> to vector<9x1xf32>
    %146 = vector.broadcast %145 : vector<9x1xf32> to vector<9x9xf32>
    %147 = arith.subf %143, %146 : vector<9x9xf32>
    %148 = math.exp %147 : vector<9x9xf32>
    %cst_61 = arith.constant dense<0.000000e+00> : vector<9xf32>
    %149 = vector.multi_reduction <add>, %148, %cst_61 [1] : vector<9x9xf32> to vector<9xf32>
    %150 = vector.shape_cast %149 : vector<9xf32> to vector<9x1xf32>
    %151 = tpu.reciprocal %150 {approx = true} : vector<9x1xf32> -> vector<9x1xf32>
    %152 = vector.broadcast %151 : vector<9x1xf32> to vector<9x9xf32>
    %153 = arith.mulf %148, %152 : vector<9x9xf32>
    %cst_62 = arith.constant dense<0.000000e+00> : vector<9x8xf32>
    %154 = tpu.matmul %153, %140, %cst_62 {dimension_numbers = #tpu.dot_dimension_numbers<[1], [0], [0], [1], [0, 0, 1, 1], [], []>} : vector<9x9xf32>, vector<9x8xf32>, vector<9x8xf32> -> vector<9x8xf32>
    %155 = vector.extract_strided_slice %51 {offsets = [9, 16], sizes = [9, 8], strides = [1, 1]} : vector<18x96xf32> to vector<9x8xf32>
    %156 = vector.extract_strided_slice %51 {offsets = [9, 48], sizes = [9, 8], strides = [1, 1]} : vector<18x96xf32> to vector<9x8xf32>
    %157 = vector.extract_strided_slice %51 {offsets = [9, 80], sizes = [9, 8], strides = [1, 1]} : vector<18x96xf32> to vector<9x8xf32>
    %cst_63 = arith.constant dense<0.000000e+00> : vector<9x9xf32>
    %158 = tpu.matmul %155, %156, %cst_63 {dimension_numbers = #tpu.dot_dimension_numbers<[1], [1], [0], [0], [0, 0, 1, 0], [], []>} : vector<9x8xf32>, vector<9x8xf32>, vector<9x9xf32> -> vector<9x9xf32>
    %cst_64 = arith.constant 0.353553385 : f32
    %159 = vector.broadcast %cst_64 : f32 to vector<9x9xf32>
    %160 = arith.mulf %158, %159 : vector<9x9xf32>
    %cst_65 = arith.constant dense<0xFF800000> : vector<9xf32>
    %161 = vector.multi_reduction <maximumf>, %160, %cst_65 [1] : vector<9x9xf32> to vector<9xf32>
    %162 = vector.shape_cast %161 : vector<9xf32> to vector<9x1xf32>
    %163 = vector.broadcast %162 : vector<9x1xf32> to vector<9x9xf32>
    %164 = arith.subf %160, %163 : vector<9x9xf32>
    %165 = math.exp %164 : vector<9x9xf32>
    %cst_66 = arith.constant dense<0.000000e+00> : vector<9xf32>
    %166 = vector.multi_reduction <add>, %165, %cst_66 [1] : vector<9x9xf32> to vector<9xf32>
    %167 = vector.shape_cast %166 : vector<9xf32> to vector<9x1xf32>
    %168 = tpu.reciprocal %167 {approx = true} : vector<9x1xf32> -> vector<9x1xf32>
    %169 = vector.broadcast %168 : vector<9x1xf32> to vector<9x9xf32>
    %170 = arith.mulf %165, %169 : vector<9x9xf32>
    %cst_67 = arith.constant dense<0.000000e+00> : vector<9x8xf32>
    %171 = tpu.matmul %170, %157, %cst_67 {dimension_numbers = #tpu.dot_dimension_numbers<[1], [0], [0], [1], [0, 0, 1, 1], [], []>} : vector<9x9xf32>, vector<9x8xf32>, vector<9x8xf32> -> vector<9x8xf32>
    %172 = vector.extract_strided_slice %51 {offsets = [9, 24], sizes = [9, 8], strides = [1, 1]} : vector<18x96xf32> to vector<9x8xf32>
    %173 = vector.extract_strided_slice %51 {offsets = [9, 56], sizes = [9, 8], strides = [1, 1]} : vector<18x96xf32> to vector<9x8xf32>
    %174 = vector.extract_strided_slice %51 {offsets = [9, 88], sizes = [9, 8], strides = [1, 1]} : vector<18x96xf32> to vector<9x8xf32>
    %cst_68 = arith.constant dense<0.000000e+00> : vector<9x9xf32>
    %175 = tpu.matmul %172, %173, %cst_68 {dimension_numbers = #tpu.dot_dimension_numbers<[1], [1], [0], [0], [0, 0, 1, 0], [], []>} : vector<9x8xf32>, vector<9x8xf32>, vector<9x9xf32> -> vector<9x9xf32>
    %cst_69 = arith.constant 0.353553385 : f32
    %176 = vector.broadcast %cst_69 : f32 to vector<9x9xf32>
    %177 = arith.mulf %175, %176 : vector<9x9xf32>
    %cst_70 = arith.constant dense<0xFF800000> : vector<9xf32>
    %178 = vector.multi_reduction <maximumf>, %177, %cst_70 [1] : vector<9x9xf32> to vector<9xf32>
    %179 = vector.shape_cast %178 : vector<9xf32> to vector<9x1xf32>
    %180 = vector.broadcast %179 : vector<9x1xf32> to vector<9x9xf32>
    %181 = arith.subf %177, %180 : vector<9x9xf32>
    %182 = math.exp %181 : vector<9x9xf32>
    %cst_71 = arith.constant dense<0.000000e+00> : vector<9xf32>
    %183 = vector.multi_reduction <add>, %182, %cst_71 [1] : vector<9x9xf32> to vector<9xf32>
    %184 = vector.shape_cast %183 : vector<9xf32> to vector<9x1xf32>
    %185 = tpu.reciprocal %184 {approx = true} : vector<9x1xf32> -> vector<9x1xf32>
    %186 = vector.broadcast %185 : vector<9x1xf32> to vector<9x9xf32>
    %187 = arith.mulf %182, %186 : vector<9x9xf32>
    %cst_72 = arith.constant dense<0.000000e+00> : vector<9x8xf32>
    %188 = tpu.matmul %187, %174, %cst_72 {dimension_numbers = #tpu.dot_dimension_numbers<[1], [0], [0], [1], [0, 0, 1, 1], [], []>} : vector<9x9xf32>, vector<9x8xf32>, vector<9x8xf32> -> vector<9x8xf32>
    %189 = tpu.concatenate %137, %154, %171, %188 in 1 : vector<9x8xf32>, vector<9x8xf32>, vector<9x8xf32>, vector<9x8xf32> -> vector<9x32xf32>
    %190 = tpu.concatenate %120, %189 in 0 : vector<9x32xf32>, vector<9x32xf32> -> vector<18x32xf32>
    %c0_73 = arith.constant 0 : index
    %c0_74 = arith.constant 0 : index
    %c0_75 = arith.constant 0 : index
    %191 = vector.load %arg11[%c0_73, %c0_74, %c0_75] : memref<2x32x32xf32, #tpu.memory_space<vmem>>, vector<1x32x32xf32>
    %192 = vector.shape_cast %191 : vector<1x32x32xf32> to vector<32x32xf32>
    %cst_76 = arith.constant dense<0.000000e+00> : vector<18x32xf32>
    %193 = tpu.matmul %190, %192, %cst_76 {dimension_numbers = #tpu.dot_dimension_numbers<[1], [0], [0], [1], [0, 0, 1, 1], [], []>} : vector<18x32xf32>, vector<32x32xf32>, vector<18x32xf32> -> vector<18x32xf32>
    %194 = arith.addf %20, %193 : vector<18x32xf32>
    %c0_77 = arith.constant 0 : index
    %c0_78 = arith.constant 0 : index
    %c0_79 = arith.constant 0 : index
    %195 = vector.load %arg12[%c0_77, %c0_78, %c0_79] : memref<2x1x32xf32, #tpu.memory_space<vmem>>, vector<1x1x32xf32>
    %196 = vector.shape_cast %195 : vector<1x1x32xf32> to vector<1x32xf32>
    %197 = vector.broadcast %196 : vector<1x32xf32> to vector<18x32xf32>
    %198 = arith.addf %194, %197 : vector<18x32xf32>
    %c0_80 = arith.constant 0 : index
    %c0_81 = arith.constant 0 : index
    %c0_82 = arith.constant 0 : index
    %199 = vector.load %arg13[%c0_80, %c0_81, %c0_82] : memref<2x1x32xf32, #tpu.memory_space<vmem>>, vector<1x1x32xf32>
    %200 = vector.shape_cast %199 : vector<1x1x32xf32> to vector<1x32xf32>
    %c0_83 = arith.constant 0 : index
    %c0_84 = arith.constant 0 : index
    %c0_85 = arith.constant 0 : index
    %201 = vector.load %arg14[%c0_83, %c0_84, %c0_85] : memref<2x1x32xf32, #tpu.memory_space<vmem>>, vector<1x1x32xf32>
    %202 = vector.shape_cast %201 : vector<1x1x32xf32> to vector<1x32xf32>
    %cst_86 = arith.constant dense<0.000000e+00> : vector<18xf32>
    %203 = vector.multi_reduction <add>, %198, %cst_86 [1] : vector<18x32xf32> to vector<18xf32>
    %204 = vector.shape_cast %203 : vector<18xf32> to vector<18x1xf32>
    %cst_87 = arith.constant 3.200000e+01 : f32
    %205 = vector.broadcast %cst_87 : f32 to vector<18x1xf32>
    %206 = arith.divf %204, %205 : vector<18x1xf32>
    %207 = vector.broadcast %206 : vector<18x1xf32> to vector<18x32xf32>
    %208 = arith.subf %198, %207 : vector<18x32xf32>
    %209 = arith.mulf %208, %208 : vector<18x32xf32>
    %cst_88 = arith.constant dense<0.000000e+00> : vector<18xf32>
    %210 = vector.multi_reduction <add>, %209, %cst_88 [1] : vector<18x32xf32> to vector<18xf32>
    %211 = vector.shape_cast %210 : vector<18xf32> to vector<18x1xf32>
    %cst_89 = arith.constant 3.200000e+01 : f32
    %212 = vector.broadcast %cst_89 : f32 to vector<18x1xf32>
    %213 = arith.divf %211, %212 : vector<18x1xf32>
    %cst_90 = arith.constant 9.99999997E-7 : f32
    %214 = vector.broadcast %cst_90 : f32 to vector<18x1xf32>
    %215 = arith.addf %213, %214 : vector<18x1xf32>
    %216 = math.rsqrt %215 : vector<18x1xf32>
    %217 = vector.broadcast %216 : vector<18x1xf32> to vector<18x32xf32>
    %218 = arith.mulf %208, %217 : vector<18x32xf32>
    %219 = vector.broadcast %200 : vector<1x32xf32> to vector<18x32xf32>
    %220 = arith.mulf %218, %219 : vector<18x32xf32>
    %221 = vector.broadcast %202 : vector<1x32xf32> to vector<18x32xf32>
    %222 = arith.addf %220, %221 : vector<18x32xf32>
    %c0_91 = arith.constant 0 : index
    %c0_92 = arith.constant 0 : index
    %c0_93 = arith.constant 0 : index
    %223 = vector.load %arg15[%c0_91, %c0_92, %c0_93] : memref<2x32x64xf32, #tpu.memory_space<vmem>>, vector<1x32x64xf32>
    %224 = vector.shape_cast %223 : vector<1x32x64xf32> to vector<32x64xf32>
    %cst_94 = arith.constant dense<0.000000e+00> : vector<18x64xf32>
    %225 = tpu.matmul %222, %224, %cst_94 {dimension_numbers = #tpu.dot_dimension_numbers<[1], [0], [0], [1], [0, 0, 1, 1], [], []>} : vector<18x32xf32>, vector<32x64xf32>, vector<18x64xf32> -> vector<18x64xf32>
    %c0_95 = arith.constant 0 : index
    %c0_96 = arith.constant 0 : index
    %c0_97 = arith.constant 0 : index
    %226 = vector.load %arg16[%c0_95, %c0_96, %c0_97] : memref<2x1x64xf32, #tpu.memory_space<vmem>>, vector<1x1x64xf32>
    %227 = vector.shape_cast %226 : vector<1x1x64xf32> to vector<1x64xf32>
    %228 = vector.broadcast %227 : vector<1x64xf32> to vector<18x64xf32>
    %229 = arith.addf %225, %228 : vector<18x64xf32>
    %cst_98 = arith.constant 5.000000e-01 : f32
    %230 = vector.broadcast %cst_98 : f32 to vector<18x64xf32>
    %231 = arith.mulf %230, %229 : vector<18x64xf32>
    %cst_99 = arith.constant 4.471500e-02 : f32
    %232 = vector.broadcast %cst_99 : f32 to vector<18x64xf32>
    %233 = arith.mulf %232, %229 : vector<18x64xf32>
    %234 = arith.mulf %233, %229 : vector<18x64xf32>
    %235 = arith.mulf %234, %229 : vector<18x64xf32>
    %236 = arith.addf %229, %235 : vector<18x64xf32>
    %cst_100 = arith.constant 0.797884583 : f32
    %237 = vector.broadcast %cst_100 : f32 to vector<18x64xf32>
    %238 = arith.mulf %237, %236 : vector<18x64xf32>
    %239 = math.tanh %238 : vector<18x64xf32>
    %cst_101 = arith.constant 1.000000e+00 : f32
    %240 = vector.broadcast %cst_101 : f32 to vector<18x64xf32>
    %241 = arith.addf %240, %239 : vector<18x64xf32>
    %242 = arith.mulf %231, %241 : vector<18x64xf32>
    %c0_102 = arith.constant 0 : index
    %c0_103 = arith.constant 0 : index
    %c0_104 = arith.constant 0 : index
    %243 = vector.load %arg17[%c0_102, %c0_103, %c0_104] : memref<2x64x32xf32, #tpu.memory_space<vmem>>, vector<1x64x32xf32>
    %244 = vector.shape_cast %243 : vector<1x64x32xf32> to vector<64x32xf32>
    %cst_105 = arith.constant dense<0.000000e+00> : vector<18x32xf32>
    %245 = tpu.matmul %242, %244, %cst_105 {dimension_numbers = #tpu.dot_dimension_numbers<[1], [0], [0], [1], [0, 0, 1, 1], [], []>} : vector<18x64xf32>, vector<64x32xf32>, vector<18x32xf32> -> vector<18x32xf32>
    %246 = arith.addf %198, %245 : vector<18x32xf32>
    %c0_106 = arith.constant 0 : index
    %c0_107 = arith.constant 0 : index
    %c0_108 = arith.constant 0 : index
    %247 = vector.load %arg18[%c0_106, %c0_107, %c0_108] : memref<2x1x32xf32, #tpu.memory_space<vmem>>, vector<1x1x32xf32>
    %248 = vector.shape_cast %247 : vector<1x1x32xf32> to vector<1x32xf32>
    %249 = vector.broadcast %248 : vector<1x32xf32> to vector<18x32xf32>
    %250 = arith.addf %246, %249 : vector<18x32xf32>
    %c1_109 = arith.constant 1 : index
    %c0_110 = arith.constant 0 : index
    %c0_111 = arith.constant 0 : index
    %251 = vector.load %arg7[%c1_109, %c0_110, %c0_111] : memref<2x1x32xf32, #tpu.memory_space<vmem>>, vector<1x1x32xf32>
    %252 = vector.shape_cast %251 : vector<1x1x32xf32> to vector<1x32xf32>
    %c1_112 = arith.constant 1 : index
    %c0_113 = arith.constant 0 : index
    %c0_114 = arith.constant 0 : index
    %253 = vector.load %arg8[%c1_112, %c0_113, %c0_114] : memref<2x1x32xf32, #tpu.memory_space<vmem>>, vector<1x1x32xf32>
    %254 = vector.shape_cast %253 : vector<1x1x32xf32> to vector<1x32xf32>
    %cst_115 = arith.constant dense<0.000000e+00> : vector<18xf32>
    %255 = vector.multi_reduction <add>, %250, %cst_115 [1] : vector<18x32xf32> to vector<18xf32>
    %256 = vector.shape_cast %255 : vector<18xf32> to vector<18x1xf32>
    %cst_116 = arith.constant 3.200000e+01 : f32
    %257 = vector.broadcast %cst_116 : f32 to vector<18x1xf32>
    %258 = arith.divf %256, %257 : vector<18x1xf32>
    %259 = vector.broadcast %258 : vector<18x1xf32> to vector<18x32xf32>
    %260 = arith.subf %250, %259 : vector<18x32xf32>
    %261 = arith.mulf %260, %260 : vector<18x32xf32>
    %cst_117 = arith.constant dense<0.000000e+00> : vector<18xf32>
    %262 = vector.multi_reduction <add>, %261, %cst_117 [1] : vector<18x32xf32> to vector<18xf32>
    %263 = vector.shape_cast %262 : vector<18xf32> to vector<18x1xf32>
    %cst_118 = arith.constant 3.200000e+01 : f32
    %264 = vector.broadcast %cst_118 : f32 to vector<18x1xf32>
    %265 = arith.divf %263, %264 : vector<18x1xf32>
    %cst_119 = arith.constant 9.99999997E-7 : f32
    %266 = vector.broadcast %cst_119 : f32 to vector<18x1xf32>
    %267 = arith.addf %265, %266 : vector<18x1xf32>
    %268 = math.rsqrt %267 : vector<18x1xf32>
    %269 = vector.broadcast %268 : vector<18x1xf32> to vector<18x32xf32>
    %270 = arith.mulf %260, %269 : vector<18x32xf32>
    %271 = vector.broadcast %252 : vector<1x32xf32> to vector<18x32xf32>
    %272 = arith.mulf %270, %271 : vector<18x32xf32>
    %273 = vector.broadcast %254 : vector<1x32xf32> to vector<18x32xf32>
    %274 = arith.addf %272, %273 : vector<18x32xf32>
    %c1_120 = arith.constant 1 : index
    %c0_121 = arith.constant 0 : index
    %c0_122 = arith.constant 0 : index
    %275 = vector.load %arg9[%c1_120, %c0_121, %c0_122] : memref<2x32x96xf32, #tpu.memory_space<vmem>>, vector<1x32x96xf32>
    %276 = vector.shape_cast %275 : vector<1x32x96xf32> to vector<32x96xf32>
    %cst_123 = arith.constant dense<0.000000e+00> : vector<18x96xf32>
    %277 = tpu.matmul %274, %276, %cst_123 {dimension_numbers = #tpu.dot_dimension_numbers<[1], [0], [0], [1], [0, 0, 1, 1], [], []>} : vector<18x32xf32>, vector<32x96xf32>, vector<18x96xf32> -> vector<18x96xf32>
    %c1_124 = arith.constant 1 : index
    %c0_125 = arith.constant 0 : index
    %c0_126 = arith.constant 0 : index
    %278 = vector.load %arg10[%c1_124, %c0_125, %c0_126] : memref<2x1x96xf32, #tpu.memory_space<vmem>>, vector<1x1x96xf32>
    %279 = vector.shape_cast %278 : vector<1x1x96xf32> to vector<1x96xf32>
    %280 = vector.broadcast %279 : vector<1x96xf32> to vector<18x96xf32>
    %281 = arith.addf %277, %280 : vector<18x96xf32>
    %282 = vector.extract_strided_slice %281 {offsets = [0, 0], sizes = [9, 8], strides = [1, 1]} : vector<18x96xf32> to vector<9x8xf32>
    %283 = vector.extract_strided_slice %281 {offsets = [0, 32], sizes = [9, 8], strides = [1, 1]} : vector<18x96xf32> to vector<9x8xf32>
    %284 = vector.extract_strided_slice %281 {offsets = [0, 64], sizes = [9, 8], strides = [1, 1]} : vector<18x96xf32> to vector<9x8xf32>
    %cst_127 = arith.constant dense<0.000000e+00> : vector<9x9xf32>
    %285 = tpu.matmul %282, %283, %cst_127 {dimension_numbers = #tpu.dot_dimension_numbers<[1], [1], [0], [0], [0, 0, 1, 0], [], []>} : vector<9x8xf32>, vector<9x8xf32>, vector<9x9xf32> -> vector<9x9xf32>
    %cst_128 = arith.constant 0.353553385 : f32
    %286 = vector.broadcast %cst_128 : f32 to vector<9x9xf32>
    %287 = arith.mulf %285, %286 : vector<9x9xf32>
    %cst_129 = arith.constant dense<0xFF800000> : vector<9xf32>
    %288 = vector.multi_reduction <maximumf>, %287, %cst_129 [1] : vector<9x9xf32> to vector<9xf32>
    %289 = vector.shape_cast %288 : vector<9xf32> to vector<9x1xf32>
    %290 = vector.broadcast %289 : vector<9x1xf32> to vector<9x9xf32>
    %291 = arith.subf %287, %290 : vector<9x9xf32>
    %292 = math.exp %291 : vector<9x9xf32>
    %cst_130 = arith.constant dense<0.000000e+00> : vector<9xf32>
    %293 = vector.multi_reduction <add>, %292, %cst_130 [1] : vector<9x9xf32> to vector<9xf32>
    %294 = vector.shape_cast %293 : vector<9xf32> to vector<9x1xf32>
    %295 = tpu.reciprocal %294 {approx = true} : vector<9x1xf32> -> vector<9x1xf32>
    %296 = vector.broadcast %295 : vector<9x1xf32> to vector<9x9xf32>
    %297 = arith.mulf %292, %296 : vector<9x9xf32>
    %cst_131 = arith.constant dense<0.000000e+00> : vector<9x8xf32>
    %298 = tpu.matmul %297, %284, %cst_131 {dimension_numbers = #tpu.dot_dimension_numbers<[1], [0], [0], [1], [0, 0, 1, 1], [], []>} : vector<9x9xf32>, vector<9x8xf32>, vector<9x8xf32> -> vector<9x8xf32>
    %299 = vector.extract_strided_slice %281 {offsets = [0, 8], sizes = [9, 8], strides = [1, 1]} : vector<18x96xf32> to vector<9x8xf32>
    %300 = vector.extract_strided_slice %281 {offsets = [0, 40], sizes = [9, 8], strides = [1, 1]} : vector<18x96xf32> to vector<9x8xf32>
    %301 = vector.extract_strided_slice %281 {offsets = [0, 72], sizes = [9, 8], strides = [1, 1]} : vector<18x96xf32> to vector<9x8xf32>
    %cst_132 = arith.constant dense<0.000000e+00> : vector<9x9xf32>
    %302 = tpu.matmul %299, %300, %cst_132 {dimension_numbers = #tpu.dot_dimension_numbers<[1], [1], [0], [0], [0, 0, 1, 0], [], []>} : vector<9x8xf32>, vector<9x8xf32>, vector<9x9xf32> -> vector<9x9xf32>
    %cst_133 = arith.constant 0.353553385 : f32
    %303 = vector.broadcast %cst_133 : f32 to vector<9x9xf32>
    %304 = arith.mulf %302, %303 : vector<9x9xf32>
    %cst_134 = arith.constant dense<0xFF800000> : vector<9xf32>
    %305 = vector.multi_reduction <maximumf>, %304, %cst_134 [1] : vector<9x9xf32> to vector<9xf32>
    %306 = vector.shape_cast %305 : vector<9xf32> to vector<9x1xf32>
    %307 = vector.broadcast %306 : vector<9x1xf32> to vector<9x9xf32>
    %308 = arith.subf %304, %307 : vector<9x9xf32>
    %309 = math.exp %308 : vector<9x9xf32>
    %cst_135 = arith.constant dense<0.000000e+00> : vector<9xf32>
    %310 = vector.multi_reduction <add>, %309, %cst_135 [1] : vector<9x9xf32> to vector<9xf32>
    %311 = vector.shape_cast %310 : vector<9xf32> to vector<9x1xf32>
    %312 = tpu.reciprocal %311 {approx = true} : vector<9x1xf32> -> vector<9x1xf32>
    %313 = vector.broadcast %312 : vector<9x1xf32> to vector<9x9xf32>
    %314 = arith.mulf %309, %313 : vector<9x9xf32>
    %cst_136 = arith.constant dense<0.000000e+00> : vector<9x8xf32>
    %315 = tpu.matmul %314, %301, %cst_136 {dimension_numbers = #tpu.dot_dimension_numbers<[1], [0], [0], [1], [0, 0, 1, 1], [], []>} : vector<9x9xf32>, vector<9x8xf32>, vector<9x8xf32> -> vector<9x8xf32>
    %316 = vector.extract_strided_slice %281 {offsets = [0, 16], sizes = [9, 8], strides = [1, 1]} : vector<18x96xf32> to vector<9x8xf32>
    %317 = vector.extract_strided_slice %281 {offsets = [0, 48], sizes = [9, 8], strides = [1, 1]} : vector<18x96xf32> to vector<9x8xf32>
    %318 = vector.extract_strided_slice %281 {offsets = [0, 80], sizes = [9, 8], strides = [1, 1]} : vector<18x96xf32> to vector<9x8xf32>
    %cst_137 = arith.constant dense<0.000000e+00> : vector<9x9xf32>
    %319 = tpu.matmul %316, %317, %cst_137 {dimension_numbers = #tpu.dot_dimension_numbers<[1], [1], [0], [0], [0, 0, 1, 0], [], []>} : vector<9x8xf32>, vector<9x8xf32>, vector<9x9xf32> -> vector<9x9xf32>
    %cst_138 = arith.constant 0.353553385 : f32
    %320 = vector.broadcast %cst_138 : f32 to vector<9x9xf32>
    %321 = arith.mulf %319, %320 : vector<9x9xf32>
    %cst_139 = arith.constant dense<0xFF800000> : vector<9xf32>
    %322 = vector.multi_reduction <maximumf>, %321, %cst_139 [1] : vector<9x9xf32> to vector<9xf32>
    %323 = vector.shape_cast %322 : vector<9xf32> to vector<9x1xf32>
    %324 = vector.broadcast %323 : vector<9x1xf32> to vector<9x9xf32>
    %325 = arith.subf %321, %324 : vector<9x9xf32>
    %326 = math.exp %325 : vector<9x9xf32>
    %cst_140 = arith.constant dense<0.000000e+00> : vector<9xf32>
    %327 = vector.multi_reduction <add>, %326, %cst_140 [1] : vector<9x9xf32> to vector<9xf32>
    %328 = vector.shape_cast %327 : vector<9xf32> to vector<9x1xf32>
    %329 = tpu.reciprocal %328 {approx = true} : vector<9x1xf32> -> vector<9x1xf32>
    %330 = vector.broadcast %329 : vector<9x1xf32> to vector<9x9xf32>
    %331 = arith.mulf %326, %330 : vector<9x9xf32>
    %cst_141 = arith.constant dense<0.000000e+00> : vector<9x8xf32>
    %332 = tpu.matmul %331, %318, %cst_141 {dimension_numbers = #tpu.dot_dimension_numbers<[1], [0], [0], [1], [0, 0, 1, 1], [], []>} : vector<9x9xf32>, vector<9x8xf32>, vector<9x8xf32> -> vector<9x8xf32>
    %333 = vector.extract_strided_slice %281 {offsets = [0, 24], sizes = [9, 8], strides = [1, 1]} : vector<18x96xf32> to vector<9x8xf32>
    %334 = vector.extract_strided_slice %281 {offsets = [0, 56], sizes = [9, 8], strides = [1, 1]} : vector<18x96xf32> to vector<9x8xf32>
    %335 = vector.extract_strided_slice %281 {offsets = [0, 88], sizes = [9, 8], strides = [1, 1]} : vector<18x96xf32> to vector<9x8xf32>
    %cst_142 = arith.constant dense<0.000000e+00> : vector<9x9xf32>
    %336 = tpu.matmul %333, %334, %cst_142 {dimension_numbers = #tpu.dot_dimension_numbers<[1], [1], [0], [0], [0, 0, 1, 0], [], []>} : vector<9x8xf32>, vector<9x8xf32>, vector<9x9xf32> -> vector<9x9xf32>
    %cst_143 = arith.constant 0.353553385 : f32
    %337 = vector.broadcast %cst_143 : f32 to vector<9x9xf32>
    %338 = arith.mulf %336, %337 : vector<9x9xf32>
    %cst_144 = arith.constant dense<0xFF800000> : vector<9xf32>
    %339 = vector.multi_reduction <maximumf>, %338, %cst_144 [1] : vector<9x9xf32> to vector<9xf32>
    %340 = vector.shape_cast %339 : vector<9xf32> to vector<9x1xf32>
    %341 = vector.broadcast %340 : vector<9x1xf32> to vector<9x9xf32>
    %342 = arith.subf %338, %341 : vector<9x9xf32>
    %343 = math.exp %342 : vector<9x9xf32>
    %cst_145 = arith.constant dense<0.000000e+00> : vector<9xf32>
    %344 = vector.multi_reduction <add>, %343, %cst_145 [1] : vector<9x9xf32> to vector<9xf32>
    %345 = vector.shape_cast %344 : vector<9xf32> to vector<9x1xf32>
    %346 = tpu.reciprocal %345 {approx = true} : vector<9x1xf32> -> vector<9x1xf32>
    %347 = vector.broadcast %346 : vector<9x1xf32> to vector<9x9xf32>
    %348 = arith.mulf %343, %347 : vector<9x9xf32>
    %cst_146 = arith.constant dense<0.000000e+00> : vector<9x8xf32>
    %349 = tpu.matmul %348, %335, %cst_146 {dimension_numbers = #tpu.dot_dimension_numbers<[1], [0], [0], [1], [0, 0, 1, 1], [], []>} : vector<9x9xf32>, vector<9x8xf32>, vector<9x8xf32> -> vector<9x8xf32>
    %350 = tpu.concatenate %298, %315, %332, %349 in 1 : vector<9x8xf32>, vector<9x8xf32>, vector<9x8xf32>, vector<9x8xf32> -> vector<9x32xf32>
    %351 = vector.extract_strided_slice %281 {offsets = [9, 0], sizes = [9, 8], strides = [1, 1]} : vector<18x96xf32> to vector<9x8xf32>
    %352 = vector.extract_strided_slice %281 {offsets = [9, 32], sizes = [9, 8], strides = [1, 1]} : vector<18x96xf32> to vector<9x8xf32>
    %353 = vector.extract_strided_slice %281 {offsets = [9, 64], sizes = [9, 8], strides = [1, 1]} : vector<18x96xf32> to vector<9x8xf32>
    %cst_147 = arith.constant dense<0.000000e+00> : vector<9x9xf32>
    %354 = tpu.matmul %351, %352, %cst_147 {dimension_numbers = #tpu.dot_dimension_numbers<[1], [1], [0], [0], [0, 0, 1, 0], [], []>} : vector<9x8xf32>, vector<9x8xf32>, vector<9x9xf32> -> vector<9x9xf32>
    %cst_148 = arith.constant 0.353553385 : f32
    %355 = vector.broadcast %cst_148 : f32 to vector<9x9xf32>
    %356 = arith.mulf %354, %355 : vector<9x9xf32>
    %cst_149 = arith.constant dense<0xFF800000> : vector<9xf32>
    %357 = vector.multi_reduction <maximumf>, %356, %cst_149 [1] : vector<9x9xf32> to vector<9xf32>
    %358 = vector.shape_cast %357 : vector<9xf32> to vector<9x1xf32>
    %359 = vector.broadcast %358 : vector<9x1xf32> to vector<9x9xf32>
    %360 = arith.subf %356, %359 : vector<9x9xf32>
    %361 = math.exp %360 : vector<9x9xf32>
    %cst_150 = arith.constant dense<0.000000e+00> : vector<9xf32>
    %362 = vector.multi_reduction <add>, %361, %cst_150 [1] : vector<9x9xf32> to vector<9xf32>
    %363 = vector.shape_cast %362 : vector<9xf32> to vector<9x1xf32>
    %364 = tpu.reciprocal %363 {approx = true} : vector<9x1xf32> -> vector<9x1xf32>
    %365 = vector.broadcast %364 : vector<9x1xf32> to vector<9x9xf32>
    %366 = arith.mulf %361, %365 : vector<9x9xf32>
    %cst_151 = arith.constant dense<0.000000e+00> : vector<9x8xf32>
    %367 = tpu.matmul %366, %353, %cst_151 {dimension_numbers = #tpu.dot_dimension_numbers<[1], [0], [0], [1], [0, 0, 1, 1], [], []>} : vector<9x9xf32>, vector<9x8xf32>, vector<9x8xf32> -> vector<9x8xf32>
    %368 = vector.extract_strided_slice %281 {offsets = [9, 8], sizes = [9, 8], strides = [1, 1]} : vector<18x96xf32> to vector<9x8xf32>
    %369 = vector.extract_strided_slice %281 {offsets = [9, 40], sizes = [9, 8], strides = [1, 1]} : vector<18x96xf32> to vector<9x8xf32>
    %370 = vector.extract_strided_slice %281 {offsets = [9, 72], sizes = [9, 8], strides = [1, 1]} : vector<18x96xf32> to vector<9x8xf32>
    %cst_152 = arith.constant dense<0.000000e+00> : vector<9x9xf32>
    %371 = tpu.matmul %368, %369, %cst_152 {dimension_numbers = #tpu.dot_dimension_numbers<[1], [1], [0], [0], [0, 0, 1, 0], [], []>} : vector<9x8xf32>, vector<9x8xf32>, vector<9x9xf32> -> vector<9x9xf32>
    %cst_153 = arith.constant 0.353553385 : f32
    %372 = vector.broadcast %cst_153 : f32 to vector<9x9xf32>
    %373 = arith.mulf %371, %372 : vector<9x9xf32>
    %cst_154 = arith.constant dense<0xFF800000> : vector<9xf32>
    %374 = vector.multi_reduction <maximumf>, %373, %cst_154 [1] : vector<9x9xf32> to vector<9xf32>
    %375 = vector.shape_cast %374 : vector<9xf32> to vector<9x1xf32>
    %376 = vector.broadcast %375 : vector<9x1xf32> to vector<9x9xf32>
    %377 = arith.subf %373, %376 : vector<9x9xf32>
    %378 = math.exp %377 : vector<9x9xf32>
    %cst_155 = arith.constant dense<0.000000e+00> : vector<9xf32>
    %379 = vector.multi_reduction <add>, %378, %cst_155 [1] : vector<9x9xf32> to vector<9xf32>
    %380 = vector.shape_cast %379 : vector<9xf32> to vector<9x1xf32>
    %381 = tpu.reciprocal %380 {approx = true} : vector<9x1xf32> -> vector<9x1xf32>
    %382 = vector.broadcast %381 : vector<9x1xf32> to vector<9x9xf32>
    %383 = arith.mulf %378, %382 : vector<9x9xf32>
    %cst_156 = arith.constant dense<0.000000e+00> : vector<9x8xf32>
    %384 = tpu.matmul %383, %370, %cst_156 {dimension_numbers = #tpu.dot_dimension_numbers<[1], [0], [0], [1], [0, 0, 1, 1], [], []>} : vector<9x9xf32>, vector<9x8xf32>, vector<9x8xf32> -> vector<9x8xf32>
    %385 = vector.extract_strided_slice %281 {offsets = [9, 16], sizes = [9, 8], strides = [1, 1]} : vector<18x96xf32> to vector<9x8xf32>
    %386 = vector.extract_strided_slice %281 {offsets = [9, 48], sizes = [9, 8], strides = [1, 1]} : vector<18x96xf32> to vector<9x8xf32>
    %387 = vector.extract_strided_slice %281 {offsets = [9, 80], sizes = [9, 8], strides = [1, 1]} : vector<18x96xf32> to vector<9x8xf32>
    %cst_157 = arith.constant dense<0.000000e+00> : vector<9x9xf32>
    %388 = tpu.matmul %385, %386, %cst_157 {dimension_numbers = #tpu.dot_dimension_numbers<[1], [1], [0], [0], [0, 0, 1, 0], [], []>} : vector<9x8xf32>, vector<9x8xf32>, vector<9x9xf32> -> vector<9x9xf32>
    %cst_158 = arith.constant 0.353553385 : f32
    %389 = vector.broadcast %cst_158 : f32 to vector<9x9xf32>
    %390 = arith.mulf %388, %389 : vector<9x9xf32>
    %cst_159 = arith.constant dense<0xFF800000> : vector<9xf32>
    %391 = vector.multi_reduction <maximumf>, %390, %cst_159 [1] : vector<9x9xf32> to vector<9xf32>
    %392 = vector.shape_cast %391 : vector<9xf32> to vector<9x1xf32>
    %393 = vector.broadcast %392 : vector<9x1xf32> to vector<9x9xf32>
    %394 = arith.subf %390, %393 : vector<9x9xf32>
    %395 = math.exp %394 : vector<9x9xf32>
    %cst_160 = arith.constant dense<0.000000e+00> : vector<9xf32>
    %396 = vector.multi_reduction <add>, %395, %cst_160 [1] : vector<9x9xf32> to vector<9xf32>
    %397 = vector.shape_cast %396 : vector<9xf32> to vector<9x1xf32>
    %398 = tpu.reciprocal %397 {approx = true} : vector<9x1xf32> -> vector<9x1xf32>
    %399 = vector.broadcast %398 : vector<9x1xf32> to vector<9x9xf32>
    %400 = arith.mulf %395, %399 : vector<9x9xf32>
    %cst_161 = arith.constant dense<0.000000e+00> : vector<9x8xf32>
    %401 = tpu.matmul %400, %387, %cst_161 {dimension_numbers = #tpu.dot_dimension_numbers<[1], [0], [0], [1], [0, 0, 1, 1], [], []>} : vector<9x9xf32>, vector<9x8xf32>, vector<9x8xf32> -> vector<9x8xf32>
    %402 = vector.extract_strided_slice %281 {offsets = [9, 24], sizes = [9, 8], strides = [1, 1]} : vector<18x96xf32> to vector<9x8xf32>
    %403 = vector.extract_strided_slice %281 {offsets = [9, 56], sizes = [9, 8], strides = [1, 1]} : vector<18x96xf32> to vector<9x8xf32>
    %404 = vector.extract_strided_slice %281 {offsets = [9, 88], sizes = [9, 8], strides = [1, 1]} : vector<18x96xf32> to vector<9x8xf32>
    %cst_162 = arith.constant dense<0.000000e+00> : vector<9x9xf32>
    %405 = tpu.matmul %402, %403, %cst_162 {dimension_numbers = #tpu.dot_dimension_numbers<[1], [1], [0], [0], [0, 0, 1, 0], [], []>} : vector<9x8xf32>, vector<9x8xf32>, vector<9x9xf32> -> vector<9x9xf32>
    %cst_163 = arith.constant 0.353553385 : f32
    %406 = vector.broadcast %cst_163 : f32 to vector<9x9xf32>
    %407 = arith.mulf %405, %406 : vector<9x9xf32>
    %cst_164 = arith.constant dense<0xFF800000> : vector<9xf32>
    %408 = vector.multi_reduction <maximumf>, %407, %cst_164 [1] : vector<9x9xf32> to vector<9xf32>
    %409 = vector.shape_cast %408 : vector<9xf32> to vector<9x1xf32>
    %410 = vector.broadcast %409 : vector<9x1xf32> to vector<9x9xf32>
    %411 = arith.subf %407, %410 : vector<9x9xf32>
    %412 = math.exp %411 : vector<9x9xf32>
    %cst_165 = arith.constant dense<0.000000e+00> : vector<9xf32>
    %413 = vector.multi_reduction <add>, %412, %cst_165 [1] : vector<9x9xf32> to vector<9xf32>
    %414 = vector.shape_cast %413 : vector<9xf32> to vector<9x1xf32>
    %415 = tpu.reciprocal %414 {approx = true} : vector<9x1xf32> -> vector<9x1xf32>
    %416 = vector.broadcast %415 : vector<9x1xf32> to vector<9x9xf32>
    %417 = arith.mulf %412, %416 : vector<9x9xf32>
    %cst_166 = arith.constant dense<0.000000e+00> : vector<9x8xf32>
    %418 = tpu.matmul %417, %404, %cst_166 {dimension_numbers = #tpu.dot_dimension_numbers<[1], [0], [0], [1], [0, 0, 1, 1], [], []>} : vector<9x9xf32>, vector<9x8xf32>, vector<9x8xf32> -> vector<9x8xf32>
    %419 = tpu.concatenate %367, %384, %401, %418 in 1 : vector<9x8xf32>, vector<9x8xf32>, vector<9x8xf32>, vector<9x8xf32> -> vector<9x32xf32>
    %420 = tpu.concatenate %350, %419 in 0 : vector<9x32xf32>, vector<9x32xf32> -> vector<18x32xf32>
    %c1_167 = arith.constant 1 : index
    %c0_168 = arith.constant 0 : index
    %c0_169 = arith.constant 0 : index
    %421 = vector.load %arg11[%c1_167, %c0_168, %c0_169] : memref<2x32x32xf32, #tpu.memory_space<vmem>>, vector<1x32x32xf32>
    %422 = vector.shape_cast %421 : vector<1x32x32xf32> to vector<32x32xf32>
    %cst_170 = arith.constant dense<0.000000e+00> : vector<18x32xf32>
    %423 = tpu.matmul %420, %422, %cst_170 {dimension_numbers = #tpu.dot_dimension_numbers<[1], [0], [0], [1], [0, 0, 1, 1], [], []>} : vector<18x32xf32>, vector<32x32xf32>, vector<18x32xf32> -> vector<18x32xf32>
    %424 = arith.addf %250, %423 : vector<18x32xf32>
    %c1_171 = arith.constant 1 : index
    %c0_172 = arith.constant 0 : index
    %c0_173 = arith.constant 0 : index
    %425 = vector.load %arg12[%c1_171, %c0_172, %c0_173] : memref<2x1x32xf32, #tpu.memory_space<vmem>>, vector<1x1x32xf32>
    %426 = vector.shape_cast %425 : vector<1x1x32xf32> to vector<1x32xf32>
    %427 = vector.broadcast %426 : vector<1x32xf32> to vector<18x32xf32>
    %428 = arith.addf %424, %427 : vector<18x32xf32>
    %c1_174 = arith.constant 1 : index
    %c0_175 = arith.constant 0 : index
    %c0_176 = arith.constant 0 : index
    %429 = vector.load %arg13[%c1_174, %c0_175, %c0_176] : memref<2x1x32xf32, #tpu.memory_space<vmem>>, vector<1x1x32xf32>
    %430 = vector.shape_cast %429 : vector<1x1x32xf32> to vector<1x32xf32>
    %c1_177 = arith.constant 1 : index
    %c0_178 = arith.constant 0 : index
    %c0_179 = arith.constant 0 : index
    %431 = vector.load %arg14[%c1_177, %c0_178, %c0_179] : memref<2x1x32xf32, #tpu.memory_space<vmem>>, vector<1x1x32xf32>
    %432 = vector.shape_cast %431 : vector<1x1x32xf32> to vector<1x32xf32>
    %cst_180 = arith.constant dense<0.000000e+00> : vector<18xf32>
    %433 = vector.multi_reduction <add>, %428, %cst_180 [1] : vector<18x32xf32> to vector<18xf32>
    %434 = vector.shape_cast %433 : vector<18xf32> to vector<18x1xf32>
    %cst_181 = arith.constant 3.200000e+01 : f32
    %435 = vector.broadcast %cst_181 : f32 to vector<18x1xf32>
    %436 = arith.divf %434, %435 : vector<18x1xf32>
    %437 = vector.broadcast %436 : vector<18x1xf32> to vector<18x32xf32>
    %438 = arith.subf %428, %437 : vector<18x32xf32>
    %439 = arith.mulf %438, %438 : vector<18x32xf32>
    %cst_182 = arith.constant dense<0.000000e+00> : vector<18xf32>
    %440 = vector.multi_reduction <add>, %439, %cst_182 [1] : vector<18x32xf32> to vector<18xf32>
    %441 = vector.shape_cast %440 : vector<18xf32> to vector<18x1xf32>
    %cst_183 = arith.constant 3.200000e+01 : f32
    %442 = vector.broadcast %cst_183 : f32 to vector<18x1xf32>
    %443 = arith.divf %441, %442 : vector<18x1xf32>
    %cst_184 = arith.constant 9.99999997E-7 : f32
    %444 = vector.broadcast %cst_184 : f32 to vector<18x1xf32>
    %445 = arith.addf %443, %444 : vector<18x1xf32>
    %446 = math.rsqrt %445 : vector<18x1xf32>
    %447 = vector.broadcast %446 : vector<18x1xf32> to vector<18x32xf32>
    %448 = arith.mulf %438, %447 : vector<18x32xf32>
    %449 = vector.broadcast %430 : vector<1x32xf32> to vector<18x32xf32>
    %450 = arith.mulf %448, %449 : vector<18x32xf32>
    %451 = vector.broadcast %432 : vector<1x32xf32> to vector<18x32xf32>
    %452 = arith.addf %450, %451 : vector<18x32xf32>
    %c1_185 = arith.constant 1 : index
    %c0_186 = arith.constant 0 : index
    %c0_187 = arith.constant 0 : index
    %453 = vector.load %arg15[%c1_185, %c0_186, %c0_187] : memref<2x32x64xf32, #tpu.memory_space<vmem>>, vector<1x32x64xf32>
    %454 = vector.shape_cast %453 : vector<1x32x64xf32> to vector<32x64xf32>
    %cst_188 = arith.constant dense<0.000000e+00> : vector<18x64xf32>
    %455 = tpu.matmul %452, %454, %cst_188 {dimension_numbers = #tpu.dot_dimension_numbers<[1], [0], [0], [1], [0, 0, 1, 1], [], []>} : vector<18x32xf32>, vector<32x64xf32>, vector<18x64xf32> -> vector<18x64xf32>
    %c1_189 = arith.constant 1 : index
    %c0_190 = arith.constant 0 : index
    %c0_191 = arith.constant 0 : index
    %456 = vector.load %arg16[%c1_189, %c0_190, %c0_191] : memref<2x1x64xf32, #tpu.memory_space<vmem>>, vector<1x1x64xf32>
    %457 = vector.shape_cast %456 : vector<1x1x64xf32> to vector<1x64xf32>
    %458 = vector.broadcast %457 : vector<1x64xf32> to vector<18x64xf32>
    %459 = arith.addf %455, %458 : vector<18x64xf32>
    %cst_192 = arith.constant 5.000000e-01 : f32
    %460 = vector.broadcast %cst_192 : f32 to vector<18x64xf32>
    %461 = arith.mulf %460, %459 : vector<18x64xf32>
    %cst_193 = arith.constant 4.471500e-02 : f32
    %462 = vector.broadcast %cst_193 : f32 to vector<18x64xf32>
    %463 = arith.mulf %462, %459 : vector<18x64xf32>
    %464 = arith.mulf %463, %459 : vector<18x64xf32>
    %465 = arith.mulf %464, %459 : vector<18x64xf32>
    %466 = arith.addf %459, %465 : vector<18x64xf32>
    %cst_194 = arith.constant 0.797884583 : f32
    %467 = vector.broadcast %cst_194 : f32 to vector<18x64xf32>
    %468 = arith.mulf %467, %466 : vector<18x64xf32>
    %469 = math.tanh %468 : vector<18x64xf32>
    %cst_195 = arith.constant 1.000000e+00 : f32
    %470 = vector.broadcast %cst_195 : f32 to vector<18x64xf32>
    %471 = arith.addf %470, %469 : vector<18x64xf32>
    %472 = arith.mulf %461, %471 : vector<18x64xf32>
    %c1_196 = arith.constant 1 : index
    %c0_197 = arith.constant 0 : index
    %c0_198 = arith.constant 0 : index
    %473 = vector.load %arg17[%c1_196, %c0_197, %c0_198] : memref<2x64x32xf32, #tpu.memory_space<vmem>>, vector<1x64x32xf32>
    %474 = vector.shape_cast %473 : vector<1x64x32xf32> to vector<64x32xf32>
    %cst_199 = arith.constant dense<0.000000e+00> : vector<18x32xf32>
    %475 = tpu.matmul %472, %474, %cst_199 {dimension_numbers = #tpu.dot_dimension_numbers<[1], [0], [0], [1], [0, 0, 1, 1], [], []>} : vector<18x64xf32>, vector<64x32xf32>, vector<18x32xf32> -> vector<18x32xf32>
    %476 = arith.addf %428, %475 : vector<18x32xf32>
    %c1_200 = arith.constant 1 : index
    %c0_201 = arith.constant 0 : index
    %c0_202 = arith.constant 0 : index
    %477 = vector.load %arg18[%c1_200, %c0_201, %c0_202] : memref<2x1x32xf32, #tpu.memory_space<vmem>>, vector<1x1x32xf32>
    %478 = vector.shape_cast %477 : vector<1x1x32xf32> to vector<1x32xf32>
    %479 = vector.broadcast %478 : vector<1x32xf32> to vector<18x32xf32>
    %480 = arith.addf %476, %479 : vector<18x32xf32>
    %481 = vector.extract_strided_slice %480 {offsets = [0, 0], sizes = [1, 32], strides = [1, 1]} : vector<18x32xf32> to vector<1x32xf32>
    %482 = vector.extract_strided_slice %480 {offsets = [9, 0], sizes = [1, 32], strides = [1, 1]} : vector<18x32xf32> to vector<1x32xf32>
    %483 = tpu.concatenate %481, %482 in 0 : vector<1x32xf32>, vector<1x32xf32> -> vector<2x32xf32>
    %c0_203 = arith.constant 0 : index
    %c0_204 = arith.constant 0 : index
    %484 = vector.load %arg19[%c0_203, %c0_204] : memref<1x32xf32, #tpu.memory_space<vmem>>, vector<1x32xf32>
    %c0_205 = arith.constant 0 : index
    %c0_206 = arith.constant 0 : index
    %485 = vector.load %arg20[%c0_205, %c0_206] : memref<1x32xf32, #tpu.memory_space<vmem>>, vector<1x32xf32>
    %cst_207 = arith.constant dense<0.000000e+00> : vector<2xf32>
    %486 = vector.multi_reduction <add>, %483, %cst_207 [1] : vector<2x32xf32> to vector<2xf32>
    %487 = vector.shape_cast %486 : vector<2xf32> to vector<2x1xf32>
    %cst_208 = arith.constant 3.200000e+01 : f32
    %488 = vector.broadcast %cst_208 : f32 to vector<2x1xf32>
    %489 = arith.divf %487, %488 : vector<2x1xf32>
    %490 = vector.broadcast %489 : vector<2x1xf32> to vector<2x32xf32>
    %491 = arith.subf %483, %490 : vector<2x32xf32>
    %492 = arith.mulf %491, %491 : vector<2x32xf32>
    %cst_209 = arith.constant dense<0.000000e+00> : vector<2xf32>
    %493 = vector.multi_reduction <add>, %492, %cst_209 [1] : vector<2x32xf32> to vector<2xf32>
    %494 = vector.shape_cast %493 : vector<2xf32> to vector<2x1xf32>
    %cst_210 = arith.constant 3.200000e+01 : f32
    %495 = vector.broadcast %cst_210 : f32 to vector<2x1xf32>
    %496 = arith.divf %494, %495 : vector<2x1xf32>
    %cst_211 = arith.constant 9.99999997E-7 : f32
    %497 = vector.broadcast %cst_211 : f32 to vector<2x1xf32>
    %498 = arith.addf %496, %497 : vector<2x1xf32>
    %499 = math.rsqrt %498 : vector<2x1xf32>
    %500 = vector.broadcast %499 : vector<2x1xf32> to vector<2x32xf32>
    %501 = arith.mulf %491, %500 : vector<2x32xf32>
    %502 = vector.broadcast %484 : vector<1x32xf32> to vector<2x32xf32>
    %503 = arith.mulf %501, %502 : vector<2x32xf32>
    %504 = vector.broadcast %485 : vector<1x32xf32> to vector<2x32xf32>
    %505 = arith.addf %503, %504 : vector<2x32xf32>
    %c0_212 = arith.constant 0 : index
    %c0_213 = arith.constant 0 : index
    %506 = vector.load %arg21[%c0_212, %c0_213] : memref<32x1024xf32, #tpu.memory_space<vmem>>, vector<32x1024xf32>
    %cst_214 = arith.constant dense<0.000000e+00> : vector<2x1024xf32>
    %507 = tpu.matmul %505, %506, %cst_214 {dimension_numbers = #tpu.dot_dimension_numbers<[1], [0], [0], [1], [0, 0, 1, 1], [], []>} : vector<2x32xf32>, vector<32x1024xf32>, vector<2x1024xf32> -> vector<2x1024xf32>
    %c0_215 = arith.constant 0 : index
    %c0_216 = arith.constant 0 : index
    %508 = vector.load %arg22[%c0_215, %c0_216] : memref<1x1024xf32, #tpu.memory_space<vmem>>, vector<1x1024xf32>
    %509 = vector.broadcast %508 : vector<1x1024xf32> to vector<2x1024xf32>
    %510 = arith.addf %507, %509 : vector<2x1024xf32>
    %511 = vector.extract_strided_slice %510 {offsets = [0, 0], sizes = [1, 1024], strides = [1, 1]} : vector<2x1024xf32> to vector<1x1024xf32>
    %c0_217 = arith.constant 0 : index
    %c0_218 = arith.constant 0 : index
    %c0_219 = arith.constant 0 : index
    %512 = vector.load %arg23[%c0_217, %c0_218, %c0_219] : memref<2x1x1024xf32, #tpu.memory_space<vmem>>, vector<1x1x1024xf32>
    %513 = vector.shape_cast %512 : vector<1x1x1024xf32> to vector<1x1024xf32>
    %514 = vector.shape_cast %511 : vector<1x1024xf32> to vector<1x1x1024xf32>
    tpu.vector_store %arg23[%c0_217, %c0_218, %c0_219], %514 {strides = array<i32>} : memref<2x1x1024xf32, #tpu.memory_space<vmem>>, vector<1x1x1024xf32>,
    %515 = vector.extract_strided_slice %510 {offsets = [1, 0], sizes = [1, 1024], strides = [1, 1]} : vector<2x1024xf32> to vector<1x1024xf32>
    %c1_220 = arith.constant 1 : index
    %c0_221 = arith.constant 0 : index
    %c0_222 = arith.constant 0 : index
    %516 = vector.load %arg23[%c1_220, %c0_221, %c0_222] : memref<2x1x1024xf32, #tpu.memory_space<vmem>>, vector<1x1x1024xf32>
    %517 = vector.shape_cast %516 : vector<1x1x1024xf32> to vector<1x1024xf32>
    %518 = vector.shape_cast %515 : vector<1x1024xf32> to vector<1x1x1024xf32>
    tpu.vector_store %arg23[%c1_220, %c0_221, %c0_222], %518 {strides = array<i32>} : memref<2x1x1024xf32, #tpu.memory_space<vmem>>, vector<1x1x1024xf32>,
    return
  }
  func.func @transform_0(%arg0: i32) -> (i32, i32) {
    %c0_i32 = arith.constant 0 : i32
    %c0_i32_0 = arith.constant 0 : i32
    return %arg0, %c0_i32 : i32, i32
  }
  func.func @transform_1(%arg0: i32) -> (i32, i32, i32) {
    %c0_i32 = arith.constant 0 : i32
    %c0_i32_0 = arith.constant 0 : i32
    %c0_i32_1 = arith.constant 0 : i32
    return %arg0, %c0_i32, %c0_i32_0 : i32, i32, i32
  }
  func.func @transform_2(%arg0: i32) -> (i32, i32) {
    %c0_i32 = arith.constant 0 : i32
    %c0_i32_0 = arith.constant 0 : i32
    %c0_i32_1 = arith.constant 0 : i32
    return %c0_i32, %c0_i32_0 : i32, i32
  }
  func.func @transform_3(%arg0: i32) -> (i32, i32) {
    %c0_i32 = arith.constant 0 : i32
    %c0_i32_0 = arith.constant 0 : i32
    %c0_i32_1 = arith.constant 0 : i32
    return %c0_i32, %c0_i32_0 : i32, i32
  }
  func.func @transform_4(%arg0: i32) -> (i32, i32) {
    %c0_i32 = arith.constant 0 : i32
    %c0_i32_0 = arith.constant 0 : i32
    %c0_i32_1 = arith.constant 0 : i32
    return %c0_i32, %c0_i32_0 : i32, i32
  }
  func.func @transform_5(%arg0: i32) -> (i32, i32) {
    %c0_i32 = arith.constant 0 : i32
    %c0_i32_0 = arith.constant 0 : i32
    %c0_i32_1 = arith.constant 0 : i32
    return %c0_i32, %c0_i32_0 : i32, i32
  }
  func.func @transform_6(%arg0: i32) -> (i32, i32, i32) {
    %c0_i32 = arith.constant 0 : i32
    %c0_i32_0 = arith.constant 0 : i32
    %c0_i32_1 = arith.constant 0 : i32
    %c0_i32_2 = arith.constant 0 : i32
    return %c0_i32, %c0_i32_0, %c0_i32_1 : i32, i32, i32
  }
  func.func @transform_7(%arg0: i32) -> (i32, i32, i32) {
    %c0_i32 = arith.constant 0 : i32
    %c0_i32_0 = arith.constant 0 : i32
    %c0_i32_1 = arith.constant 0 : i32
    %c0_i32_2 = arith.constant 0 : i32
    return %c0_i32, %c0_i32_0, %c0_i32_1 : i32, i32, i32
  }
  func.func @transform_8(%arg0: i32) -> (i32, i32, i32) {
    %c0_i32 = arith.constant 0 : i32
    %c0_i32_0 = arith.constant 0 : i32
    %c0_i32_1 = arith.constant 0 : i32
    %c0_i32_2 = arith.constant 0 : i32
    return %c0_i32, %c0_i32_0, %c0_i32_1 : i32, i32, i32
  }
  func.func @transform_9(%arg0: i32) -> (i32, i32, i32) {
    %c0_i32 = arith.constant 0 : i32
    %c0_i32_0 = arith.constant 0 : i32
    %c0_i32_1 = arith.constant 0 : i32
    %c0_i32_2 = arith.constant 0 : i32
    return %c0_i32, %c0_i32_0, %c0_i32_1 : i32, i32, i32
  }
  func.func @transform_10(%arg0: i32) -> (i32, i32, i32) {
    %c0_i32 = arith.constant 0 : i32
    %c0_i32_0 = arith.constant 0 : i32
    %c0_i32_1 = arith.constant 0 : i32
    %c0_i32_2 = arith.constant 0 : i32
    return %c0_i32, %c0_i32_0, %c0_i32_1 : i32, i32, i32
  }
  func.func @transform_11(%arg0: i32) -> (i32, i32, i32) {
    %c0_i32 = arith.constant 0 : i32
    %c0_i32_0 = arith.constant 0 : i32
    %c0_i32_1 = arith.constant 0 : i32
    %c0_i32_2 = arith.constant 0 : i32
    return %c0_i32, %c0_i32_0, %c0_i32_1 : i32, i32, i32
  }
  func.func @transform_12(%arg0: i32) -> (i32, i32, i32) {
    %c0_i32 = arith.constant 0 : i32
    %c0_i32_0 = arith.constant 0 : i32
    %c0_i32_1 = arith.constant 0 : i32
    %c0_i32_2 = arith.constant 0 : i32
    return %c0_i32, %c0_i32_0, %c0_i32_1 : i32, i32, i32
  }
  func.func @transform_13(%arg0: i32) -> (i32, i32, i32) {
    %c0_i32 = arith.constant 0 : i32
    %c0_i32_0 = arith.constant 0 : i32
    %c0_i32_1 = arith.constant 0 : i32
    %c0_i32_2 = arith.constant 0 : i32
    return %c0_i32, %c0_i32_0, %c0_i32_1 : i32, i32, i32
  }
  func.func @transform_14(%arg0: i32) -> (i32, i32, i32) {
    %c0_i32 = arith.constant 0 : i32
    %c0_i32_0 = arith.constant 0 : i32
    %c0_i32_1 = arith.constant 0 : i32
    %c0_i32_2 = arith.constant 0 : i32
    return %c0_i32, %c0_i32_0, %c0_i32_1 : i32, i32, i32
  }
  func.func @transform_15(%arg0: i32) -> (i32, i32, i32) {
    %c0_i32 = arith.constant 0 : i32
    %c0_i32_0 = arith.constant 0 : i32
    %c0_i32_1 = arith.constant 0 : i32
    %c0_i32_2 = arith.constant 0 : i32
    return %c0_i32, %c0_i32_0, %c0_i32_1 : i32, i32, i32
  }
  func.func @transform_16(%arg0: i32) -> (i32, i32, i32) {
    %c0_i32 = arith.constant 0 : i32
    %c0_i32_0 = arith.constant 0 : i32
    %c0_i32_1 = arith.constant 0 : i32
    %c0_i32_2 = arith.constant 0 : i32
    return %c0_i32, %c0_i32_0, %c0_i32_1 : i32, i32, i32
  }
  func.func @transform_17(%arg0: i32) -> (i32, i32, i32) {
    %c0_i32 = arith.constant 0 : i32
    %c0_i32_0 = arith.constant 0 : i32
    %c0_i32_1 = arith.constant 0 : i32
    %c0_i32_2 = arith.constant 0 : i32
    return %c0_i32, %c0_i32_0, %c0_i32_1 : i32, i32, i32
  }
  func.func @transform_18(%arg0: i32) -> (i32, i32) {
    %c0_i32 = arith.constant 0 : i32
    %c0_i32_0 = arith.constant 0 : i32
    %c0_i32_1 = arith.constant 0 : i32
    return %c0_i32, %c0_i32_0 : i32, i32
  }
  func.func @transform_19(%arg0: i32) -> (i32, i32) {
    %c0_i32 = arith.constant 0 : i32
    %c0_i32_0 = arith.constant 0 : i32
    %c0_i32_1 = arith.constant 0 : i32
    return %c0_i32, %c0_i32_0 : i32, i32
  }
  func.func @transform_20(%arg0: i32) -> (i32, i32) {
    %c0_i32 = arith.constant 0 : i32
    %c0_i32_0 = arith.constant 0 : i32
    %c0_i32_1 = arith.constant 0 : i32
    return %c0_i32, %c0_i32_0 : i32, i32
  }
  func.func @transform_21(%arg0: i32) -> (i32, i32) {
    %c0_i32 = arith.constant 0 : i32
    %c0_i32_0 = arith.constant 0 : i32
    %c0_i32_1 = arith.constant 0 : i32
    return %c0_i32, %c0_i32_0 : i32, i32
  }
  func.func @transform_22(%arg0: i32) -> (i32, i32, i32) {
    %c0_i32 = arith.constant 0 : i32
    %c0_i32_0 = arith.constant 0 : i32
    %c0_i32_1 = arith.constant 0 : i32
    return %arg0, %c0_i32, %c0_i32_0 : i32, i32, i32
  }
}

</mosaic_0001>

<llo_original>
// kernel: _lambda_.1
$region0: #{_lambda_.1}
  #allocation0 [shape = 'u32[]', space=smem, size = 0x4, offset = 0x4, fixed_abs, tag = 'smem constant byte address 0x4 - core index']
  #allocation1 [shape = 'u32[72,128]{1,0:T(1,128)}', space=vmem, size = 0x9000, scoped, tag = 'internal scratch']
  %s0 = inlined_call_operand.vmem [shape: f32[16,128], index: 0, kind: input, shape index: {}]
  %s1 = inlined_call_operand.vmem [shape: f32[2,1,10], index: 1, kind: input, shape index: {}]
  %s2 = inlined_call_operand.vmem [shape: f32[128,32], index: 2, kind: input, shape index: {}]
  %s3 = inlined_call_operand.vmem [shape: f32[1,32], index: 3, kind: input, shape index: {}, may-alias: {3,5,19}]
  %s4 = inlined_call_operand.vmem [shape: f32[10,32], index: 4, kind: input, shape index: {}]
  %s5 = inlined_call_operand.vmem [shape: f32[1,32], index: 5, kind: input, shape index: {}, may-alias: {3,5,19}]
  %s6 = inlined_call_operand.vmem [shape: f32[2,1,32], index: 6, kind: input, shape index: {}, may-alias: {6,12}]
  %s7 = inlined_call_operand.vmem [shape: f32[2,1,32], index: 7, kind: input, shape index: {}, may-alias: {7,11,13,17}]
  %s8 = inlined_call_operand.vmem [shape: f32[2,32,96], index: 8, kind: input, shape index: {}]
  %s9 = inlined_call_operand.vmem [shape: f32[2,1,96], index: 9, kind: input, shape index: {}]
  %s10 = inlined_call_operand.vmem [shape: f32[2,32,32], index: 10, kind: input, shape index: {}]
  %s11 = inlined_call_operand.vmem [shape: f32[2,1,32], index: 11, kind: input, shape index: {}, may-alias: {7,11,13,17}]
  %s12 = inlined_call_operand.vmem [shape: f32[2,1,32], index: 12, kind: input, shape index: {}, may-alias: {6,12}]
  %s13 = inlined_call_operand.vmem [shape: f32[2,1,32], index: 13, kind: input, shape index: {}, may-alias: {7,11,13,17}]
  %s14 = inlined_call_operand.vmem [shape: f32[2,32,64], index: 14, kind: input, shape index: {}]
  %s15 = inlined_call_operand.vmem [shape: f32[2,1,64], index: 15, kind: input, shape index: {}]
  %s16 = inlined_call_operand.vmem [shape: f32[2,64,32], index: 16, kind: input, shape index: {}]
  %s17 = inlined_call_operand.vmem [shape: f32[2,1,32], index: 17, kind: input, shape index: {}, may-alias: {7,11,13,17}]
  %s18 = inlined_call_operand.vmem [shape: f32[1,32], index: 18, kind: input, shape index: {}]
  %s19 = inlined_call_operand.vmem [shape: f32[1,32], index: 19, kind: input, shape index: {}, may-alias: {3,5,19}]
  %s20 = inlined_call_operand.vmem [shape: f32[32,1024], index: 20, kind: input, shape index: {}]
  %s21 = inlined_call_operand.vmem [shape: f32[1,1024], index: 21, kind: input, shape index: {}]
  %s22 = inlined_call_operand.vmem [shape: f32[2,1,1024], index: 22, kind: output, shape index: {}]
  %s23 = sld [smem:[#allocation0]]
  $region98: #{_lambda_.1} parent=0
    _
  %s25 = ssub.s32 1, %s23
  %s26 = scalar_select 0, %s25, %s23
  // Predicated region
  $region2: #{_lambda_.1} parent=0 // pred_check
    _
  $region3: #{_lambda_.1} parent=0 // pred_check_branch
    %28 = sbr.rel (0) target = $region5
  $region4: #{_lambda_.1} parent=0 // pred_region
    _
  $region5: #{_lambda_.1} parent=0 // pred_fallthru
    _
  // Predicated region
  $region6: #{_lambda_.1} parent=0 // pred_check
    _
  $region7: #{_lambda_.1} parent=0 // pred_check_branch
    %30 = sbr.rel (0) target = $region9
  $region8: #{_lambda_.1} parent=0 // pred_region
    _
  $region9: #{_lambda_.1} parent=0 // pred_fallthru
    _
  // Predicated region
  $region10: #{_lambda_.1} parent=0 // pred_check
    _
  $region11: #{_lambda_.1} parent=0 // pred_check_branch
    %32 = sbr.rel (0) target = $region13
  $region12: #{_lambda_.1} parent=0 // pred_region
    _
  $region13: #{_lambda_.1} parent=0 // pred_fallthru
    _
  // Predicated region
  $region14: #{_lambda_.1} parent=0 // pred_check
    _
  $region15: #{_lambda_.1} parent=0 // pred_check_branch
    %34 = sbr.rel (0) target = $region17
  $region16: #{_lambda_.1} parent=0 // pred_region
    _
  $region17: #{_lambda_.1} parent=0 // pred_fallthru
    _
  // Predicated region
  $region18: #{_lambda_.1} parent=0 // pred_check
    _
  $region19: #{_lambda_.1} parent=0 // pred_check_branch
    %36 = sbr.rel (0) target = $region21
  $region20: #{_lambda_.1} parent=0 // pred_region
    _
  $region21: #{_lambda_.1} parent=0 // pred_fallthru
    _
  // Predicated region
  $region22: #{_lambda_.1} parent=0 // pred_check
    _
  $region23: #{_lambda_.1} parent=0 // pred_check_branch
    %38 = sbr.rel (0) target = $region25
  $region24: #{_lambda_.1} parent=0 // pred_region
    _
  $region25: #{_lambda_.1} parent=0 // pred_fallthru
    _
  // Predicated region
  $region26: #{_lambda_.1} parent=0 // pred_check
    _
  $region27: #{_lambda_.1} parent=0 // pred_check_branch
    %40 = sbr.rel (0) target = $region29
  $region28: #{_lambda_.1} parent=0 // pred_region
    _
  $region29: #{_lambda_.1} parent=0 // pred_fallthru
    _
  // Predicated region
  $region30: #{_lambda_.1} parent=0 // pred_check
    _
  $region31: #{_lambda_.1} parent=0 // pred_check_branch
    %42 = sbr.rel (0) target = $region33
  $region32: #{_lambda_.1} parent=0 // pred_region
    _
  $region33: #{_lambda_.1} parent=0 // pred_fallthru
    _
  // Predicated region
  $region34: #{_lambda_.1} parent=0 // pred_check
    _
  $region35: #{_lambda_.1} parent=0 // pred_check_branch
    %44 = sbr.rel (0) target = $region37
  $region36: #{_lambda_.1} parent=0 // pred_region
    _
  $region37: #{_lambda_.1} parent=0 // pred_fallthru
    _
  // Predicated region
  $region38: #{_lambda_.1} parent=0 // pred_check
    _
  $region39: #{_lambda_.1} parent=0 // pred_check_branch
    %46 = sbr.rel (0) target = $region41
  $region40: #{_lambda_.1} parent=0 // pred_region
    _
  $region41: #{_lambda_.1} parent=0 // pred_fallthru
    _
  // Predicated region
  $region42: #{_lambda_.1} parent=0 // pred_check
    _
  $region43: #{_lambda_.1} parent=0 // pred_check_branch
    %48 = sbr.rel (0) target = $region45
  $region44: #{_lambda_.1} parent=0 // pred_region
    _
  $region45: #{_lambda_.1} parent=0 // pred_fallthru
    _
  // Predicated region
  $region46: #{_lambda_.1} parent=0 // pred_check
    _
  $region47: #{_lambda_.1} parent=0 // pred_check_branch
    %50 = sbr.rel (0) target = $region49
  $region48: #{_lambda_.1} parent=0 // pred_region
    _
  $region49: #{_lambda_.1} parent=0 // pred_fallthru
    _
  // Predicated region
  $region50: #{_lambda_.1} parent=0 // pred_check
    _
  $region51: #{_lambda_.1} parent=0 // pred_check_branch
    %52 = sbr.rel (0) target = $region53
  $region52: #{_lambda_.1} parent=0 // pred_region
    _
  $region53: #{_lambda_.1} parent=0 // pred_fallthru
    _
  // Predicated region
  $region54: #{_lambda_.1} parent=0 // pred_check
    _
  $region55: #{_lambda_.1} parent=0 // pred_check_branch
    %54 = sbr.rel (0) target = $region57
  $region56: #{_lambda_.1} parent=0 // pred_region
    _
  $region57: #{_lambda_.1} parent=0 // pred_fallthru
    _
  // Predicated region
  $region58: #{_lambda_.1} parent=0 // pred_check
    _
  $region59: #{_lambda_.1} parent=0 // pred_check_branch
    %56 = sbr.rel (0) target = $region61
  $region60: #{_lambda_.1} parent=0 // pred_region
    _
  $region61: #{_lambda_.1} parent=0 // pred_fallthru
    _
  // Predicated region
  $region62: #{_lambda_.1} parent=0 // pred_check
    _
  $region63: #{_lambda_.1} parent=0 // pred_check_branch
    %58 = sbr.rel (0) target = $region65
  $region64: #{_lambda_.1} parent=0 // pred_region
    _
  $region65: #{_lambda_.1} parent=0 // pred_fallthru
    _
  // Predicated region
  $region66: #{_lambda_.1} parent=0 // pred_check
    _
  $region67: #{_lambda_.1} parent=0 // pred_check_branch
    %60 = sbr.rel (0) target = $region69
  $region68: #{_lambda_.1} parent=0 // pred_region
    _
  $region69: #{_lambda_.1} parent=0 // pred_fallthru
    _
  // Predicated region
  $region70: #{_lambda_.1} parent=0 // pred_check
    _
  $region71: #{_lambda_.1} parent=0 // pred_check_branch
    %62 = sbr.rel (0) target = $region73
  $region72: #{_lambda_.1} parent=0 // pred_region
    _
  $region73: #{_lambda_.1} parent=0 // pred_fallthru
    _
  // Predicated region
  $region74: #{_lambda_.1} parent=0 // pred_check
    _
  $region75: #{_lambda_.1} parent=0 // pred_check_branch
    %64 = sbr.rel (0) target = $region77
  $region76: #{_lambda_.1} parent=0 // pred_region
    _
  $region77: #{_lambda_.1} parent=0 // pred_fallthru
    _
  // Predicated region
  $region78: #{_lambda_.1} parent=0 // pred_check
    _
  $region79: #{_lambda_.1} parent=0 // pred_check_branch
    %66 = sbr.rel (0) target = $region81
  $region80: #{_lambda_.1} parent=0 // pred_region
    _
  $region81: #{_lambda_.1} parent=0 // pred_fallthru
    _
  // Predicated region
  $region82: #{_lambda_.1} parent=0 // pred_check
    _
  $region83: #{_lambda_.1} parent=0 // pred_check_branch
    %68 = sbr.rel (0) target = $region85
  $region84: #{_lambda_.1} parent=0 // pred_region
    _
  $region85: #{_lambda_.1} parent=0 // pred_fallthru
    _
  // Predicated region
  $region86: #{_lambda_.1} parent=0 // pred_check
    _
  $region87: #{_lambda_.1} parent=0 // pred_check_branch
    %70 = sbr.rel (0) target = $region89
  $region88: #{_lambda_.1} parent=0 // pred_region
    _
  $region89: #{_lambda_.1} parent=0 // pred_fallthru
    _
  %v71 = vld [vmem:[%s0] sm:$0xff]
  %v72 = vld [vmem:[%s0 + $0x8] sm:$0xff]
  %v73 = vld [vmem:[%s2] sm:$0xff]
  %v74 = vld [vmem:[%s2 + $0x8] sm:$0xff]
  %v75 = vld [vmem:[%s2 + $0x10] sm:$0xff]
  %v76 = vld [vmem:[%s2 + $0x18] sm:$0xff]
  %v77 = vld [vmem:[%s2 + $0x20] sm:$0xff]
  %v78 = vld [vmem:[%s2 + $0x28] sm:$0xff]
  %v79 = vld [vmem:[%s2 + $0x30] sm:$0xff]
  %v80 = vld [vmem:[%s2 + $0x38] sm:$0xff]
  %v81 = vld [vmem:[%s2 + $0x40] sm:$0xff]
  %v82 = vld [vmem:[%s2 + $0x48] sm:$0xff]
  %v83 = vld [vmem:[%s2 + $0x50] sm:$0xff]
  %v84 = vld [vmem:[%s2 + $0x58] sm:$0xff]
  %v85 = vld [vmem:[%s2 + $0x60] sm:$0xff]
  %v86 = vld [vmem:[%s2 + $0x68] sm:$0xff]
  %v87 = vld [vmem:[%s2 + $0x70] sm:$0xff]
  %v88 = vld [vmem:[%s2 + $0x78] sm:$0xff]
  %v89 = vld [vmem:[%s3] sm:$0x1]
  %v91 = vperm.slane %v89, 0
  %93 = vmatpush.msra.mxu0 %v88
  %94 = vmatpush.msra.mxu0 %v87
  %95 = vmatpush.msra.mxu0 %v86
  %96 = vmatpush.msra.mxu0 %v85
  %97 = vmatpush.msra.mxu0 %v84
  %98 = vmatpush.msra.mxu0 %v83
  %99 = vmatpush.msra.mxu0 %v82
  %100 = vmatpush.msra.mxu0 %v81
  %101 = vmatpush.msra.mxu0 %v80
  %102 = vmatpush.msra.mxu0 %v79
  %103 = vmatpush.msra.mxu0 %v78
  %104 = vmatpush.msra.mxu0 %v77
  %105 = vmatpush.msra.mxu0 %v76
  %106 = vmatpush.msra.mxu0 %v75
  %107 = vmatpush.msra.mxu0 %v74
  %108 = vmatpush.msra.mxu0 %v73
  %109 = vmatmul.f32.gmra.mxu0 %v71
  %v110 = vpop.f32.mrf.mxu0
  %v111 = vadd.f32 %v91, %v110
  %112 = vmatmul.f32.gmra.mxu0 %v72
  %v113 = vpop.f32.mrf.mxu0
  %v114 = vadd.f32 %v91, %v113
  %115 = vdwg.mxu0
  %v116 = vld [vmem:[%s1] sm:$0x1]
  %s117 = scalar_lea.vmem %s1, 1
  %v118 = vld [vmem:[%s117] sm:$0x1]
  %v120 = vperm.slane %v118, 0
  %vm122 = vcmask 1040384
  %v123 = vsel %vm122, %v116, %v120
  %v124 = vld [vmem:[%s4] sm:$0xff]
  %v125 = vld [vmem:[%s4 + $0x8] sm:$0x3]
  %v126 = vld [vmem:[%s5] sm:$0x1]
  %v128 = vperm.slane %v126, 0
  %vm130 = vcmask 80896
  %v132 = vsel %vm130, %v123, 0
  %vm134 = vcmask 1041408
  %v136 = vsel %vm134, %v125, 0
  %138 = vmatpush.msra.mxu0 0.0
  %139 = vmatpush.msra.mxu0 0.0
  %140 = vmatpush.msra.mxu0 0.0
  %141 = vmatpush.msra.mxu0 0.0
  %142 = vmatpush.msra.mxu0 0.0
  %143 = vmatpush.msra.mxu0 0.0
  %144 = vmatpush.msra.mxu0 0.0
  %145 = vmatpush.msra.mxu0 0.0
  %146 = vmatpush.msra.mxu0 0.0
  %147 = vmatpush.msra.mxu0 0.0
  %148 = vmatpush.msra.mxu0 0.0
  %149 = vmatpush.msra.mxu0 0.0
  %150 = vmatpush.msra.mxu0 0.0
  %151 = vmatpush.msra.mxu0 0.0
  %152 = vmatpush.msra.mxu0 %v136
  %153 = vmatpush.msra.mxu0 %v124
  %154 = vmatmul.f32.gmra.mxu0 %v132
  %v155 = vpop.f32.mrf.mxu0
  %v156 = vadd.f32 %v128, %v155
  %157 = vdwg.mxu0
  %v159 = vrot.slane %v114, 7
  %v161 = vsel %vm122, %v156, %v159
  %v162 = vsel %vm122, %v159, %v156
  %v163 = vld [vmem:[%s6] sm:$0x1]
  %v164 = vld [vmem:[%s7] sm:$0x1]
  %vm165 = vcmask 261120
  %v166 = vsel %vm165, %v111, 0.0
  %167 = vadd.xlane.f32.xlu0 %v166
  %v168 = vpop.xlane.xlu0 %167
  %v169 = vsel %vm165, %v161, 0.0
  %170 = vadd.xlane.f32.xlu0 %v169
  %v171 = vpop.xlane.xlu0 %170
  %vm172 = vcmask 254976
  %v173 = vsel %vm172, %v162, 0.0
  %174 = vadd.xlane.f32.xlu0 %v173
  %v175 = vpop.xlane.xlu0 %174
  %v176 = vrcp.pop 32.0
  %v177 = vmul.f32 32.0, %v176
  %v178 = vsub.f32 1.0, %v177
  %v179 = vmul.f32 %v176, %v178
  %v180 = vadd.f32 %v176, %v179
  %vm181 = vweird.f32 %v176
  %v182 = vsel %vm181, %v176, %v180
  %v183 = vmul.f32 %v168, %v182
  %v184 = vmul.f32 %v171, %v182
  %v185 = vmul.f32 %v175, %v182
  %v186 = vsub.f32 %v111, %v183
  %v187 = vsub.f32 %v161, %v184
  %v188 = vsub.f32 %v162, %v185
  %v189 = vmul.f32 %v186, %v186
  %v190 = vmul.f32 %v187, %v187
  %v191 = vmul.f32 %v188, %v188
  %v192 = vsel %vm165, %v189, 0.0
  %193 = vadd.xlane.f32.xlu0 %v192
  %v194 = vpop.xlane.xlu0 %193
  %v195 = vsel %vm165, %v190, 0.0
  %196 = vadd.xlane.f32.xlu0 %v195
  %v197 = vpop.xlane.xlu0 %196
  %v198 = vsel %vm172, %v191, 0.0
  %199 = vadd.xlane.f32.xlu0 %v198
  %v200 = vpop.xlane.xlu0 %199
  %v201 = vmul.f32 %v194, %v182
  %v202 = vmul.f32 %v197, %v182
  %v203 = vmul.f32 %v200, %v182
  %v204 = vadd.f32 %v201, 1e-06
  %v205 = vadd.f32 %v202, 1e-06
  %v206 = vadd.f32 %v203, 1e-06
  %v207 = vrsqrt.pop %v204
  %v208 = vmul.f32 %v207, %v204
  %v209 = vmul.f32 %v208, %v207
  %v210 = vmul.f32 0.5, %v209
  %v211 = vsub.f32 1.5, %v210
  %v212 = vmul.f32 %v207, %v211
  %vm213 = vweird.f32 %v204
  %vm214 = vweird.f32 %v207
  %vm215 = vmor %vm213, %vm214
  %v216 = vsel %vm215, %v207, %v212
  %v217 = vrsqrt.pop %v205
  %v218 = vmul.f32 %v217, %v205
  %v219 = vmul.f32 %v218, %v217
  %v220 = vmul.f32 0.5, %v219
  %v221 = vsub.f32 1.5, %v220
  %v222 = vmul.f32 %v217, %v221
  %vm223 = vweird.f32 %v205
  %vm224 = vweird.f32 %v217
  %vm225 = vmor %vm223, %vm224
  %v226 = vsel %vm225, %v217, %v222
  %v227 = vrsqrt.pop %v206
  %v228 = vmul.f32 %v227, %v206
  %v229 = vmul.f32 %v228, %v227
  %v230 = vmul.f32 0.5, %v229
  %v231 = vsub.f32 1.5, %v230
  %v232 = vmul.f32 %v227, %v231
  %vm233 = vweird.f32 %v206
  %vm234 = vweird.f32 %v227
  %vm235 = vmor %vm233, %vm234
  %v236 = vsel %vm235, %v227, %v232
  %v237 = vmul.f32 %v186, %v216
  %v238 = vmul.f32 %v187, %v226
  %v239 = vmul.f32 %v188, %v236
  %v241 = vperm.slane %v163, 0
  %v243 = vmul.f32 %v237, %v241
  %v244 = vmul.f32 %v238, %v241
  %v245 = vmul.f32 %v239, %v241
  %v247 = vperm.slane %v164, 0
  %v249 = vadd.f32 %v243, %v247
  %v250 = vadd.f32 %v244, %v247
  %v251 = vadd.f32 %v245, %v247
  %v252 = vld [vmem:[%s8] sm:$0xff]
  %v253 = vld [vmem:[%s8 + $0x8] sm:$0xff]
  %v254 = vld [vmem:[%s8 + $0x10] sm:$0xff]
  %v255 = vld [vmem:[%s8 + $0x18] sm:$0xff]
  %v256 = vld [vmem:[%s9] sm:$0x1]
  %v258 = vperm.slane %v256, 0
  %v261 = vsel %vm165, %v249, 0
  %v264 = vsel %vm165, %v250, 0
  %v267 = vsel %vm165, %v251, 0
  %269 = vmatpush.msra.mxu0 0.0
  %270 = vmatpush.msra.mxu0 0.0
  %271 = vmatpush.msra.mxu0 0.0
  %272 = vmatpush.msra.mxu0 0.0
  %273 = vmatpush.msra.mxu0 0.0
  %274 = vmatpush.msra.mxu0 0.0
  %275 = vmatpush.msra.mxu0 0.0
  %276 = vmatpush.msra.mxu0 0.0
  %277 = vmatpush.msra.mxu0 0.0
  %278 = vmatpush.msra.mxu0 0.0
  %279 = vmatpush.msra.mxu0 0.0
  %280 = vmatpush.msra.mxu0 0.0
  %281 = vmatpush.msra.mxu0 %v255
  %282 = vmatpush.msra.mxu0 %v254
  %283 = vmatpush.msra.mxu0 %v253
  %284 = vmatpush.msra.mxu0 %v252
  %285 = vmatmul.f32.gmra.mxu0 %v261
  %v286 = vpop.f32.mrf.mxu0
  %v287 = vadd.f32 %v258, %v286
  %288 = vmatmul.f32.gmra.mxu0 %v264
  %v289 = vpop.f32.mrf.mxu0
  %v290 = vadd.f32 %v258, %v289
  %291 = vmatmul.f32.gmra.mxu0 %v267
  %v292 = vpop.f32.mrf.mxu0
  %v293 = vadd.f32 %v258, %v292
  %294 = vdwg.mxu0
  %297 = vrot.lane.b32.xlu0 %v287, 96
  %v298 = vpop.permute.xlu0 %297
  %299 = vrot.lane.b32.xlu0 %v290, 96
  %v300 = vpop.permute.xlu0 %299
  %vm301 = vcmask 64512
  %v302 = vsel %vm301, %v287, 0
  %v304 = vsel %vm301, %v290, 0
  %v306 = vsel %vm301, %v298, 0
  %v308 = vsel %vm301, %v300, 0
  %310 = vmatpush.xpose.msra.mxu0 0.0
  %311 = vmatpush.xpose.msra.mxu0 0.0
  %312 = vmatpush.xpose.msra.mxu0 0.0
  %313 = vmatpush.xpose.msra.mxu0 0.0
  %314 = vmatpush.xpose.msra.mxu0 0.0
  %315 = vmatpush.xpose.msra.mxu0 0.0
  %316 = vmatpush.xpose.msra.mxu0 0.0
  %317 = vmatpush.xpose.msra.mxu0 0.0
  %318 = vmatpush.xpose.msra.mxu0 0.0
  %319 = vmatpush.xpose.msra.mxu0 0.0
  %320 = vmatpush.xpose.msra.mxu0 0.0
  %321 = vmatpush.xpose.msra.mxu0 0.0
  %322 = vmatpush.xpose.msra.mxu0 0.0
  %323 = vmatpush.xpose.msra.mxu0 0.0
  %324 = vmatpush.xpose.msra.mxu0 %v308
  %325 = vmatpush.xpose.msra.mxu0 %v306
  %326 = vmatmul.f32.gmra.mxu0 %v302
  %v327 = vpop.f32.mrf.mxu0
  %v328 = vadd.f32 0.0, %v327
  %329 = vmatmul.f32.gmra.mxu0 %v304
  %v330 = vpop.f32.mrf.mxu0
  %v331 = vadd.f32 0.0, %v330
  %332 = vdwg.mxu0
  %v333 = vmul.f32 %v328, 0.35355338
  %v334 = vmul.f32 %v331, 0.35355338
  %vm335 = vcmask 72704
  %v336 = vsel %vm335, %v333, -inf
  %337 = vmax.xlane.f32.xlu0 %v336
  %v338 = vpop.xlane.xlu0 %337
  %vm339 = vcmask 65536
  %v340 = vsel %vm339, %v334, -inf
  %341 = vmax.xlane.f32.xlu0 %v340
  %v342 = vpop.xlane.xlu0 %341
  %v343 = vsub.f32 %v333, %v338
  %v344 = vsub.f32 %v334, %v342
  %v345 = vmul.f32 %v343, 1.442695
  %v346 = vpow.pop %v345
  %v347 = vmul.f32 %v344, 1.442695
  %v348 = vpow.pop %v347
  %v349 = vsel %vm335, %v346, 0.0
  %350 = vadd.xlane.f32.xlu0 %v349
  %v351 = vpop.xlane.xlu0 %350
  %v352 = vsel %vm339, %v348, 0.0
  %353 = vadd.xlane.f32.xlu0 %v352
  %v354 = vpop.xlane.xlu0 %353
  %v355 = vrcp.pop %v351
  %v356 = vrcp.pop %v354
  %v357 = vmul.f32 %v346, %v355
  %v358 = vmul.f32 %v348, %v356
  %359 = vrot.lane.b32.xlu0 %v287, 64
  %v360 = vpop.permute.xlu0 %359
  %361 = vrot.lane.b32.xlu0 %v290, 64
  %v362 = vpop.permute.xlu0 %361
  %v365 = vsel %vm335, %v357, 0
  %v368 = vsel %vm335, %v358, 0
  %v370 = vsel %vm122, %v362, 0
  %372 = vmatpush.msra.mxu0 0.0
  %373 = vmatpush.msra.mxu0 0.0
  %374 = vmatpush.msra.mxu0 0.0
  %375 = vmatpush.msra.mxu0 0.0
  %376 = vmatpush.msra.mxu0 0.0
  %377 = vmatpush.msra.mxu0 0.0
  %378 = vmatpush.msra.mxu0 0.0
  %379 = vmatpush.msra.mxu0 0.0
  %380 = vmatpush.msra.mxu0 0.0
  %381 = vmatpush.msra.mxu0 0.0
  %382 = vmatpush.msra.mxu0 0.0
  %383 = vmatpush.msra.mxu0 0.0
  %384 = vmatpush.msra.mxu0 0.0
  %385 = vmatpush.msra.mxu0 0.0
  %386 = vmatpush.msra.mxu0 %v370
  %387 = vmatpush.msra.mxu0 %v360
  %388 = vmatmul.f32.gmra.mxu0 %v365
  %v389 = vpop.f32.mrf.mxu0
  %v390 = vadd.f32 0.0, %v389
  %391 = vmatmul.f32.gmra.mxu0 %v368
  %v392 = vpop.f32.mrf.mxu0
  %v393 = vadd.f32 0.0, %v392
  %394 = vdwg.mxu0
  %395 = vrot.lane.b32.xlu0 %v287, 120
  %v396 = vpop.permute.xlu0 %395
  %397 = vrot.lane.b32.xlu0 %v290, 120
  %v398 = vpop.permute.xlu0 %397
  %399 = vrot.lane.b32.xlu0 %v287, 88
  %v400 = vpop.permute.xlu0 %399
  %401 = vrot.lane.b32.xlu0 %v290, 88
  %v402 = vpop.permute.xlu0 %401
  %v403 = vsel %vm301, %v396, 0
  %v405 = vsel %vm301, %v398, 0
  %v407 = vsel %vm301, %v400, 0
  %v409 = vsel %vm301, %v402, 0
  %411 = vmatpush.xpose.msra.mxu0 0.0
  %412 = vmatpush.xpose.msra.mxu0 0.0
  %413 = vmatpush.xpose.msra.mxu0 0.0
  %414 = vmatpush.xpose.msra.mxu0 0.0
  %415 = vmatpush.xpose.msra.mxu0 0.0
  %416 = vmatpush.xpose.msra.mxu0 0.0
  %417 = vmatpush.xpose.msra.mxu0 0.0
  %418 = vmatpush.xpose.msra.mxu0 0.0
  %419 = vmatpush.xpose.msra.mxu0 0.0
  %420 = vmatpush.xpose.msra.mxu0 0.0
  %421 = vmatpush.xpose.msra.mxu0 0.0
  %422 = vmatpush.xpose.msra.mxu0 0.0
  %423 = vmatpush.xpose.msra.mxu0 0.0
  %424 = vmatpush.xpose.msra.mxu0 0.0
  %425 = vmatpush.xpose.msra.mxu0 %v409
  %426 = vmatpush.xpose.msra.mxu0 %v407
  %427 = vmatmul.f32.gmra.mxu0 %v403
  %v428 = vpop.f32.mrf.mxu0
  %v429 = vadd.f32 0.0, %v428
  %430 = vmatmul.f32.gmra.mxu0 %v405
  %v431 = vpop.f32.mrf.mxu0
  %v432 = vadd.f32 0.0, %v431
  %433 = vdwg.mxu0
  %v434 = vmul.f32 %v429, 0.35355338
  %v435 = vmul.f32 %v432, 0.35355338
  %v436 = vsel %vm335, %v434, -inf
  %437 = vmax.xlane.f32.xlu0 %v436
  %v438 = vpop.xlane.xlu0 %437
  %v439 = vsel %vm339, %v435, -inf
  %440 = vmax.xlane.f32.xlu0 %v439
  %v441 = vpop.xlane.xlu0 %440
  %v442 = vsub.f32 %v434, %v438
  %v443 = vsub.f32 %v435, %v441
  %v444 = vmul.f32 %v442, 1.442695
  %v445 = vpow.pop %v444
  %v446 = vmul.f32 %v443, 1.442695
  %v447 = vpow.pop %v446
  %v448 = vsel %vm335, %v445, 0.0
  %449 = vadd.xlane.f32.xlu0 %v448
  %v450 = vpop.xlane.xlu0 %449
  %v451 = vsel %vm339, %v447, 0.0
  %452 = vadd.xlane.f32.xlu0 %v451
  %v453 = vpop.xlane.xlu0 %452
  %v454 = vrcp.pop %v450
  %v455 = vrcp.pop %v453
  %v456 = vmul.f32 %v445, %v454
  %v457 = vmul.f32 %v447, %v455
  %458 = vrot.lane.b32.xlu0 %v287, 56
  %v459 = vpop.permute.xlu0 %458
  %460 = vrot.lane.b32.xlu0 %v290, 56
  %v461 = vpop.permute.xlu0 %460
  %v464 = vsel %vm335, %v456, 0
  %v467 = vsel %vm335, %v457, 0
  %v469 = vsel %vm122, %v461, 0
  %471 = vmatpush.msra.mxu0 0.0
  %472 = vmatpush.msra.mxu0 0.0
  %473 = vmatpush.msra.mxu0 0.0
  %474 = vmatpush.msra.mxu0 0.0
  %475 = vmatpush.msra.mxu0 0.0
  %476 = vmatpush.msra.mxu0 0.0
  %477 = vmatpush.msra.mxu0 0.0
  %478 = vmatpush.msra.mxu0 0.0
  %479 = vmatpush.msra.mxu0 0.0
  %480 = vmatpush.msra.mxu0 0.0
  %481 = vmatpush.msra.mxu0 0.0
  %482 = vmatpush.msra.mxu0 0.0
  %483 = vmatpush.msra.mxu0 0.0
  %484 = vmatpush.msra.mxu0 0.0
  %485 = vmatpush.msra.mxu0 %v469
  %486 = vmatpush.msra.mxu0 %v459
  %487 = vmatmul.f32.gmra.mxu0 %v464
  %v488 = vpop.f32.mrf.mxu0
  %v489 = vadd.f32 0.0, %v488
  %490 = vmatmul.f32.gmra.mxu0 %v467
  %v491 = vpop.f32.mrf.mxu0
  %v492 = vadd.f32 0.0, %v491
  %493 = vdwg.mxu0
  %494 = vrot.lane.b32.xlu0 %v287, 112
  %v495 = vpop.permute.xlu0 %494
  %496 = vrot.lane.b32.xlu0 %v290, 112
  %v497 = vpop.permute.xlu0 %496
  %498 = vrot.lane.b32.xlu0 %v287, 80
  %v499 = vpop.permute.xlu0 %498
  %500 = vrot.lane.b32.xlu0 %v290, 80
  %v501 = vpop.permute.xlu0 %500
  %v502 = vsel %vm301, %v495, 0
  %v504 = vsel %vm301, %v497, 0
  %v506 = vsel %vm301, %v499, 0
  %v508 = vsel %vm301, %v501, 0
  %510 = vmatpush.xpose.msra.mxu0 0.0
  %511 = vmatpush.xpose.msra.mxu0 0.0
  %512 = vmatpush.xpose.msra.mxu0 0.0
  %513 = vmatpush.xpose.msra.mxu0 0.0
  %514 = vmatpush.xpose.msra.mxu0 0.0
  %515 = vmatpush.xpose.msra.mxu0 0.0
  %516 = vmatpush.xpose.msra.mxu0 0.0
  %517 = vmatpush.xpose.msra.mxu0 0.0
  %518 = vmatpush.xpose.msra.mxu0 0.0
  %519 = vmatpush.xpose.msra.mxu0 0.0
  %520 = vmatpush.xpose.msra.mxu0 0.0
  %521 = vmatpush.xpose.msra.mxu0 0.0
  %522 = vmatpush.xpose.msra.mxu0 0.0
  %523 = vmatpush.xpose.msra.mxu0 0.0
  %524 = vmatpush.xpose.msra.mxu0 %v508
  %525 = vmatpush.xpose.msra.mxu0 %v506
  %526 = vmatmul.f32.gmra.mxu0 %v502
  %v527 = vpop.f32.mrf.mxu0
  %v528 = vadd.f32 0.0, %v527
  %529 = vmatmul.f32.gmra.mxu0 %v504
  %v530 = vpop.f32.mrf.mxu0
  %v531 = vadd.f32 0.0, %v530
  %532 = vdwg.mxu0
  %v533 = vmul.f32 %v528, 0.35355338
  %v534 = vmul.f32 %v531, 0.35355338
  %v535 = vsel %vm335, %v533, -inf
  %536 = vmax.xlane.f32.xlu0 %v535
  %v537 = vpop.xlane.xlu0 %536
  %v538 = vsel %vm339, %v534, -inf
  %539 = vmax.xlane.f32.xlu0 %v538
  %v540 = vpop.xlane.xlu0 %539
  %v541 = vsub.f32 %v533, %v537
  %v542 = vsub.f32 %v534, %v540
  %v543 = vmul.f32 %v541, 1.442695
  %v544 = vpow.pop %v543
  %v545 = vmul.f32 %v542, 1.442695
  %v546 = vpow.pop %v545
  %v547 = vsel %vm335, %v544, 0.0
  %548 = vadd.xlane.f32.xlu0 %v547
  %v549 = vpop.xlane.xlu0 %548
  %v550 = vsel %vm339, %v546, 0.0
  %551 = vadd.xlane.f32.xlu0 %v550
  %v552 = vpop.xlane.xlu0 %551
  %v553 = vrcp.pop %v549
  %v554 = vrcp.pop %v552
  %v555 = vmul.f32 %v544, %v553
  %v556 = vmul.f32 %v546, %v554
  %557 = vrot.lane.b32.xlu0 %v287, 48
  %v558 = vpop.permute.xlu0 %557
  %559 = vrot.lane.b32.xlu0 %v290, 48
  %v560 = vpop.permute.xlu0 %559
  %v563 = vsel %vm335, %v555, 0
  %v566 = vsel %vm335, %v556, 0
  %v568 = vsel %vm122, %v560, 0
  %570 = vmatpush.msra.mxu0 0.0
  %571 = vmatpush.msra.mxu0 0.0
  %572 = vmatpush.msra.mxu0 0.0
  %573 = vmatpush.msra.mxu0 0.0
  %574 = vmatpush.msra.mxu0 0.0
  %575 = vmatpush.msra.mxu0 0.0
  %576 = vmatpush.msra.mxu0 0.0
  %577 = vmatpush.msra.mxu0 0.0
  %578 = vmatpush.msra.mxu0 0.0
  %579 = vmatpush.msra.mxu0 0.0
  %580 = vmatpush.msra.mxu0 0.0
  %581 = vmatpush.msra.mxu0 0.0
  %582 = vmatpush.msra.mxu0 0.0
  %583 = vmatpush.msra.mxu0 0.0
  %584 = vmatpush.msra.mxu0 %v568
  %585 = vmatpush.msra.mxu0 %v558
  %586 = vmatmul.f32.gmra.mxu0 %v563
  %v587 = vpop.f32.mrf.mxu0
  %v588 = vadd.f32 0.0, %v587
  %589 = vmatmul.f32.gmra.mxu0 %v566
  %v590 = vpop.f32.mrf.mxu0
  %v591 = vadd.f32 0.0, %v590
  %592 = vdwg.mxu0
  %593 = vrot.lane.b32.xlu0 %v287, 104
  %v594 = vpop.permute.xlu0 %593
  %595 = vrot.lane.b32.xlu0 %v290, 104
  %v596 = vpop.permute.xlu0 %595
  %597 = vrot.lane.b32.xlu0 %v287, 72
  %v598 = vpop.permute.xlu0 %597
  %599 = vrot.lane.b32.xlu0 %v290, 72
  %v600 = vpop.permute.xlu0 %599
  %v601 = vsel %vm301, %v594, 0
  %v603 = vsel %vm301, %v596, 0
  %v605 = vsel %vm301, %v598, 0
  %v607 = vsel %vm301, %v600, 0
  %609 = vmatpush.xpose.msra.mxu0 0.0
  %610 = vmatpush.xpose.msra.mxu0 0.0
  %611 = vmatpush.xpose.msra.mxu0 0.0
  %612 = vmatpush.xpose.msra.mxu0 0.0
  %613 = vmatpush.xpose.msra.mxu0 0.0
  %614 = vmatpush.xpose.msra.mxu0 0.0
  %615 = vmatpush.xpose.msra.mxu0 0.0
  %616 = vmatpush.xpose.msra.mxu0 0.0
  %617 = vmatpush.xpose.msra.mxu0 0.0
  %618 = vmatpush.xpose.msra.mxu0 0.0
  %619 = vmatpush.xpose.msra.mxu0 0.0
  %620 = vmatpush.xpose.msra.mxu0 0.0
  %621 = vmatpush.xpose.msra.mxu0 0.0
  %622 = vmatpush.xpose.msra.mxu0 0.0
  %623 = vmatpush.xpose.msra.mxu0 %v607
  %624 = vmatpush.xpose.msra.mxu0 %v605
  %625 = vmatmul.f32.gmra.mxu0 %v601
  %v626 = vpop.f32.mrf.mxu0
  %v627 = vadd.f32 0.0, %v626
  %628 = vmatmul.f32.gmra.mxu0 %v603
  %v629 = vpop.f32.mrf.mxu0
  %v630 = vadd.f32 0.0, %v629
  %631 = vdwg.mxu0
  %v632 = vmul.f32 %v627, 0.35355338
  %v633 = vmul.f32 %v630, 0.35355338
  %v634 = vsel %vm335, %v632, -inf
  %635 = vmax.xlane.f32.xlu0 %v634
  %v636 = vpop.xlane.xlu0 %635
  %v637 = vsel %vm339, %v633, -inf
  %638 = vmax.xlane.f32.xlu0 %v637
  %v639 = vpop.xlane.xlu0 %638
  %v640 = vsub.f32 %v632, %v636
  %v641 = vsub.f32 %v633, %v639
  %v642 = vmul.f32 %v640, 1.442695
  %v643 = vpow.pop %v642
  %v644 = vmul.f32 %v641, 1.442695
  %v645 = vpow.pop %v644
  %v646 = vsel %vm335, %v643, 0.0
  %647 = vadd.xlane.f32.xlu0 %v646
  %v648 = vpop.xlane.xlu0 %647
  %v649 = vsel %vm339, %v645, 0.0
  %650 = vadd.xlane.f32.xlu0 %v649
  %v651 = vpop.xlane.xlu0 %650
  %v652 = vrcp.pop %v648
  %v653 = vrcp.pop %v651
  %v654 = vmul.f32 %v643, %v652
  %v655 = vmul.f32 %v645, %v653
  %656 = vrot.lane.b32.xlu0 %v287, 40
  %v657 = vpop.permute.xlu0 %656
  %658 = vrot.lane.b32.xlu0 %v290, 40
  %v659 = vpop.permute.xlu0 %658
  %v662 = vsel %vm335, %v654, 0
  %v665 = vsel %vm335, %v655, 0
  %v667 = vsel %vm122, %v659, 0
  %669 = vmatpush.msra.mxu0 0.0
  %670 = vmatpush.msra.mxu0 0.0
  %671 = vmatpush.msra.mxu0 0.0
  %672 = vmatpush.msra.mxu0 0.0
  %673 = vmatpush.msra.mxu0 0.0
  %674 = vmatpush.msra.mxu0 0.0
  %675 = vmatpush.msra.mxu0 0.0
  %676 = vmatpush.msra.mxu0 0.0
  %677 = vmatpush.msra.mxu0 0.0
  %678 = vmatpush.msra.mxu0 0.0
  %679 = vmatpush.msra.mxu0 0.0
  %680 = vmatpush.msra.mxu0 0.0
  %681 = vmatpush.msra.mxu0 0.0
  %682 = vmatpush.msra.mxu0 0.0
  %683 = vmatpush.msra.mxu0 %v667
  %684 = vmatpush.msra.mxu0 %v657
  %685 = vmatmul.f32.gmra.mxu0 %v662
  %v686 = vpop.f32.mrf.mxu0
  %v687 = vadd.f32 0.0, %v686
  %688 = vmatmul.f32.gmra.mxu0 %v665
  %v689 = vpop.f32.mrf.mxu0
  %v690 = vadd.f32 0.0, %v689
  %691 = vdwg.mxu0
  %694 = vrot.lane.b32.xlu0 %v489, 8
  %v695 = vpop.permute.xlu0 %694
  %696 = vrot.lane.b32.xlu0 %v492, 8
  %v697 = vpop.permute.xlu0 %696
  %702 = vrot.lane.b32.xlu0 %v588, 16
  %v703 = vpop.permute.xlu0 %702
  %704 = vrot.lane.b32.xlu0 %v591, 16
  %v705 = vpop.permute.xlu0 %704
  %710 = vrot.lane.b32.xlu0 %v687, 24
  %v711 = vpop.permute.xlu0 %710
  %712 = vrot.lane.b32.xlu0 %v690, 24
  %v713 = vpop.permute.xlu0 %712
  %v716 = vsel %vm301, %v390, %v695
  %v717 = vsel %vm301, %v393, %v697
  %vm718 = vcmask 130048
  %v719 = vsel %vm718, %v716, %v703
  %v720 = vsel %vm718, %v717, %v705
  %vm721 = vcmask 195584
  %v722 = vsel %vm721, %v719, %v711
  %v723 = vsel %vm721, %v720, %v713
  %vm725 = vcmask 1046528
  %v726 = vrot.slane %v290, 1
  %v727 = vrot.slane %v293, 1
  %v728 = vsel %vm725, %v726, %v727
  %729 = vrot.lane.b32.xlu0 %v728, 96
  %v730 = vpop.permute.xlu0 %729
  %731 = vrot.lane.b32.xlu0 %v727, 96
  %v732 = vpop.permute.xlu0 %731
  %v733 = vsel %vm301, %v728, 0
  %v735 = vsel %vm301, %v727, 0
  %v737 = vsel %vm301, %v730, 0
  %v739 = vsel %vm301, %v732, 0
  %741 = vmatpush.xpose.msra.mxu0 0.0
  %742 = vmatpush.xpose.msra.mxu0 0.0
  %743 = vmatpush.xpose.msra.mxu0 0.0
  %744 = vmatpush.xpose.msra.mxu0 0.0
  %745 = vmatpush.xpose.msra.mxu0 0.0
  %746 = vmatpush.xpose.msra.mxu0 0.0
  %747 = vmatpush.xpose.msra.mxu0 0.0
  %748 = vmatpush.xpose.msra.mxu0 0.0
  %749 = vmatpush.xpose.msra.mxu0 0.0
  %750 = vmatpush.xpose.msra.mxu0 0.0
  %751 = vmatpush.xpose.msra.mxu0 0.0
  %752 = vmatpush.xpose.msra.mxu0 0.0
  %753 = vmatpush.xpose.msra.mxu0 0.0
  %754 = vmatpush.xpose.msra.mxu0 0.0
  %755 = vmatpush.xpose.msra.mxu0 %v739
  %756 = vmatpush.xpose.msra.mxu0 %v737
  %757 = vmatmul.f32.gmra.mxu0 %v733
  %v758 = vpop.f32.mrf.mxu0
  %v759 = vadd.f32 0.0, %v758
  %760 = vmatmul.f32.gmra.mxu0 %v735
  %v761 = vpop.f32.mrf.mxu0
  %v762 = vadd.f32 0.0, %v761
  %763 = vdwg.mxu0
  %v764 = vmul.f32 %v759, 0.35355338
  %v765 = vmul.f32 %v762, 0.35355338
  %v766 = vsel %vm335, %v764, -inf
  %767 = vmax.xlane.f32.xlu0 %v766
  %v768 = vpop.xlane.xlu0 %767
  %v769 = vsel %vm339, %v765, -inf
  %770 = vmax.xlane.f32.xlu0 %v769
  %v771 = vpop.xlane.xlu0 %770
  %v772 = vsub.f32 %v764, %v768
  %v773 = vsub.f32 %v765, %v771
  %v774 = vmul.f32 %v772, 1.442695
  %v775 = vpow.pop %v774
  %v776 = vmul.f32 %v773, 1.442695
  %v777 = vpow.pop %v776
  %v778 = vsel %vm335, %v775, 0.0
  %779 = vadd.xlane.f32.xlu0 %v778
  %v780 = vpop.xlane.xlu0 %779
  %v781 = vsel %vm339, %v777, 0.0
  %782 = vadd.xlane.f32.xlu0 %v781
  %v783 = vpop.xlane.xlu0 %782
  %v784 = vrcp.pop %v780
  %v785 = vrcp.pop %v783
  %v786 = vmul.f32 %v775, %v784
  %v787 = vmul.f32 %v777, %v785
  %788 = vrot.lane.b32.xlu0 %v728, 64
  %v789 = vpop.permute.xlu0 %788
  %790 = vrot.lane.b32.xlu0 %v727, 64
  %v791 = vpop.permute.xlu0 %790
  %v794 = vsel %vm335, %v786, 0
  %v797 = vsel %vm335, %v787, 0
  %v799 = vsel %vm122, %v791, 0
  %801 = vmatpush.msra.mxu0 0.0
  %802 = vmatpush.msra.mxu0 0.0
  %803 = vmatpush.msra.mxu0 0.0
  %804 = vmatpush.msra.mxu0 0.0
  %805 = vmatpush.msra.mxu0 0.0
  %806 = vmatpush.msra.mxu0 0.0
  %807 = vmatpush.msra.mxu0 0.0
  %808 = vmatpush.msra.mxu0 0.0
  %809 = vmatpush.msra.mxu0 0.0
  %810 = vmatpush.msra.mxu0 0.0
  %811 = vmatpush.msra.mxu0 0.0
  %812 = vmatpush.msra.mxu0 0.0
  %813 = vmatpush.msra.mxu0 0.0
  %814 = vmatpush.msra.mxu0 0.0
  %815 = vmatpush.msra.mxu0 %v799
  %816 = vmatpush.msra.mxu0 %v789
  %817 = vmatmul.f32.gmra.mxu0 %v794
  %v818 = vpop.f32.mrf.mxu0
  %v819 = vadd.f32 0.0, %v818
  %820 = vmatmul.f32.gmra.mxu0 %v797
  %v821 = vpop.f32.mrf.mxu0
  %v822 = vadd.f32 0.0, %v821
  %823 = vdwg.mxu0
  %824 = vrot.lane.b32.xlu0 %v728, 120
  %v825 = vpop.permute.xlu0 %824
  %826 = vrot.lane.b32.xlu0 %v727, 120
  %v827 = vpop.permute.xlu0 %826
  %828 = vrot.lane.b32.xlu0 %v728, 88
  %v829 = vpop.permute.xlu0 %828
  %830 = vrot.lane.b32.xlu0 %v727, 88
  %v831 = vpop.permute.xlu0 %830
  %v832 = vsel %vm301, %v825, 0
  %v834 = vsel %vm301, %v827, 0
  %v836 = vsel %vm301, %v829, 0
  %v838 = vsel %vm301, %v831, 0
  %840 = vmatpush.xpose.msra.mxu0 0.0
  %841 = vmatpush.xpose.msra.mxu0 0.0
  %842 = vmatpush.xpose.msra.mxu0 0.0
  %843 = vmatpush.xpose.msra.mxu0 0.0
  %844 = vmatpush.xpose.msra.mxu0 0.0
  %845 = vmatpush.xpose.msra.mxu0 0.0
  %846 = vmatpush.xpose.msra.mxu0 0.0
  %847 = vmatpush.xpose.msra.mxu0 0.0
  %848 = vmatpush.xpose.msra.mxu0 0.0
  %849 = vmatpush.xpose.msra.mxu0 0.0
  %850 = vmatpush.xpose.msra.mxu0 0.0
  %851 = vmatpush.xpose.msra.mxu0 0.0
  %852 = vmatpush.xpose.msra.mxu0 0.0
  %853 = vmatpush.xpose.msra.mxu0 0.0
  %854 = vmatpush.xpose.msra.mxu0 %v838
  %855 = vmatpush.xpose.msra.mxu0 %v836
  %856 = vmatmul.f32.gmra.mxu0 %v832
  %v857 = vpop.f32.mrf.mxu0
  %v858 = vadd.f32 0.0, %v857
  %859 = vmatmul.f32.gmra.mxu0 %v834
  %v860 = vpop.f32.mrf.mxu0
  %v861 = vadd.f32 0.0, %v860
  %862 = vdwg.mxu0
  %v863 = vmul.f32 %v858, 0.35355338
  %v864 = vmul.f32 %v861, 0.35355338
  %v865 = vsel %vm335, %v863, -inf
  %866 = vmax.xlane.f32.xlu0 %v865
  %v867 = vpop.xlane.xlu0 %866
  %v868 = vsel %vm339, %v864, -inf
  %869 = vmax.xlane.f32.xlu0 %v868
  %v870 = vpop.xlane.xlu0 %869
  %v871 = vsub.f32 %v863, %v867
  %v872 = vsub.f32 %v864, %v870
  %v873 = vmul.f32 %v871, 1.442695
  %v874 = vpow.pop %v873
  %v875 = vmul.f32 %v872, 1.442695
  %v876 = vpow.pop %v875
  %v877 = vsel %vm335, %v874, 0.0
  %878 = vadd.xlane.f32.xlu0 %v877
  %v879 = vpop.xlane.xlu0 %878
  %v880 = vsel %vm339, %v876, 0.0
  %881 = vadd.xlane.f32.xlu0 %v880
  %v882 = vpop.xlane.xlu0 %881
  %v883 = vrcp.pop %v879
  %v884 = vrcp.pop %v882
  %v885 = vmul.f32 %v874, %v883
  %v886 = vmul.f32 %v876, %v884
  %887 = vrot.lane.b32.xlu0 %v728, 56
  %v888 = vpop.permute.xlu0 %887
  %889 = vrot.lane.b32.xlu0 %v727, 56
  %v890 = vpop.permute.xlu0 %889
  %v893 = vsel %vm335, %v885, 0
  %v896 = vsel %vm335, %v886, 0
  %v898 = vsel %vm122, %v890, 0
  %900 = vmatpush.msra.mxu0 0.0
  %901 = vmatpush.msra.mxu0 0.0
  %902 = vmatpush.msra.mxu0 0.0
  %903 = vmatpush.msra.mxu0 0.0
  %904 = vmatpush.msra.mxu0 0.0
  %905 = vmatpush.msra.mxu0 0.0
  %906 = vmatpush.msra.mxu0 0.0
  %907 = vmatpush.msra.mxu0 0.0
  %908 = vmatpush.msra.mxu0 0.0
  %909 = vmatpush.msra.mxu0 0.0
  %910 = vmatpush.msra.mxu0 0.0
  %911 = vmatpush.msra.mxu0 0.0
  %912 = vmatpush.msra.mxu0 0.0
  %913 = vmatpush.msra.mxu0 0.0
  %914 = vmatpush.msra.mxu0 %v898
  %915 = vmatpush.msra.mxu0 %v888
  %916 = vmatmul.f32.gmra.mxu0 %v893
  %v917 = vpop.f32.mrf.mxu0
  %v918 = vadd.f32 0.0, %v917
  %919 = vmatmul.f32.gmra.mxu0 %v896
  %v920 = vpop.f32.mrf.mxu0
  %v921 = vadd.f32 0.0, %v920
  %922 = vdwg.mxu0
  %923 = vrot.lane.b32.xlu0 %v728, 112
  %v924 = vpop.permute.xlu0 %923
  %925 = vrot.lane.b32.xlu0 %v727, 112
  %v926 = vpop.permute.xlu0 %925
  %927 = vrot.lane.b32.xlu0 %v728, 80
  %v928 = vpop.permute.xlu0 %927
  %929 = vrot.lane.b32.xlu0 %v727, 80
  %v930 = vpop.permute.xlu0 %929
  %v931 = vsel %vm301, %v924, 0
  %v933 = vsel %vm301, %v926, 0
  %v935 = vsel %vm301, %v928, 0
  %v937 = vsel %vm301, %v930, 0
  %939 = vmatpush.xpose.msra.mxu0 0.0
  %940 = vmatpush.xpose.msra.mxu0 0.0
  %941 = vmatpush.xpose.msra.mxu0 0.0
  %942 = vmatpush.xpose.msra.mxu0 0.0
  %943 = vmatpush.xpose.msra.mxu0 0.0
  %944 = vmatpush.xpose.msra.mxu0 0.0
  %945 = vmatpush.xpose.msra.mxu0 0.0
  %946 = vmatpush.xpose.msra.mxu0 0.0
  %947 = vmatpush.xpose.msra.mxu0 0.0
  %948 = vmatpush.xpose.msra.mxu0 0.0
  %949 = vmatpush.xpose.msra.mxu0 0.0
  %950 = vmatpush.xpose.msra.mxu0 0.0
  %951 = vmatpush.xpose.msra.mxu0 0.0
  %952 = vmatpush.xpose.msra.mxu0 0.0
  %953 = vmatpush.xpose.msra.mxu0 %v937
  %954 = vmatpush.xpose.msra.mxu0 %v935
  %955 = vmatmul.f32.gmra.mxu0 %v931
  %v956 = vpop.f32.mrf.mxu0
  %v957 = vadd.f32 0.0, %v956
  %958 = vmatmul.f32.gmra.mxu0 %v933
  %v959 = vpop.f32.mrf.mxu0
  %v960 = vadd.f32 0.0, %v959
  %961 = vdwg.mxu0
  %v962 = vmul.f32 %v957, 0.35355338
  %v963 = vmul.f32 %v960, 0.35355338
  %v964 = vsel %vm335, %v962, -inf
  %965 = vmax.xlane.f32.xlu0 %v964
  %v966 = vpop.xlane.xlu0 %965
  %v967 = vsel %vm339, %v963, -inf
  %968 = vmax.xlane.f32.xlu0 %v967
  %v969 = vpop.xlane.xlu0 %968
  %v970 = vsub.f32 %v962, %v966
  %v971 = vsub.f32 %v963, %v969
  %v972 = vmul.f32 %v970, 1.442695
  %v973 = vpow.pop %v972
  %v974 = vmul.f32 %v971, 1.442695
  %v975 = vpow.pop %v974
  %v976 = vsel %vm335, %v973, 0.0
  %977 = vadd.xlane.f32.xlu0 %v976
  %v978 = vpop.xlane.xlu0 %977
  %v979 = vsel %vm339, %v975, 0.0
  %980 = vadd.xlane.f32.xlu0 %v979
  %v981 = vpop.xlane.xlu0 %980
  %v982 = vrcp.pop %v978
  %v983 = vrcp.pop %v981
  %v984 = vmul.f32 %v973, %v982
  %v985 = vmul.f32 %v975, %v983
  %986 = vrot.lane.b32.xlu0 %v728, 48
  %v987 = vpop.permute.xlu0 %986
  %988 = vrot.lane.b32.xlu0 %v727, 48
  %v989 = vpop.permute.xlu0 %988
  %v992 = vsel %vm335, %v984, 0
  %v995 = vsel %vm335, %v985, 0
  %v997 = vsel %vm122, %v989, 0
  %999 = vmatpush.msra.mxu0 0.0
  %1000 = vmatpush.msra.mxu0 0.0
  %1001 = vmatpush.msra.mxu0 0.0
  %1002 = vmatpush.msra.mxu0 0.0
  %1003 = vmatpush.msra.mxu0 0.0
  %1004 = vmatpush.msra.mxu0 0.0
  %1005 = vmatpush.msra.mxu0 0.0
  %1006 = vmatpush.msra.mxu0 0.0
  %1007 = vmatpush.msra.mxu0 0.0
  %1008 = vmatpush.msra.mxu0 0.0
  %1009 = vmatpush.msra.mxu0 0.0
  %1010 = vmatpush.msra.mxu0 0.0
  %1011 = vmatpush.msra.mxu0 0.0
  %1012 = vmatpush.msra.mxu0 0.0
  %1013 = vmatpush.msra.mxu0 %v997
  %1014 = vmatpush.msra.mxu0 %v987
  %1015 = vmatmul.f32.gmra.mxu0 %v992
  %v1016 = vpop.f32.mrf.mxu0
  %v1017 = vadd.f32 0.0, %v1016
  %1018 = vmatmul.f32.gmra.mxu0 %v995
  %v1019 = vpop.f32.mrf.mxu0
  %v1020 = vadd.f32 0.0, %v1019
  %1021 = vdwg.mxu0
  %1022 = vrot.lane.b32.xlu0 %v728, 104
  %v1023 = vpop.permute.xlu0 %1022
  %1024 = vrot.lane.b32.xlu0 %v727, 104
  %v1025 = vpop.permute.xlu0 %1024
  %1026 = vrot.lane.b32.xlu0 %v728, 72
  %v1027 = vpop.permute.xlu0 %1026
  %1028 = vrot.lane.b32.xlu0 %v727, 72
  %v1029 = vpop.permute.xlu0 %1028
  %v1030 = vsel %vm301, %v1023, 0
  %v1032 = vsel %vm301, %v1025, 0
  %v1034 = vsel %vm301, %v1027, 0
  %v1036 = vsel %vm301, %v1029, 0
  %1038 = vmatpush.xpose.msra.mxu0 0.0
  %1039 = vmatpush.xpose.msra.mxu0 0.0
  %1040 = vmatpush.xpose.msra.mxu0 0.0
  %1041 = vmatpush.xpose.msra.mxu0 0.0
  %1042 = vmatpush.xpose.msra.mxu0 0.0
  %1043 = vmatpush.xpose.msra.mxu0 0.0
  %1044 = vmatpush.xpose.msra.mxu0 0.0
  %1045 = vmatpush.xpose.msra.mxu0 0.0
  %1046 = vmatpush.xpose.msra.mxu0 0.0
  %1047 = vmatpush.xpose.msra.mxu0 0.0
  %1048 = vmatpush.xpose.msra.mxu0 0.0
  %1049 = vmatpush.xpose.msra.mxu0 0.0
  %1050 = vmatpush.xpose.msra.mxu0 0.0
  %1051 = vmatpush.xpose.msra.mxu0 0.0
  %1052 = vmatpush.xpose.msra.mxu0 %v1036
  %1053 = vmatpush.xpose.msra.mxu0 %v1034
  %1054 = vmatmul.f32.gmra.mxu0 %v1030
  %v1055 = vpop.f32.mrf.mxu0
  %v1056 = vadd.f32 0.0, %v1055
  %1057 = vmatmul.f32.gmra.mxu0 %v1032
  %v1058 = vpop.f32.mrf.mxu0
  %v1059 = vadd.f32 0.0, %v1058
  %1060 = vdwg.mxu0
  %v1061 = vmul.f32 %v1056, 0.35355338
  %v1062 = vmul.f32 %v1059, 0.35355338
  %v1063 = vsel %vm335, %v1061, -inf
  %1064 = vmax.xlane.f32.xlu0 %v1063
  %v1065 = vpop.xlane.xlu0 %1064
  %v1066 = vsel %vm339, %v1062, -inf
  %1067 = vmax.xlane.f32.xlu0 %v1066
  %v1068 = vpop.xlane.xlu0 %1067
  %v1069 = vsub.f32 %v1061, %v1065
  %v1070 = vsub.f32 %v1062, %v1068
  %v1071 = vmul.f32 %v1069, 1.442695
  %v1072 = vpow.pop %v1071
  %v1073 = vmul.f32 %v1070, 1.442695
  %v1074 = vpow.pop %v1073
  %v1075 = vsel %vm335, %v1072, 0.0
  %1076 = vadd.xlane.f32.xlu0 %v1075
  %v1077 = vpop.xlane.xlu0 %1076
  %v1078 = vsel %vm339, %v1074, 0.0
  %1079 = vadd.xlane.f32.xlu0 %v1078
  %v1080 = vpop.xlane.xlu0 %1079
  %v1081 = vrcp.pop %v1077
  %v1082 = vrcp.pop %v1080
  %v1083 = vmul.f32 %v1072, %v1081
  %v1084 = vmul.f32 %v1074, %v1082
  %1085 = vrot.lane.b32.xlu0 %v728, 40
  %v1086 = vpop.permute.xlu0 %1085
  %1087 = vrot.lane.b32.xlu0 %v727, 40
  %v1088 = vpop.permute.xlu0 %1087
  %v1091 = vsel %vm335, %v1083, 0
  %v1094 = vsel %vm335, %v1084, 0
  %v1096 = vsel %vm122, %v1088, 0
  %1098 = vmatpush.msra.mxu0 0.0
  %1099 = vmatpush.msra.mxu0 0.0
  %1100 = vmatpush.msra.mxu0 0.0
  %1101 = vmatpush.msra.mxu0 0.0
  %1102 = vmatpush.msra.mxu0 0.0
  %1103 = vmatpush.msra.mxu0 0.0
  %1104 = vmatpush.msra.mxu0 0.0
  %1105 = vmatpush.msra.mxu0 0.0
  %1106 = vmatpush.msra.mxu0 0.0
  %1107 = vmatpush.msra.mxu0 0.0
  %1108 = vmatpush.msra.mxu0 0.0
  %1109 = vmatpush.msra.mxu0 0.0
  %1110 = vmatpush.msra.mxu0 0.0
  %1111 = vmatpush.msra.mxu0 0.0
  %1112 = vmatpush.msra.mxu0 %v1096
  %1113 = vmatpush.msra.mxu0 %v1086
  %1114 = vmatmul.f32.gmra.mxu0 %v1091
  %v1115 = vpop.f32.mrf.mxu0
  %v1116 = vadd.f32 0.0, %v1115
  %1117 = vmatmul.f32.gmra.mxu0 %v1094
  %v1118 = vpop.f32.mrf.mxu0
  %v1119 = vadd.f32 0.0, %v1118
  %1120 = vdwg.mxu0
  %1123 = vrot.lane.b32.xlu0 %v918, 8
  %v1124 = vpop.permute.xlu0 %1123
  %1125 = vrot.lane.b32.xlu0 %v921, 8
  %v1126 = vpop.permute.xlu0 %1125
  %1131 = vrot.lane.b32.xlu0 %v1017, 16
  %v1132 = vpop.permute.xlu0 %1131
  %1133 = vrot.lane.b32.xlu0 %v1020, 16
  %v1134 = vpop.permute.xlu0 %1133
  %1139 = vrot.lane.b32.xlu0 %v1116, 24
  %v1140 = vpop.permute.xlu0 %1139
  %1141 = vrot.lane.b32.xlu0 %v1119, 24
  %v1142 = vpop.permute.xlu0 %1141
  %v1145 = vsel %vm301, %v819, %v1124
  %v1146 = vsel %vm301, %v822, %v1126
  %v1147 = vsel %vm718, %v1145, %v1132
  %v1148 = vsel %vm718, %v1146, %v1134
  %v1149 = vsel %vm721, %v1147, %v1140
  %v1150 = vsel %vm721, %v1148, %v1142
  %v1153 = vrot.slane %v1149, 7
  %v1154 = vrot.slane %v1150, 7
  %v1155 = vsel %vm122, %v1153, %v1154
  %v1157 = vsel %vm122, %v723, %v1153
  %v1158 = vld [vmem:[%s10] sm:$0xff]
  %v1159 = vld [vmem:[%s10 + $0x8] sm:$0xff]
  %v1160 = vld [vmem:[%s10 + $0x10] sm:$0xff]
  %v1161 = vld [vmem:[%s10 + $0x18] sm:$0xff]
  %v1163 = vsel %vm165, %v722, 0
  %v1166 = vsel %vm165, %v1157, 0
  %v1168 = vsel %vm165, %v1155, 0
  %1170 = vmatpush.msra.mxu0 0.0
  %1171 = vmatpush.msra.mxu0 0.0
  %1172 = vmatpush.msra.mxu0 0.0
  %1173 = vmatpush.msra.mxu0 0.0
  %1174 = vmatpush.msra.mxu0 0.0
  %1175 = vmatpush.msra.mxu0 0.0
  %1176 = vmatpush.msra.mxu0 0.0
  %1177 = vmatpush.msra.mxu0 0.0
  %1178 = vmatpush.msra.mxu0 0.0
  %1179 = vmatpush.msra.mxu0 0.0
  %1180 = vmatpush.msra.mxu0 0.0
  %1181 = vmatpush.msra.mxu0 0.0
  %1182 = vmatpush.msra.mxu0 %v1161
  %1183 = vmatpush.msra.mxu0 %v1160
  %1184 = vmatpush.msra.mxu0 %v1159
  %1185 = vmatpush.msra.mxu0 %v1158
  %1186 = vmatmul.f32.gmra.mxu0 %v1163
  %v1187 = vpop.f32.mrf.mxu0
  %v1188 = vadd.f32 0.0, %v1187
  %1189 = vmatmul.f32.gmra.mxu0 %v1166
  %v1190 = vpop.f32.mrf.mxu0
  %v1191 = vadd.f32 0.0, %v1190
  %1192 = vmatmul.f32.gmra.mxu0 %v1168
  %v1193 = vpop.f32.mrf.mxu0
  %v1194 = vadd.f32 0.0, %v1193
  %1195 = vdwg.mxu0
  %v1196 = vadd.f32 %v111, %v1188
  %v1197 = vadd.f32 %v161, %v1191
  %v1198 = vadd.f32 %v162, %v1194
  %v1199 = vld [vmem:[%s11] sm:$0x1]
  %v1201 = vperm.slane %v1199, 0
  %v1203 = vadd.f32 %v1196, %v1201
  %v1204 = vadd.f32 %v1197, %v1201
  %v1205 = vadd.f32 %v1198, %v1201
  %v1206 = vld [vmem:[%s12] sm:$0x1]
  %v1207 = vld [vmem:[%s13] sm:$0x1]
  %v1208 = vsel %vm165, %v1203, 0.0
  %1209 = vadd.xlane.f32.xlu0 %v1208
  %v1210 = vpop.xlane.xlu0 %1209
  %v1211 = vsel %vm165, %v1204, 0.0
  %1212 = vadd.xlane.f32.xlu0 %v1211
  %v1213 = vpop.xlane.xlu0 %1212
  %v1214 = vsel %vm172, %v1205, 0.0
  %1215 = vadd.xlane.f32.xlu0 %v1214
  %v1216 = vpop.xlane.xlu0 %1215
  %v1217 = vmul.f32 %v1210, %v182
  %v1218 = vmul.f32 %v1213, %v182
  %v1219 = vmul.f32 %v1216, %v182
  %v1220 = vsub.f32 %v1203, %v1217
  %v1221 = vsub.f32 %v1204, %v1218
  %v1222 = vsub.f32 %v1205, %v1219
  %v1223 = vmul.f32 %v1220, %v1220
  %v1224 = vmul.f32 %v1221, %v1221
  %v1225 = vmul.f32 %v1222, %v1222
  %v1226 = vsel %vm165, %v1223, 0.0
  %1227 = vadd.xlane.f32.xlu0 %v1226
  %v1228 = vpop.xlane.xlu0 %1227
  %v1229 = vsel %vm165, %v1224, 0.0
  %1230 = vadd.xlane.f32.xlu0 %v1229
  %v1231 = vpop.xlane.xlu0 %1230
  %v1232 = vsel %vm172, %v1225, 0.0
  %1233 = vadd.xlane.f32.xlu0 %v1232
  %v1234 = vpop.xlane.xlu0 %1233
  %v1235 = vmul.f32 %v1228, %v182
  %v1236 = vmul.f32 %v1231, %v182
  %v1237 = vmul.f32 %v1234, %v182
  %v1238 = vadd.f32 %v1235, 1e-06
  %v1239 = vadd.f32 %v1236, 1e-06
  %v1240 = vadd.f32 %v1237, 1e-06
  %v1241 = vrsqrt.pop %v1238
  %v1242 = vmul.f32 %v1241, %v1238
  %v1243 = vmul.f32 %v1242, %v1241
  %v1244 = vmul.f32 0.5, %v1243
  %v1245 = vsub.f32 1.5, %v1244
  %v1246 = vmul.f32 %v1241, %v1245
  %vm1247 = vweird.f32 %v1238
  %vm1248 = vweird.f32 %v1241
  %vm1249 = vmor %vm1247, %vm1248
  %v1250 = vsel %vm1249, %v1241, %v1246
  %v1251 = vrsqrt.pop %v1239
  %v1252 = vmul.f32 %v1251, %v1239
  %v1253 = vmul.f32 %v1252, %v1251
  %v1254 = vmul.f32 0.5, %v1253
  %v1255 = vsub.f32 1.5, %v1254
  %v1256 = vmul.f32 %v1251, %v1255
  %vm1257 = vweird.f32 %v1239
  %vm1258 = vweird.f32 %v1251
  %vm1259 = vmor %vm1257, %vm1258
  %v1260 = vsel %vm1259, %v1251, %v1256
  %v1261 = vrsqrt.pop %v1240
  %v1262 = vmul.f32 %v1261, %v1240
  %v1263 = vmul.f32 %v1262, %v1261
  %v1264 = vmul.f32 0.5, %v1263
  %v1265 = vsub.f32 1.5, %v1264
  %v1266 = vmul.f32 %v1261, %v1265
  %vm1267 = vweird.f32 %v1240
  %vm1268 = vweird.f32 %v1261
  %vm1269 = vmor %vm1267, %vm1268
  %v1270 = vsel %vm1269, %v1261, %v1266
  %v1271 = vmul.f32 %v1220, %v1250
  %v1272 = vmul.f32 %v1221, %v1260
  %v1273 = vmul.f32 %v1222, %v1270
  %v1275 = vperm.slane %v1206, 0
  %v1277 = vmul.f32 %v1271, %v1275
  %v1278 = vmul.f32 %v1272, %v1275
  %v1279 = vmul.f32 %v1273, %v1275
  %v1281 = vperm.slane %v1207, 0
  %v1283 = vadd.f32 %v1277, %v1281
  %v1284 = vadd.f32 %v1278, %v1281
  %v1285 = vadd.f32 %v1279, %v1281
  %v1286 = vld [vmem:[%s14] sm:$0xff]
  %v1287 = vld [vmem:[%s14 + $0x8] sm:$0xff]
  %v1288 = vld [vmem:[%s14 + $0x10] sm:$0xff]
  %v1289 = vld [vmem:[%s14 + $0x18] sm:$0xff]
  %v1290 = vld [vmem:[%s15] sm:$0x1]
  %v1292 = vperm.slane %v1290, 0
  %v1295 = vsel %vm165, %v1283, 0
  %v1298 = vsel %vm165, %v1284, 0
  %v1301 = vsel %vm165, %v1285, 0
  %1303 = vmatpush.msra.mxu0 0.0
  %1304 = vmatpush.msra.mxu0 0.0
  %1305 = vmatpush.msra.mxu0 0.0
  %1306 = vmatpush.msra.mxu0 0.0
  %1307 = vmatpush.msra.mxu0 0.0
  %1308 = vmatpush.msra.mxu0 0.0
  %1309 = vmatpush.msra.mxu0 0.0
  %1310 = vmatpush.msra.mxu0 0.0
  %1311 = vmatpush.msra.mxu0 0.0
  %1312 = vmatpush.msra.mxu0 0.0
  %1313 = vmatpush.msra.mxu0 0.0
  %1314 = vmatpush.msra.mxu0 0.0
  %1315 = vmatpush.msra.mxu0 %v1289
  %1316 = vmatpush.msra.mxu0 %v1288
  %1317 = vmatpush.msra.mxu0 %v1287
  %1318 = vmatpush.msra.mxu0 %v1286
  %1319 = vmatmul.f32.gmra.mxu0 %v1295
  %v1320 = vpop.f32.mrf.mxu0
  %v1321 = vadd.f32 %v1292, %v1320
  %1322 = vmatmul.f32.gmra.mxu0 %v1298
  %v1323 = vpop.f32.mrf.mxu0
  %v1324 = vadd.f32 %v1292, %v1323
  %1325 = vmatmul.f32.gmra.mxu0 %v1301
  %v1326 = vpop.f32.mrf.mxu0
  %v1327 = vadd.f32 %v1292, %v1326
  %1328 = vdwg.mxu0
  %v1329 = vmul.f32 %v1321, 0.5
  %v1330 = vmul.f32 %v1324, 0.5
  %v1331 = vmul.f32 %v1327, 0.5
  %v1332 = vmul.f32 %v1321, 0.044715
  %v1333 = vmul.f32 %v1324, 0.044715
  %v1334 = vmul.f32 %v1327, 0.044715
  %v1335 = vmul.f32 %v1332, %v1321
  %v1336 = vmul.f32 %v1333, %v1324
  %v1337 = vmul.f32 %v1334, %v1327
  %v1338 = vmul.f32 %v1335, %v1321
  %v1339 = vmul.f32 %v1336, %v1324
  %v1340 = vmul.f32 %v1337, %v1327
  %v1341 = vadd.f32 %v1321, %v1338
  %v1342 = vadd.f32 %v1324, %v1339
  %v1343 = vadd.f32 %v1327, %v1340
  %v1344 = vmul.f32 %v1341, 0.7978846
  %v1345 = vmul.f32 %v1342, 0.7978846
  %v1346 = vmul.f32 %v1343, 0.7978846
  %v1347 = vtanh.pop %v1344
  %v1348 = vtanh.pop %v1345
  %v1349 = vtanh.pop %v1346
  %v1350 = vadd.f32 %v1347, 1.0
  %v1351 = vadd.f32 %v1348, 1.0
  %v1352 = vadd.f32 %v1349, 1.0
  %v1353 = vmul.f32 %v1329, %v1350
  %v1354 = vmul.f32 %v1330, %v1351
  %v1355 = vmul.f32 %v1331, %v1352
  %v1356 = vld [vmem:[%s16] sm:$0xff]
  %v1357 = vld [vmem:[%s16 + $0x8] sm:$0xff]
  %v1358 = vld [vmem:[%s16 + $0x10] sm:$0xff]
  %v1359 = vld [vmem:[%s16 + $0x18] sm:$0xff]
  %v1360 = vld [vmem:[%s16 + $0x20] sm:$0xff]
  %v1361 = vld [vmem:[%s16 + $0x28] sm:$0xff]
  %v1362 = vld [vmem:[%s16 + $0x30] sm:$0xff]
  %v1363 = vld [vmem:[%s16 + $0x38] sm:$0xff]
  %vm1364 = vcmask 523264
  %v1366 = vsel %vm1364, %v1353, 0
  %v1369 = vsel %vm1364, %v1354, 0
  %v1372 = vsel %vm1364, %v1355, 0
  %1374 = vmatpush.msra.mxu0 0.0
  %1375 = vmatpush.msra.mxu0 0.0
  %1376 = vmatpush.msra.mxu0 0.0
  %1377 = vmatpush.msra.mxu0 0.0
  %1378 = vmatpush.msra.mxu0 0.0
  %1379 = vmatpush.msra.mxu0 0.0
  %1380 = vmatpush.msra.mxu0 0.0
  %1381 = vmatpush.msra.mxu0 0.0
  %1382 = vmatpush.msra.mxu0 %v1363
  %1383 = vmatpush.msra.mxu0 %v1362
  %1384 = vmatpush.msra.mxu0 %v1361
  %1385 = vmatpush.msra.mxu0 %v1360
  %1386 = vmatpush.msra.mxu0 %v1359
  %1387 = vmatpush.msra.mxu0 %v1358
  %1388 = vmatpush.msra.mxu0 %v1357
  %1389 = vmatpush.msra.mxu0 %v1356
  %1390 = vmatmul.f32.gmra.mxu0 %v1366
  %v1391 = vpop.f32.mrf.mxu0
  %v1392 = vadd.f32 0.0, %v1391
  %1393 = vmatmul.f32.gmra.mxu0 %v1369
  %v1394 = vpop.f32.mrf.mxu0
  %v1395 = vadd.f32 0.0, %v1394
  %1396 = vmatmul.f32.gmra.mxu0 %v1372
  %v1397 = vpop.f32.mrf.mxu0
  %v1398 = vadd.f32 0.0, %v1397
  %1399 = vdwg.mxu0
  %v1400 = vadd.f32 %v1203, %v1392
  %v1401 = vadd.f32 %v1204, %v1395
  %v1402 = vadd.f32 %v1205, %v1398
  %v1403 = vld [vmem:[%s17] sm:$0x1]
  %v1405 = vperm.slane %v1403, 0
  %v1407 = vadd.f32 %v1400, %v1405
  %v1408 = vadd.f32 %v1401, %v1405
  %v1409 = vadd.f32 %v1402, %v1405
  %s1410 = scalar_lea.vmem %s6, 1
  %v1411 = vld [vmem:[%s1410] sm:$0x1]
  %s1412 = scalar_lea.vmem %s7, 1
  %v1413 = vld [vmem:[%s1412] sm:$0x1]
  %v1414 = vsel %vm165, %v1407, 0.0
  %1415 = vadd.xlane.f32.xlu0 %v1414
  %v1416 = vpop.xlane.xlu0 %1415
  %v1417 = vsel %vm165, %v1408, 0.0
  %1418 = vadd.xlane.f32.xlu0 %v1417
  %v1419 = vpop.xlane.xlu0 %1418
  %v1420 = vsel %vm172, %v1409, 0.0
  %1421 = vadd.xlane.f32.xlu0 %v1420
  %v1422 = vpop.xlane.xlu0 %1421
  %v1423 = vmul.f32 %v1416, %v182
  %v1424 = vmul.f32 %v1419, %v182
  %v1425 = vmul.f32 %v1422, %v182
  %v1426 = vsub.f32 %v1407, %v1423
  %v1427 = vsub.f32 %v1408, %v1424
  %v1428 = vsub.f32 %v1409, %v1425
  %v1429 = vmul.f32 %v1426, %v1426
  %v1430 = vmul.f32 %v1427, %v1427
  %v1431 = vmul.f32 %v1428, %v1428
  %v1432 = vsel %vm165, %v1429, 0.0
  %1433 = vadd.xlane.f32.xlu0 %v1432
  %v1434 = vpop.xlane.xlu0 %1433
  %v1435 = vsel %vm165, %v1430, 0.0
  %1436 = vadd.xlane.f32.xlu0 %v1435
  %v1437 = vpop.xlane.xlu0 %1436
  %v1438 = vsel %vm172, %v1431, 0.0
  %1439 = vadd.xlane.f32.xlu0 %v1438
  %v1440 = vpop.xlane.xlu0 %1439
  %v1441 = vmul.f32 %v1434, %v182
  %v1442 = vmul.f32 %v1437, %v182
  %v1443 = vmul.f32 %v1440, %v182
  %v1444 = vadd.f32 %v1441, 1e-06
  %v1445 = vadd.f32 %v1442, 1e-06
  %v1446 = vadd.f32 %v1443, 1e-06
  %v1447 = vrsqrt.pop %v1444
  %v1448 = vmul.f32 %v1447, %v1444
  %v1449 = vmul.f32 %v1448, %v1447
  %v1450 = vmul.f32 0.5, %v1449
  %v1451 = vsub.f32 1.5, %v1450
  %v1452 = vmul.f32 %v1447, %v1451
  %vm1453 = vweird.f32 %v1444
  %vm1454 = vweird.f32 %v1447
  %vm1455 = vmor %vm1453, %vm1454
  %v1456 = vsel %vm1455, %v1447, %v1452
  %v1457 = vrsqrt.pop %v1445
  %v1458 = vmul.f32 %v1457, %v1445
  %v1459 = vmul.f32 %v1458, %v1457
  %v1460 = vmul.f32 0.5, %v1459
  %v1461 = vsub.f32 1.5, %v1460
  %v1462 = vmul.f32 %v1457, %v1461
  %vm1463 = vweird.f32 %v1445
  %vm1464 = vweird.f32 %v1457
  %vm1465 = vmor %vm1463, %vm1464
  %v1466 = vsel %vm1465, %v1457, %v1462
  %v1467 = vrsqrt.pop %v1446
  %v1468 = vmul.f32 %v1467, %v1446
  %v1469 = vmul.f32 %v1468, %v1467
  %v1470 = vmul.f32 0.5, %v1469
  %v1471 = vsub.f32 1.5, %v1470
  %v1472 = vmul.f32 %v1467, %v1471
  %vm1473 = vweird.f32 %v1446
  %vm1474 = vweird.f32 %v1467
  %vm1475 = vmor %vm1473, %vm1474
  %v1476 = vsel %vm1475, %v1467, %v1472
  %v1477 = vmul.f32 %v1426, %v1456
  %v1478 = vmul.f32 %v1427, %v1466
  %v1479 = vmul.f32 %v1428, %v1476
  %v1481 = vperm.slane %v1411, 0
  %v1483 = vmul.f32 %v1477, %v1481
  %v1484 = vmul.f32 %v1478, %v1481
  %v1485 = vmul.f32 %v1479, %v1481
  %v1487 = vperm.slane %v1413, 0
  %v1489 = vadd.f32 %v1483, %v1487
  %v1490 = vadd.f32 %v1484, %v1487
  %v1491 = vadd.f32 %v1485, %v1487
  %s1492 = scalar_lea.vmem %s8, 32
  %v1493 = vld [vmem:[%s1492] sm:$0xff]
  %v1494 = vld [vmem:[%s1492 + $0x8] sm:$0xff]
  %v1495 = vld [vmem:[%s1492 + $0x10] sm:$0xff]
  %v1496 = vld [vmem:[%s1492 + $0x18] sm:$0xff]
  %s1497 = scalar_lea.vmem %s9, 1
  %v1498 = vld [vmem:[%s1497] sm:$0x1]
  %v1500 = vperm.slane %v1498, 0
  %v1503 = vsel %vm165, %v1489, 0
  %v1506 = vsel %vm165, %v1490, 0
  %v1509 = vsel %vm165, %v1491, 0
  %1511 = vmatpush.msra.mxu0 0.0
  %1512 = vmatpush.msra.mxu0 0.0
  %1513 = vmatpush.msra.mxu0 0.0
  %1514 = vmatpush.msra.mxu0 0.0
  %1515 = vmatpush.msra.mxu0 0.0
  %1516 = vmatpush.msra.mxu0 0.0
  %1517 = vmatpush.msra.mxu0 0.0
  %1518 = vmatpush.msra.mxu0 0.0
  %1519 = vmatpush.msra.mxu0 0.0
  %1520 = vmatpush.msra.mxu0 0.0
  %1521 = vmatpush.msra.mxu0 0.0
  %1522 = vmatpush.msra.mxu0 0.0
  %1523 = vmatpush.msra.mxu0 %v1496
  %1524 = vmatpush.msra.mxu0 %v1495
  %1525 = vmatpush.msra.mxu0 %v1494
  %1526 = vmatpush.msra.mxu0 %v1493
  %1527 = vmatmul.f32.gmra.mxu0 %v1503
  %v1528 = vpop.f32.mrf.mxu0
  %v1529 = vadd.f32 %v1500, %v1528
  %1530 = vmatmul.f32.gmra.mxu0 %v1506
  %v1531 = vpop.f32.mrf.mxu0
  %v1532 = vadd.f32 %v1500, %v1531
  %1533 = vmatmul.f32.gmra.mxu0 %v1509
  %v1534 = vpop.f32.mrf.mxu0
  %v1535 = vadd.f32 %v1500, %v1534
  %1536 = vdwg.mxu0
  %1539 = vrot.lane.b32.xlu0 %v1529, 96
  %v1540 = vpop.permute.xlu0 %1539
  %1541 = vrot.lane.b32.xlu0 %v1532, 96
  %v1542 = vpop.permute.xlu0 %1541
  %v1543 = vsel %vm301, %v1529, 0
  %v1545 = vsel %vm301, %v1532, 0
  %v1547 = vsel %vm301, %v1540, 0
  %v1549 = vsel %vm301, %v1542, 0
  %1551 = vmatpush.xpose.msra.mxu0 0.0
  %1552 = vmatpush.xpose.msra.mxu0 0.0
  %1553 = vmatpush.xpose.msra.mxu0 0.0
  %1554 = vmatpush.xpose.msra.mxu0 0.0
  %1555 = vmatpush.xpose.msra.mxu0 0.0
  %1556 = vmatpush.xpose.msra.mxu0 0.0
  %1557 = vmatpush.xpose.msra.mxu0 0.0
  %1558 = vmatpush.xpose.msra.mxu0 0.0
  %1559 = vmatpush.xpose.msra.mxu0 0.0
  %1560 = vmatpush.xpose.msra.mxu0 0.0
  %1561 = vmatpush.xpose.msra.mxu0 0.0
  %1562 = vmatpush.xpose.msra.mxu0 0.0
  %1563 = vmatpush.xpose.msra.mxu0 0.0
  %1564 = vmatpush.xpose.msra.mxu0 0.0
  %1565 = vmatpush.xpose.msra.mxu0 %v1549
  %1566 = vmatpush.xpose.msra.mxu0 %v1547
  %1567 = vmatmul.f32.gmra.mxu0 %v1543
  %v1568 = vpop.f32.mrf.mxu0
  %v1569 = vadd.f32 0.0, %v1568
  %1570 = vmatmul.f32.gmra.mxu0 %v1545
  %v1571 = vpop.f32.mrf.mxu0
  %v1572 = vadd.f32 0.0, %v1571
  %1573 = vdwg.mxu0
  %v1574 = vmul.f32 %v1569, 0.35355338
  %v1575 = vmul.f32 %v1572, 0.35355338
  %v1576 = vsel %vm335, %v1574, -inf
  %1577 = vmax.xlane.f32.xlu0 %v1576
  %v1578 = vpop.xlane.xlu0 %1577
  %v1579 = vsel %vm339, %v1575, -inf
  %1580 = vmax.xlane.f32.xlu0 %v1579
  %v1581 = vpop.xlane.xlu0 %1580
  %v1582 = vsub.f32 %v1574, %v1578
  %v1583 = vsub.f32 %v1575, %v1581
  %v1584 = vmul.f32 %v1582, 1.442695
  %v1585 = vpow.pop %v1584
  %v1586 = vmul.f32 %v1583, 1.442695
  %v1587 = vpow.pop %v1586
  %v1588 = vsel %vm335, %v1585, 0.0
  %1589 = vadd.xlane.f32.xlu0 %v1588
  %v1590 = vpop.xlane.xlu0 %1589
  %v1591 = vsel %vm339, %v1587, 0.0
  %1592 = vadd.xlane.f32.xlu0 %v1591
  %v1593 = vpop.xlane.xlu0 %1592
  %v1594 = vrcp.pop %v1590
  %v1595 = vrcp.pop %v1593
  %v1596 = vmul.f32 %v1585, %v1594
  %v1597 = vmul.f32 %v1587, %v1595
  %1598 = vrot.lane.b32.xlu0 %v1529, 64
  %v1599 = vpop.permute.xlu0 %1598
  %1600 = vrot.lane.b32.xlu0 %v1532, 64
  %v1601 = vpop.permute.xlu0 %1600
  %v1604 = vsel %vm335, %v1596, 0
  %v1607 = vsel %vm335, %v1597, 0
  %v1609 = vsel %vm122, %v1601, 0
  %1611 = vmatpush.msra.mxu0 0.0
  %1612 = vmatpush.msra.mxu0 0.0
  %1613 = vmatpush.msra.mxu0 0.0
  %1614 = vmatpush.msra.mxu0 0.0
  %1615 = vmatpush.msra.mxu0 0.0
  %1616 = vmatpush.msra.mxu0 0.0
  %1617 = vmatpush.msra.mxu0 0.0
  %1618 = vmatpush.msra.mxu0 0.0
  %1619 = vmatpush.msra.mxu0 0.0
  %1620 = vmatpush.msra.mxu0 0.0
  %1621 = vmatpush.msra.mxu0 0.0
  %1622 = vmatpush.msra.mxu0 0.0
  %1623 = vmatpush.msra.mxu0 0.0
  %1624 = vmatpush.msra.mxu0 0.0
  %1625 = vmatpush.msra.mxu0 %v1609
  %1626 = vmatpush.msra.mxu0 %v1599
  %1627 = vmatmul.f32.gmra.mxu0 %v1604
  %v1628 = vpop.f32.mrf.mxu0
  %v1629 = vadd.f32 0.0, %v1628
  %1630 = vmatmul.f32.gmra.mxu0 %v1607
  %v1631 = vpop.f32.mrf.mxu0
  %v1632 = vadd.f32 0.0, %v1631
  %1633 = vdwg.mxu0
  %1634 = vrot.lane.b32.xlu0 %v1529, 120
  %v1635 = vpop.permute.xlu0 %1634
  %1636 = vrot.lane.b32.xlu0 %v1532, 120
  %v1637 = vpop.permute.xlu0 %1636
  %1638 = vrot.lane.b32.xlu0 %v1529, 88
  %v1639 = vpop.permute.xlu0 %1638
  %1640 = vrot.lane.b32.xlu0 %v1532, 88
  %v1641 = vpop.permute.xlu0 %1640
  %v1642 = vsel %vm301, %v1635, 0
  %v1644 = vsel %vm301, %v1637, 0
  %v1646 = vsel %vm301, %v1639, 0
  %v1648 = vsel %vm301, %v1641, 0
  %1650 = vmatpush.xpose.msra.mxu0 0.0
  %1651 = vmatpush.xpose.msra.mxu0 0.0
  %1652 = vmatpush.xpose.msra.mxu0 0.0
  %1653 = vmatpush.xpose.msra.mxu0 0.0
  %1654 = vmatpush.xpose.msra.mxu0 0.0
  %1655 = vmatpush.xpose.msra.mxu0 0.0
  %1656 = vmatpush.xpose.msra.mxu0 0.0
  %1657 = vmatpush.xpose.msra.mxu0 0.0
  %1658 = vmatpush.xpose.msra.mxu0 0.0
  %1659 = vmatpush.xpose.msra.mxu0 0.0
  %1660 = vmatpush.xpose.msra.mxu0 0.0
  %1661 = vmatpush.xpose.msra.mxu0 0.0
  %1662 = vmatpush.xpose.msra.mxu0 0.0
  %1663 = vmatpush.xpose.msra.mxu0 0.0
  %1664 = vmatpush.xpose.msra.mxu0 %v1648
  %1665 = vmatpush.xpose.msra.mxu0 %v1646
  %1666 = vmatmul.f32.gmra.mxu0 %v1642
  %v1667 = vpop.f32.mrf.mxu0
  %v1668 = vadd.f32 0.0, %v1667
  %1669 = vmatmul.f32.gmra.mxu0 %v1644
  %v1670 = vpop.f32.mrf.mxu0
  %v1671 = vadd.f32 0.0, %v1670
  %1672 = vdwg.mxu0
  %v1673 = vmul.f32 %v1668, 0.35355338
  %v1674 = vmul.f32 %v1671, 0.35355338
  %v1675 = vsel %vm335, %v1673, -inf
  %1676 = vmax.xlane.f32.xlu0 %v1675
  %v1677 = vpop.xlane.xlu0 %1676
  %v1678 = vsel %vm339, %v1674, -inf
  %1679 = vmax.xlane.f32.xlu0 %v1678
  %v1680 = vpop.xlane.xlu0 %1679
  %v1681 = vsub.f32 %v1673, %v1677
  %v1682 = vsub.f32 %v1674, %v1680
  %v1683 = vmul.f32 %v1681, 1.442695
  %v1684 = vpow.pop %v1683
  %v1685 = vmul.f32 %v1682, 1.442695
  %v1686 = vpow.pop %v1685
  %v1687 = vsel %vm335, %v1684, 0.0
  %1688 = vadd.xlane.f32.xlu0 %v1687
  %v1689 = vpop.xlane.xlu0 %1688
  %v1690 = vsel %vm339, %v1686, 0.0
  %1691 = vadd.xlane.f32.xlu0 %v1690
  %v1692 = vpop.xlane.xlu0 %1691
  %v1693 = vrcp.pop %v1689
  %v1694 = vrcp.pop %v1692
  %v1695 = vmul.f32 %v1684, %v1693
  %v1696 = vmul.f32 %v1686, %v1694
  %1697 = vrot.lane.b32.xlu0 %v1529, 56
  %v1698 = vpop.permute.xlu0 %1697
  %1699 = vrot.lane.b32.xlu0 %v1532, 56
  %v1700 = vpop.permute.xlu0 %1699
  %v1703 = vsel %vm335, %v1695, 0
  %v1706 = vsel %vm335, %v1696, 0
  %v1708 = vsel %vm122, %v1700, 0
  %1710 = vmatpush.msra.mxu0 0.0
  %1711 = vmatpush.msra.mxu0 0.0
  %1712 = vmatpush.msra.mxu0 0.0
  %1713 = vmatpush.msra.mxu0 0.0
  %1714 = vmatpush.msra.mxu0 0.0
  %1715 = vmatpush.msra.mxu0 0.0
  %1716 = vmatpush.msra.mxu0 0.0
  %1717 = vmatpush.msra.mxu0 0.0
  %1718 = vmatpush.msra.mxu0 0.0
  %1719 = vmatpush.msra.mxu0 0.0
  %1720 = vmatpush.msra.mxu0 0.0
  %1721 = vmatpush.msra.mxu0 0.0
  %1722 = vmatpush.msra.mxu0 0.0
  %1723 = vmatpush.msra.mxu0 0.0
  %1724 = vmatpush.msra.mxu0 %v1708
  %1725 = vmatpush.msra.mxu0 %v1698
  %1726 = vmatmul.f32.gmra.mxu0 %v1703
  %v1727 = vpop.f32.mrf.mxu0
  %v1728 = vadd.f32 0.0, %v1727
  %1729 = vmatmul.f32.gmra.mxu0 %v1706
  %v1730 = vpop.f32.mrf.mxu0
  %v1731 = vadd.f32 0.0, %v1730
  %1732 = vdwg.mxu0
  %1733 = vrot.lane.b32.xlu0 %v1529, 112
  %v1734 = vpop.permute.xlu0 %1733
  %1735 = vrot.lane.b32.xlu0 %v1532, 112
  %v1736 = vpop.permute.xlu0 %1735
  %1737 = vrot.lane.b32.xlu0 %v1529, 80
  %v1738 = vpop.permute.xlu0 %1737
  %1739 = vrot.lane.b32.xlu0 %v1532, 80
  %v1740 = vpop.permute.xlu0 %1739
  %v1741 = vsel %vm301, %v1734, 0
  %v1743 = vsel %vm301, %v1736, 0
  %v1745 = vsel %vm301, %v1738, 0
  %v1747 = vsel %vm301, %v1740, 0
  %1749 = vmatpush.xpose.msra.mxu0 0.0
  %1750 = vmatpush.xpose.msra.mxu0 0.0
  %1751 = vmatpush.xpose.msra.mxu0 0.0
  %1752 = vmatpush.xpose.msra.mxu0 0.0
  %1753 = vmatpush.xpose.msra.mxu0 0.0
  %1754 = vmatpush.xpose.msra.mxu0 0.0
  %1755 = vmatpush.xpose.msra.mxu0 0.0
  %1756 = vmatpush.xpose.msra.mxu0 0.0
  %1757 = vmatpush.xpose.msra.mxu0 0.0
  %1758 = vmatpush.xpose.msra.mxu0 0.0
  %1759 = vmatpush.xpose.msra.mxu0 0.0
  %1760 = vmatpush.xpose.msra.mxu0 0.0
  %1761 = vmatpush.xpose.msra.mxu0 0.0
  %1762 = vmatpush.xpose.msra.mxu0 0.0
  %1763 = vmatpush.xpose.msra.mxu0 %v1747
  %1764 = vmatpush.xpose.msra.mxu0 %v1745
  %1765 = vmatmul.f32.gmra.mxu0 %v1741
  %v1766 = vpop.f32.mrf.mxu0
  %v1767 = vadd.f32 0.0, %v1766
  %1768 = vmatmul.f32.gmra.mxu0 %v1743
  %v1769 = vpop.f32.mrf.mxu0
  %v1770 = vadd.f32 0.0, %v1769
  %1771 = vdwg.mxu0
  %v1772 = vmul.f32 %v1767, 0.35355338
  %v1773 = vmul.f32 %v1770, 0.35355338
  %v1774 = vsel %vm335, %v1772, -inf
  %1775 = vmax.xlane.f32.xlu0 %v1774
  %v1776 = vpop.xlane.xlu0 %1775
  %v1777 = vsel %vm339, %v1773, -inf
  %1778 = vmax.xlane.f32.xlu0 %v1777
  %v1779 = vpop.xlane.xlu0 %1778
  %v1780 = vsub.f32 %v1772, %v1776
  %v1781 = vsub.f32 %v1773, %v1779
  %v1782 = vmul.f32 %v1780, 1.442695
  %v1783 = vpow.pop %v1782
  %v1784 = vmul.f32 %v1781, 1.442695
  %v1785 = vpow.pop %v1784
  %v1786 = vsel %vm335, %v1783, 0.0
  %1787 = vadd.xlane.f32.xlu0 %v1786
  %v1788 = vpop.xlane.xlu0 %1787
  %v1789 = vsel %vm339, %v1785, 0.0
  %1790 = vadd.xlane.f32.xlu0 %v1789
  %v1791 = vpop.xlane.xlu0 %1790
  %v1792 = vrcp.pop %v1788
  %v1793 = vrcp.pop %v1791
  %v1794 = vmul.f32 %v1783, %v1792
  %v1795 = vmul.f32 %v1785, %v1793
  %1796 = vrot.lane.b32.xlu0 %v1529, 48
  %v1797 = vpop.permute.xlu0 %1796
  %1798 = vrot.lane.b32.xlu0 %v1532, 48
  %v1799 = vpop.permute.xlu0 %1798
  %v1802 = vsel %vm335, %v1794, 0
  %v1805 = vsel %vm335, %v1795, 0
  %v1807 = vsel %vm122, %v1799, 0
  %1809 = vmatpush.msra.mxu0 0.0
  %1810 = vmatpush.msra.mxu0 0.0
  %1811 = vmatpush.msra.mxu0 0.0
  %1812 = vmatpush.msra.mxu0 0.0
  %1813 = vmatpush.msra.mxu0 0.0
  %1814 = vmatpush.msra.mxu0 0.0
  %1815 = vmatpush.msra.mxu0 0.0
  %1816 = vmatpush.msra.mxu0 0.0
  %1817 = vmatpush.msra.mxu0 0.0
  %1818 = vmatpush.msra.mxu0 0.0
  %1819 = vmatpush.msra.mxu0 0.0
  %1820 = vmatpush.msra.mxu0 0.0
  %1821 = vmatpush.msra.mxu0 0.0
  %1822 = vmatpush.msra.mxu0 0.0
  %1823 = vmatpush.msra.mxu0 %v1807
  %1824 = vmatpush.msra.mxu0 %v1797
  %1825 = vmatmul.f32.gmra.mxu0 %v1802
  %v1826 = vpop.f32.mrf.mxu0
  %v1827 = vadd.f32 0.0, %v1826
  %1828 = vmatmul.f32.gmra.mxu0 %v1805
  %v1829 = vpop.f32.mrf.mxu0
  %v1830 = vadd.f32 0.0, %v1829
  %1831 = vdwg.mxu0
  %1832 = vrot.lane.b32.xlu0 %v1529, 104
  %v1833 = vpop.permute.xlu0 %1832
  %1834 = vrot.lane.b32.xlu0 %v1532, 104
  %v1835 = vpop.permute.xlu0 %1834
  %1836 = vrot.lane.b32.xlu0 %v1529, 72
  %v1837 = vpop.permute.xlu0 %1836
  %1838 = vrot.lane.b32.xlu0 %v1532, 72
  %v1839 = vpop.permute.xlu0 %1838
  %v1840 = vsel %vm301, %v1833, 0
  %v1842 = vsel %vm301, %v1835, 0
  %v1844 = vsel %vm301, %v1837, 0
  %v1846 = vsel %vm301, %v1839, 0
  %1848 = vmatpush.xpose.msra.mxu0 0.0
  %1849 = vmatpush.xpose.msra.mxu0 0.0
  %1850 = vmatpush.xpose.msra.mxu0 0.0
  %1851 = vmatpush.xpose.msra.mxu0 0.0
  %1852 = vmatpush.xpose.msra.mxu0 0.0
  %1853 = vmatpush.xpose.msra.mxu0 0.0
  %1854 = vmatpush.xpose.msra.mxu0 0.0
  %1855 = vmatpush.xpose.msra.mxu0 0.0
  %1856 = vmatpush.xpose.msra.mxu0 0.0
  %1857 = vmatpush.xpose.msra.mxu0 0.0
  %1858 = vmatpush.xpose.msra.mxu0 0.0
  %1859 = vmatpush.xpose.msra.mxu0 0.0
  %1860 = vmatpush.xpose.msra.mxu0 0.0
  %1861 = vmatpush.xpose.msra.mxu0 0.0
  %1862 = vmatpush.xpose.msra.mxu0 %v1846
  %1863 = vmatpush.xpose.msra.mxu0 %v1844
  %1864 = vmatmul.f32.gmra.mxu0 %v1840
  %v1865 = vpop.f32.mrf.mxu0
  %v1866 = vadd.f32 0.0, %v1865
  %1867 = vmatmul.f32.gmra.mxu0 %v1842
  %v1868 = vpop.f32.mrf.mxu0
  %v1869 = vadd.f32 0.0, %v1868
  %1870 = vdwg.mxu0
  %v1871 = vmul.f32 %v1866, 0.35355338
  %v1872 = vmul.f32 %v1869, 0.35355338
  %v1873 = vsel %vm335, %v1871, -inf
  %1874 = vmax.xlane.f32.xlu0 %v1873
  %v1875 = vpop.xlane.xlu0 %1874
  %v1876 = vsel %vm339, %v1872, -inf
  %1877 = vmax.xlane.f32.xlu0 %v1876
  %v1878 = vpop.xlane.xlu0 %1877
  %v1879 = vsub.f32 %v1871, %v1875
  %v1880 = vsub.f32 %v1872, %v1878
  %v1881 = vmul.f32 %v1879, 1.442695
  %v1882 = vpow.pop %v1881
  %v1883 = vmul.f32 %v1880, 1.442695
  %v1884 = vpow.pop %v1883
  %v1885 = vsel %vm335, %v1882, 0.0
  %1886 = vadd.xlane.f32.xlu0 %v1885
  %v1887 = vpop.xlane.xlu0 %1886
  %v1888 = vsel %vm339, %v1884, 0.0
  %1889 = vadd.xlane.f32.xlu0 %v1888
  %v1890 = vpop.xlane.xlu0 %1889
  %v1891 = vrcp.pop %v1887
  %v1892 = vrcp.pop %v1890
  %v1893 = vmul.f32 %v1882, %v1891
  %v1894 = vmul.f32 %v1884, %v1892
  %1895 = vrot.lane.b32.xlu0 %v1529, 40
  %v1896 = vpop.permute.xlu0 %1895
  %1897 = vrot.lane.b32.xlu0 %v1532, 40
  %v1898 = vpop.permute.xlu0 %1897
  %v1901 = vsel %vm335, %v1893, 0
  %v1904 = vsel %vm335, %v1894, 0
  %v1906 = vsel %vm122, %v1898, 0
  %1908 = vmatpush.msra.mxu0 0.0
  %1909 = vmatpush.msra.mxu0 0.0
  %1910 = vmatpush.msra.mxu0 0.0
  %1911 = vmatpush.msra.mxu0 0.0
  %1912 = vmatpush.msra.mxu0 0.0
  %1913 = vmatpush.msra.mxu0 0.0
  %1914 = vmatpush.msra.mxu0 0.0
  %1915 = vmatpush.msra.mxu0 0.0
  %1916 = vmatpush.msra.mxu0 0.0
  %1917 = vmatpush.msra.mxu0 0.0
  %1918 = vmatpush.msra.mxu0 0.0
  %1919 = vmatpush.msra.mxu0 0.0
  %1920 = vmatpush.msra.mxu0 0.0
  %1921 = vmatpush.msra.mxu0 0.0
  %1922 = vmatpush.msra.mxu0 %v1906
  %1923 = vmatpush.msra.mxu0 %v1896
  %1924 = vmatmul.f32.gmra.mxu0 %v1901
  %v1925 = vpop.f32.mrf.mxu0
  %v1926 = vadd.f32 0.0, %v1925
  %1927 = vmatmul.f32.gmra.mxu0 %v1904
  %v1928 = vpop.f32.mrf.mxu0
  %v1929 = vadd.f32 0.0, %v1928
  %1930 = vdwg.mxu0
  %1933 = vrot.lane.b32.xlu0 %v1728, 8
  %v1934 = vpop.permute.xlu0 %1933
  %1935 = vrot.lane.b32.xlu0 %v1731, 8
  %v1936 = vpop.permute.xlu0 %1935
  %1941 = vrot.lane.b32.xlu0 %v1827, 16
  %v1942 = vpop.permute.xlu0 %1941
  %1943 = vrot.lane.b32.xlu0 %v1830, 16
  %v1944 = vpop.permute.xlu0 %1943
  %1949 = vrot.lane.b32.xlu0 %v1926, 24
  %v1950 = vpop.permute.xlu0 %1949
  %1951 = vrot.lane.b32.xlu0 %v1929, 24
  %v1952 = vpop.permute.xlu0 %1951
  %v1955 = vsel %vm301, %v1629, %v1934
  %v1956 = vsel %vm301, %v1632, %v1936
  %v1957 = vsel %vm718, %v1955, %v1942
  %v1958 = vsel %vm718, %v1956, %v1944
  %v1959 = vsel %vm721, %v1957, %v1950
  %v1960 = vsel %vm721, %v1958, %v1952
  %v1962 = vrot.slane %v1532, 1
  %v1963 = vrot.slane %v1535, 1
  %v1964 = vsel %vm725, %v1962, %v1963
  %1965 = vrot.lane.b32.xlu0 %v1964, 96
  %v1966 = vpop.permute.xlu0 %1965
  %1967 = vrot.lane.b32.xlu0 %v1963, 96
  %v1968 = vpop.permute.xlu0 %1967
  %v1969 = vsel %vm301, %v1964, 0
  %v1971 = vsel %vm301, %v1963, 0
  %v1973 = vsel %vm301, %v1966, 0
  %v1975 = vsel %vm301, %v1968, 0
  %1977 = vmatpush.xpose.msra.mxu0 0.0
  %1978 = vmatpush.xpose.msra.mxu0 0.0
  %1979 = vmatpush.xpose.msra.mxu0 0.0
  %1980 = vmatpush.xpose.msra.mxu0 0.0
  %1981 = vmatpush.xpose.msra.mxu0 0.0
  %1982 = vmatpush.xpose.msra.mxu0 0.0
  %1983 = vmatpush.xpose.msra.mxu0 0.0
  %1984 = vmatpush.xpose.msra.mxu0 0.0
  %1985 = vmatpush.xpose.msra.mxu0 0.0
  %1986 = vmatpush.xpose.msra.mxu0 0.0
  %1987 = vmatpush.xpose.msra.mxu0 0.0
  %1988 = vmatpush.xpose.msra.mxu0 0.0
  %1989 = vmatpush.xpose.msra.mxu0 0.0
  %1990 = vmatpush.xpose.msra.mxu0 0.0
  %1991 = vmatpush.xpose.msra.mxu0 %v1975
  %1992 = vmatpush.xpose.msra.mxu0 %v1973
  %1993 = vmatmul.f32.gmra.mxu0 %v1969
  %v1994 = vpop.f32.mrf.mxu0
  %v1995 = vadd.f32 0.0, %v1994
  %1996 = vmatmul.f32.gmra.mxu0 %v1971
  %v1997 = vpop.f32.mrf.mxu0
  %v1998 = vadd.f32 0.0, %v1997
  %1999 = vdwg.mxu0
  %v2000 = vmul.f32 %v1995, 0.35355338
  %v2001 = vmul.f32 %v1998, 0.35355338
  %v2002 = vsel %vm335, %v2000, -inf
  %2003 = vmax.xlane.f32.xlu0 %v2002
  %v2004 = vpop.xlane.xlu0 %2003
  %v2005 = vsel %vm339, %v2001, -inf
  %2006 = vmax.xlane.f32.xlu0 %v2005
  %v2007 = vpop.xlane.xlu0 %2006
  %v2008 = vsub.f32 %v2000, %v2004
  %v2009 = vsub.f32 %v2001, %v2007
  %v2010 = vmul.f32 %v2008, 1.442695
  %v2011 = vpow.pop %v2010
  %v2012 = vmul.f32 %v2009, 1.442695
  %v2013 = vpow.pop %v2012
  %v2014 = vsel %vm335, %v2011, 0.0
  %2015 = vadd.xlane.f32.xlu0 %v2014
  %v2016 = vpop.xlane.xlu0 %2015
  %v2017 = vsel %vm339, %v2013, 0.0
  %2018 = vadd.xlane.f32.xlu0 %v2017
  %v2019 = vpop.xlane.xlu0 %2018
  %v2020 = vrcp.pop %v2016
  %v2021 = vrcp.pop %v2019
  %v2022 = vmul.f32 %v2011, %v2020
  %v2023 = vmul.f32 %v2013, %v2021
  %2024 = vrot.lane.b32.xlu0 %v1964, 64
  %v2025 = vpop.permute.xlu0 %2024
  %2026 = vrot.lane.b32.xlu0 %v1963, 64
  %v2027 = vpop.permute.xlu0 %2026
  %v2030 = vsel %vm335, %v2022, 0
  %v2033 = vsel %vm335, %v2023, 0
  %v2035 = vsel %vm122, %v2027, 0
  %2037 = vmatpush.msra.mxu0 0.0
  %2038 = vmatpush.msra.mxu0 0.0
  %2039 = vmatpush.msra.mxu0 0.0
  %2040 = vmatpush.msra.mxu0 0.0
  %2041 = vmatpush.msra.mxu0 0.0
  %2042 = vmatpush.msra.mxu0 0.0
  %2043 = vmatpush.msra.mxu0 0.0
  %2044 = vmatpush.msra.mxu0 0.0
  %2045 = vmatpush.msra.mxu0 0.0
  %2046 = vmatpush.msra.mxu0 0.0
  %2047 = vmatpush.msra.mxu0 0.0
  %2048 = vmatpush.msra.mxu0 0.0
  %2049 = vmatpush.msra.mxu0 0.0
  %2050 = vmatpush.msra.mxu0 0.0
  %2051 = vmatpush.msra.mxu0 %v2035
  %2052 = vmatpush.msra.mxu0 %v2025
  %2053 = vmatmul.f32.gmra.mxu0 %v2030
  %v2054 = vpop.f32.mrf.mxu0
  %v2055 = vadd.f32 0.0, %v2054
  %2056 = vmatmul.f32.gmra.mxu0 %v2033
  %v2057 = vpop.f32.mrf.mxu0
  %v2058 = vadd.f32 0.0, %v2057
  %2059 = vdwg.mxu0
  %2060 = vrot.lane.b32.xlu0 %v1964, 120
  %v2061 = vpop.permute.xlu0 %2060
  %2062 = vrot.lane.b32.xlu0 %v1963, 120
  %v2063 = vpop.permute.xlu0 %2062
  %2064 = vrot.lane.b32.xlu0 %v1964, 88
  %v2065 = vpop.permute.xlu0 %2064
  %2066 = vrot.lane.b32.xlu0 %v1963, 88
  %v2067 = vpop.permute.xlu0 %2066
  %v2068 = vsel %vm301, %v2061, 0
  %v2070 = vsel %vm301, %v2063, 0
  %v2072 = vsel %vm301, %v2065, 0
  %v2074 = vsel %vm301, %v2067, 0
  %2076 = vmatpush.xpose.msra.mxu0 0.0
  %2077 = vmatpush.xpose.msra.mxu0 0.0
  %2078 = vmatpush.xpose.msra.mxu0 0.0
  %2079 = vmatpush.xpose.msra.mxu0 0.0
  %2080 = vmatpush.xpose.msra.mxu0 0.0
  %2081 = vmatpush.xpose.msra.mxu0 0.0
  %2082 = vmatpush.xpose.msra.mxu0 0.0
  %2083 = vmatpush.xpose.msra.mxu0 0.0
  %2084 = vmatpush.xpose.msra.mxu0 0.0
  %2085 = vmatpush.xpose.msra.mxu0 0.0
  %2086 = vmatpush.xpose.msra.mxu0 0.0
  %2087 = vmatpush.xpose.msra.mxu0 0.0
  %2088 = vmatpush.xpose.msra.mxu0 0.0
  %2089 = vmatpush.xpose.msra.mxu0 0.0
  %2090 = vmatpush.xpose.msra.mxu0 %v2074
  %2091 = vmatpush.xpose.msra.mxu0 %v2072
  %2092 = vmatmul.f32.gmra.mxu0 %v2068
  %v2093 = vpop.f32.mrf.mxu0
  %v2094 = vadd.f32 0.0, %v2093
  %2095 = vmatmul.f32.gmra.mxu0 %v2070
  %v2096 = vpop.f32.mrf.mxu0
  %v2097 = vadd.f32 0.0, %v2096
  %2098 = vdwg.mxu0
  %v2099 = vmul.f32 %v2094, 0.35355338
  %v2100 = vmul.f32 %v2097, 0.35355338
  %v2101 = vsel %vm335, %v2099, -inf
  %2102 = vmax.xlane.f32.xlu0 %v2101
  %v2103 = vpop.xlane.xlu0 %2102
  %v2104 = vsel %vm339, %v2100, -inf
  %2105 = vmax.xlane.f32.xlu0 %v2104
  %v2106 = vpop.xlane.xlu0 %2105
  %v2107 = vsub.f32 %v2099, %v2103
  %v2108 = vsub.f32 %v2100, %v2106
  %v2109 = vmul.f32 %v2107, 1.442695
  %v2110 = vpow.pop %v2109
  %v2111 = vmul.f32 %v2108, 1.442695
  %v2112 = vpow.pop %v2111
  %v2113 = vsel %vm335, %v2110, 0.0
  %2114 = vadd.xlane.f32.xlu0 %v2113
  %v2115 = vpop.xlane.xlu0 %2114
  %v2116 = vsel %vm339, %v2112, 0.0
  %2117 = vadd.xlane.f32.xlu0 %v2116
  %v2118 = vpop.xlane.xlu0 %2117
  %v2119 = vrcp.pop %v2115
  %v2120 = vrcp.pop %v2118
  %v2121 = vmul.f32 %v2110, %v2119
  %v2122 = vmul.f32 %v2112, %v2120
  %2123 = vrot.lane.b32.xlu0 %v1964, 56
  %v2124 = vpop.permute.xlu0 %2123
  %2125 = vrot.lane.b32.xlu0 %v1963, 56
  %v2126 = vpop.permute.xlu0 %2125
  %v2129 = vsel %vm335, %v2121, 0
  %v2132 = vsel %vm335, %v2122, 0
  %v2134 = vsel %vm122, %v2126, 0
  %2136 = vmatpush.msra.mxu0 0.0
  %2137 = vmatpush.msra.mxu0 0.0
  %2138 = vmatpush.msra.mxu0 0.0
  %2139 = vmatpush.msra.mxu0 0.0
  %2140 = vmatpush.msra.mxu0 0.0
  %2141 = vmatpush.msra.mxu0 0.0
  %2142 = vmatpush.msra.mxu0 0.0
  %2143 = vmatpush.msra.mxu0 0.0
  %2144 = vmatpush.msra.mxu0 0.0
  %2145 = vmatpush.msra.mxu0 0.0
  %2146 = vmatpush.msra.mxu0 0.0
  %2147 = vmatpush.msra.mxu0 0.0
  %2148 = vmatpush.msra.mxu0 0.0
  %2149 = vmatpush.msra.mxu0 0.0
  %2150 = vmatpush.msra.mxu0 %v2134
  %2151 = vmatpush.msra.mxu0 %v2124
  %2152 = vmatmul.f32.gmra.mxu0 %v2129
  %v2153 = vpop.f32.mrf.mxu0
  %v2154 = vadd.f32 0.0, %v2153
  %2155 = vmatmul.f32.gmra.mxu0 %v2132
  %v2156 = vpop.f32.mrf.mxu0
  %v2157 = vadd.f32 0.0, %v2156
  %2158 = vdwg.mxu0
  %2159 = vrot.lane.b32.xlu0 %v1964, 112
  %v2160 = vpop.permute.xlu0 %2159
  %2161 = vrot.lane.b32.xlu0 %v1963, 112
  %v2162 = vpop.permute.xlu0 %2161
  %2163 = vrot.lane.b32.xlu0 %v1964, 80
  %v2164 = vpop.permute.xlu0 %2163
  %2165 = vrot.lane.b32.xlu0 %v1963, 80
  %v2166 = vpop.permute.xlu0 %2165
  %v2167 = vsel %vm301, %v2160, 0
  %v2169 = vsel %vm301, %v2162, 0
  %v2171 = vsel %vm301, %v2164, 0
  %v2173 = vsel %vm301, %v2166, 0
  %2175 = vmatpush.xpose.msra.mxu0 0.0
  %2176 = vmatpush.xpose.msra.mxu0 0.0
  %2177 = vmatpush.xpose.msra.mxu0 0.0
  %2178 = vmatpush.xpose.msra.mxu0 0.0
  %2179 = vmatpush.xpose.msra.mxu0 0.0
  %2180 = vmatpush.xpose.msra.mxu0 0.0
  %2181 = vmatpush.xpose.msra.mxu0 0.0
  %2182 = vmatpush.xpose.msra.mxu0 0.0
  %2183 = vmatpush.xpose.msra.mxu0 0.0
  %2184 = vmatpush.xpose.msra.mxu0 0.0
  %2185 = vmatpush.xpose.msra.mxu0 0.0
  %2186 = vmatpush.xpose.msra.mxu0 0.0
  %2187 = vmatpush.xpose.msra.mxu0 0.0
  %2188 = vmatpush.xpose.msra.mxu0 0.0
  %2189 = vmatpush.xpose.msra.mxu0 %v2173
  %2190 = vmatpush.xpose.msra.mxu0 %v2171
  %2191 = vmatmul.f32.gmra.mxu0 %v2167
  %v2192 = vpop.f32.mrf.mxu0
  %v2193 = vadd.f32 0.0, %v2192
  %2194 = vmatmul.f32.gmra.mxu0 %v2169
  %v2195 = vpop.f32.mrf.mxu0
  %v2196 = vadd.f32 0.0, %v2195
  %2197 = vdwg.mxu0
  %v2198 = vmul.f32 %v2193, 0.35355338
  %v2199 = vmul.f32 %v2196, 0.35355338
  %v2200 = vsel %vm335, %v2198, -inf
  %2201 = vmax.xlane.f32.xlu0 %v2200
  %v2202 = vpop.xlane.xlu0 %2201
  %v2203 = vsel %vm339, %v2199, -inf
  %2204 = vmax.xlane.f32.xlu0 %v2203
  %v2205 = vpop.xlane.xlu0 %2204
  %v2206 = vsub.f32 %v2198, %v2202
  %v2207 = vsub.f32 %v2199, %v2205
  %v2208 = vmul.f32 %v2206, 1.442695
  %v2209 = vpow.pop %v2208
  %v2210 = vmul.f32 %v2207, 1.442695
  %v2211 = vpow.pop %v2210
  %v2212 = vsel %vm335, %v2209, 0.0
  %2213 = vadd.xlane.f32.xlu0 %v2212
  %v2214 = vpop.xlane.xlu0 %2213
  %v2215 = vsel %vm339, %v2211, 0.0
  %2216 = vadd.xlane.f32.xlu0 %v2215
  %v2217 = vpop.xlane.xlu0 %2216
  %v2218 = vrcp.pop %v2214
  %v2219 = vrcp.pop %v2217
  %v2220 = vmul.f32 %v2209, %v2218
  %v2221 = vmul.f32 %v2211, %v2219
  %2222 = vrot.lane.b32.xlu0 %v1964, 48
  %v2223 = vpop.permute.xlu0 %2222
  %2224 = vrot.lane.b32.xlu0 %v1963, 48
  %v2225 = vpop.permute.xlu0 %2224
  %v2228 = vsel %vm335, %v2220, 0
  %v2231 = vsel %vm335, %v2221, 0
  %v2233 = vsel %vm122, %v2225, 0
  %2235 = vmatpush.msra.mxu0 0.0
  %2236 = vmatpush.msra.mxu0 0.0
  %2237 = vmatpush.msra.mxu0 0.0
  %2238 = vmatpush.msra.mxu0 0.0
  %2239 = vmatpush.msra.mxu0 0.0
  %2240 = vmatpush.msra.mxu0 0.0
  %2241 = vmatpush.msra.mxu0 0.0
  %2242 = vmatpush.msra.mxu0 0.0
  %2243 = vmatpush.msra.mxu0 0.0
  %2244 = vmatpush.msra.mxu0 0.0
  %2245 = vmatpush.msra.mxu0 0.0
  %2246 = vmatpush.msra.mxu0 0.0
  %2247 = vmatpush.msra.mxu0 0.0
  %2248 = vmatpush.msra.mxu0 0.0
  %2249 = vmatpush.msra.mxu0 %v2233
  %2250 = vmatpush.msra.mxu0 %v2223
  %2251 = vmatmul.f32.gmra.mxu0 %v2228
  %v2252 = vpop.f32.mrf.mxu0
  %v2253 = vadd.f32 0.0, %v2252
  %2254 = vmatmul.f32.gmra.mxu0 %v2231
  %v2255 = vpop.f32.mrf.mxu0
  %v2256 = vadd.f32 0.0, %v2255
  %2257 = vdwg.mxu0
  %2258 = vrot.lane.b32.xlu0 %v1964, 104
  %v2259 = vpop.permute.xlu0 %2258
  %2260 = vrot.lane.b32.xlu0 %v1963, 104
  %v2261 = vpop.permute.xlu0 %2260
  %2262 = vrot.lane.b32.xlu0 %v1964, 72
  %v2263 = vpop.permute.xlu0 %2262
  %2264 = vrot.lane.b32.xlu0 %v1963, 72
  %v2265 = vpop.permute.xlu0 %2264
  %v2266 = vsel %vm301, %v2259, 0
  %v2268 = vsel %vm301, %v2261, 0
  %v2270 = vsel %vm301, %v2263, 0
  %v2272 = vsel %vm301, %v2265, 0
  %2274 = vmatpush.xpose.msra.mxu0 0.0
  %2275 = vmatpush.xpose.msra.mxu0 0.0
  %2276 = vmatpush.xpose.msra.mxu0 0.0
  %2277 = vmatpush.xpose.msra.mxu0 0.0
  %2278 = vmatpush.xpose.msra.mxu0 0.0
  %2279 = vmatpush.xpose.msra.mxu0 0.0
  %2280 = vmatpush.xpose.msra.mxu0 0.0
  %2281 = vmatpush.xpose.msra.mxu0 0.0
  %2282 = vmatpush.xpose.msra.mxu0 0.0
  %2283 = vmatpush.xpose.msra.mxu0 0.0
  %2284 = vmatpush.xpose.msra.mxu0 0.0
  %2285 = vmatpush.xpose.msra.mxu0 0.0
  %2286 = vmatpush.xpose.msra.mxu0 0.0
  %2287 = vmatpush.xpose.msra.mxu0 0.0
  %2288 = vmatpush.xpose.msra.mxu0 %v2272
  %2289 = vmatpush.xpose.msra.mxu0 %v2270
  %2290 = vmatmul.f32.gmra.mxu0 %v2266
  %v2291 = vpop.f32.mrf.mxu0
  %v2292 = vadd.f32 0.0, %v2291
  %2293 = vmatmul.f32.gmra.mxu0 %v2268
  %v2294 = vpop.f32.mrf.mxu0
  %v2295 = vadd.f32 0.0, %v2294
  %2296 = vdwg.mxu0
  %v2297 = vmul.f32 %v2292, 0.35355338
  %v2298 = vmul.f32 %v2295, 0.35355338
  %v2299 = vsel %vm335, %v2297, -inf
  %2300 = vmax.xlane.f32.xlu0 %v2299
  %v2301 = vpop.xlane.xlu0 %2300
  %v2302 = vsel %vm339, %v2298, -inf
  %2303 = vmax.xlane.f32.xlu0 %v2302
  %v2304 = vpop.xlane.xlu0 %2303
  %v2305 = vsub.f32 %v2297, %v2301
  %v2306 = vsub.f32 %v2298, %v2304
  %v2307 = vmul.f32 %v2305, 1.442695
  %v2308 = vpow.pop %v2307
  %v2309 = vmul.f32 %v2306, 1.442695
  %v2310 = vpow.pop %v2309
  %v2311 = vsel %vm335, %v2308, 0.0
  %2312 = vadd.xlane.f32.xlu0 %v2311
  %v2313 = vpop.xlane.xlu0 %2312
  %v2314 = vsel %vm339, %v2310, 0.0
  %2315 = vadd.xlane.f32.xlu0 %v2314
  %v2316 = vpop.xlane.xlu0 %2315
  %v2317 = vrcp.pop %v2313
  %v2318 = vrcp.pop %v2316
  %v2319 = vmul.f32 %v2308, %v2317
  %v2320 = vmul.f32 %v2310, %v2318
  %2321 = vrot.lane.b32.xlu0 %v1964, 40
  %v2322 = vpop.permute.xlu0 %2321
  %2323 = vrot.lane.b32.xlu0 %v1963, 40
  %v2324 = vpop.permute.xlu0 %2323
  %v2327 = vsel %vm335, %v2319, 0
  %v2330 = vsel %vm335, %v2320, 0
  %v2332 = vsel %vm122, %v2324, 0
  %2334 = vmatpush.msra.mxu0 0.0
  %2335 = vmatpush.msra.mxu0 0.0
  %2336 = vmatpush.msra.mxu0 0.0
  %2337 = vmatpush.msra.mxu0 0.0
  %2338 = vmatpush.msra.mxu0 0.0
  %2339 = vmatpush.msra.mxu0 0.0
  %2340 = vmatpush.msra.mxu0 0.0
  %2341 = vmatpush.msra.mxu0 0.0
  %2342 = vmatpush.msra.mxu0 0.0
  %2343 = vmatpush.msra.mxu0 0.0
  %2344 = vmatpush.msra.mxu0 0.0
  %2345 = vmatpush.msra.mxu0 0.0
  %2346 = vmatpush.msra.mxu0 0.0
  %2347 = vmatpush.msra.mxu0 0.0
  %2348 = vmatpush.msra.mxu0 %v2332
  %2349 = vmatpush.msra.mxu0 %v2322
  %2350 = vmatmul.f32.gmra.mxu0 %v2327
  %v2351 = vpop.f32.mrf.mxu0
  %v2352 = vadd.f32 0.0, %v2351
  %2353 = vmatmul.f32.gmra.mxu0 %v2330
  %v2354 = vpop.f32.mrf.mxu0
  %v2355 = vadd.f32 0.0, %v2354
  %2356 = vdwg.mxu0
  %2359 = vrot.lane.b32.xlu0 %v2154, 8
  %v2360 = vpop.permute.xlu0 %2359
  %2361 = vrot.lane.b32.xlu0 %v2157, 8
  %v2362 = vpop.permute.xlu0 %2361
  %2367 = vrot.lane.b32.xlu0 %v2253, 16
  %v2368 = vpop.permute.xlu0 %2367
  %2369 = vrot.lane.b32.xlu0 %v2256, 16
  %v2370 = vpop.permute.xlu0 %2369
  %2375 = vrot.lane.b32.xlu0 %v2352, 24
  %v2376 = vpop.permute.xlu0 %2375
  %2377 = vrot.lane.b32.xlu0 %v2355, 24
  %v2378 = vpop.permute.xlu0 %2377
  %v2381 = vsel %vm301, %v2055, %v2360
  %v2382 = vsel %vm301, %v2058, %v2362
  %v2383 = vsel %vm718, %v2381, %v2368
  %v2384 = vsel %vm718, %v2382, %v2370
  %v2385 = vsel %vm721, %v2383, %v2376
  %v2386 = vsel %vm721, %v2384, %v2378
  %v2389 = vrot.slane %v2385, 7
  %v2390 = vrot.slane %v2386, 7
  %v2391 = vsel %vm122, %v2389, %v2390
  %v2393 = vsel %vm122, %v1960, %v2389
  %s2394 = scalar_lea.vmem %s10, 32
  %v2395 = vld [vmem:[%s2394] sm:$0xff]
  %v2396 = vld [vmem:[%s2394 + $0x8] sm:$0xff]
  %v2397 = vld [vmem:[%s2394 + $0x10] sm:$0xff]
  %v2398 = vld [vmem:[%s2394 + $0x18] sm:$0xff]
  %v2400 = vsel %vm165, %v1959, 0
  %v2403 = vsel %vm165, %v2393, 0
  %v2405 = vsel %vm165, %v2391, 0
  %2407 = vmatpush.msra.mxu0 0.0
  %2408 = vmatpush.msra.mxu0 0.0
  %2409 = vmatpush.msra.mxu0 0.0
  %2410 = vmatpush.msra.mxu0 0.0
  %2411 = vmatpush.msra.mxu0 0.0
  %2412 = vmatpush.msra.mxu0 0.0
  %2413 = vmatpush.msra.mxu0 0.0
  %2414 = vmatpush.msra.mxu0 0.0
  %2415 = vmatpush.msra.mxu0 0.0
  %2416 = vmatpush.msra.mxu0 0.0
  %2417 = vmatpush.msra.mxu0 0.0
  %2418 = vmatpush.msra.mxu0 0.0
  %2419 = vmatpush.msra.mxu0 %v2398
  %2420 = vmatpush.msra.mxu0 %v2397
  %2421 = vmatpush.msra.mxu0 %v2396
  %2422 = vmatpush.msra.mxu0 %v2395
  %2423 = vmatmul.f32.gmra.mxu0 %v2400
  %v2424 = vpop.f32.mrf.mxu0
  %v2425 = vadd.f32 0.0, %v2424
  %2426 = vmatmul.f32.gmra.mxu0 %v2403
  %v2427 = vpop.f32.mrf.mxu0
  %v2428 = vadd.f32 0.0, %v2427
  %2429 = vmatmul.f32.gmra.mxu0 %v2405
  %v2430 = vpop.f32.mrf.mxu0
  %v2431 = vadd.f32 0.0, %v2430
  %2432 = vdwg.mxu0
  %v2433 = vadd.f32 %v1407, %v2425
  %v2434 = vadd.f32 %v1408, %v2428
  %v2435 = vadd.f32 %v1409, %v2431
  %s2436 = scalar_lea.vmem %s11, 1
  %v2437 = vld [vmem:[%s2436] sm:$0x1]
  %v2439 = vperm.slane %v2437, 0
  %v2441 = vadd.f32 %v2433, %v2439
  %v2442 = vadd.f32 %v2434, %v2439
  %v2443 = vadd.f32 %v2435, %v2439
  %s2444 = scalar_lea.vmem %s12, 1
  %v2445 = vld [vmem:[%s2444] sm:$0x1]
  %s2446 = scalar_lea.vmem %s13, 1
  %v2447 = vld [vmem:[%s2446] sm:$0x1]
  %v2448 = vsel %vm165, %v2441, 0.0
  %2449 = vadd.xlane.f32.xlu0 %v2448
  %v2450 = vpop.xlane.xlu0 %2449
  %v2451 = vsel %vm165, %v2442, 0.0
  %2452 = vadd.xlane.f32.xlu0 %v2451
  %v2453 = vpop.xlane.xlu0 %2452
  %v2454 = vsel %vm172, %v2443, 0.0
  %2455 = vadd.xlane.f32.xlu0 %v2454
  %v2456 = vpop.xlane.xlu0 %2455
  %v2457 = vmul.f32 %v2450, %v182
  %v2458 = vmul.f32 %v2453, %v182
  %v2459 = vmul.f32 %v2456, %v182
  %v2460 = vsub.f32 %v2441, %v2457
  %v2461 = vsub.f32 %v2442, %v2458
  %v2462 = vsub.f32 %v2443, %v2459
  %v2463 = vmul.f32 %v2460, %v2460
  %v2464 = vmul.f32 %v2461, %v2461
  %v2465 = vmul.f32 %v2462, %v2462
  %v2466 = vsel %vm165, %v2463, 0.0
  %2467 = vadd.xlane.f32.xlu0 %v2466
  %v2468 = vpop.xlane.xlu0 %2467
  %v2469 = vsel %vm165, %v2464, 0.0
  %2470 = vadd.xlane.f32.xlu0 %v2469
  %v2471 = vpop.xlane.xlu0 %2470
  %v2472 = vsel %vm172, %v2465, 0.0
  %2473 = vadd.xlane.f32.xlu0 %v2472
  %v2474 = vpop.xlane.xlu0 %2473
  %v2475 = vmul.f32 %v2468, %v182
  %v2476 = vmul.f32 %v2471, %v182
  %v2477 = vmul.f32 %v2474, %v182
  %v2478 = vadd.f32 %v2475, 1e-06
  %v2479 = vadd.f32 %v2476, 1e-06
  %v2480 = vadd.f32 %v2477, 1e-06
  %v2481 = vrsqrt.pop %v2478
  %v2482 = vmul.f32 %v2481, %v2478
  %v2483 = vmul.f32 %v2482, %v2481
  %v2484 = vmul.f32 0.5, %v2483
  %v2485 = vsub.f32 1.5, %v2484
  %v2486 = vmul.f32 %v2481, %v2485
  %vm2487 = vweird.f32 %v2478
  %vm2488 = vweird.f32 %v2481
  %vm2489 = vmor %vm2487, %vm2488
  %v2490 = vsel %vm2489, %v2481, %v2486
  %v2491 = vrsqrt.pop %v2479
  %v2492 = vmul.f32 %v2491, %v2479
  %v2493 = vmul.f32 %v2492, %v2491
  %v2494 = vmul.f32 0.5, %v2493
  %v2495 = vsub.f32 1.5, %v2494
  %v2496 = vmul.f32 %v2491, %v2495
  %vm2497 = vweird.f32 %v2479
  %vm2498 = vweird.f32 %v2491
  %vm2499 = vmor %vm2497, %vm2498
  %v2500 = vsel %vm2499, %v2491, %v2496
  %v2501 = vrsqrt.pop %v2480
  %v2502 = vmul.f32 %v2501, %v2480
  %v2503 = vmul.f32 %v2502, %v2501
  %v2504 = vmul.f32 0.5, %v2503
  %v2505 = vsub.f32 1.5, %v2504
  %v2506 = vmul.f32 %v2501, %v2505
  %vm2507 = vweird.f32 %v2480
  %vm2508 = vweird.f32 %v2501
  %vm2509 = vmor %vm2507, %vm2508
  %v2510 = vsel %vm2509, %v2501, %v2506
  %v2511 = vmul.f32 %v2460, %v2490
  %v2512 = vmul.f32 %v2461, %v2500
  %v2513 = vmul.f32 %v2462, %v2510
  %v2515 = vperm.slane %v2445, 0
  %v2517 = vmul.f32 %v2511, %v2515
  %v2518 = vmul.f32 %v2512, %v2515
  %v2519 = vmul.f32 %v2513, %v2515
  %v2521 = vperm.slane %v2447, 0
  %v2523 = vadd.f32 %v2517, %v2521
  %v2524 = vadd.f32 %v2518, %v2521
  %v2525 = vadd.f32 %v2519, %v2521
  %s2526 = scalar_lea.vmem %s14, 32
  %v2527 = vld [vmem:[%s2526] sm:$0xff]
  %v2528 = vld [vmem:[%s2526 + $0x8] sm:$0xff]
  %v2529 = vld [vmem:[%s2526 + $0x10] sm:$0xff]
  %v2530 = vld [vmem:[%s2526 + $0x18] sm:$0xff]
  %s2531 = scalar_lea.vmem %s15, 1
  %v2532 = vld [vmem:[%s2531] sm:$0x1]
  %v2534 = vperm.slane %v2532, 0
  %v2537 = vsel %vm165, %v2523, 0
  %v2540 = vsel %vm165, %v2524, 0
  %v2543 = vsel %vm165, %v2525, 0
  %2545 = vmatpush.msra.mxu0 0.0
  %2546 = vmatpush.msra.mxu0 0.0
  %2547 = vmatpush.msra.mxu0 0.0
  %2548 = vmatpush.msra.mxu0 0.0
  %2549 = vmatpush.msra.mxu0 0.0
  %2550 = vmatpush.msra.mxu0 0.0
  %2551 = vmatpush.msra.mxu0 0.0
  %2552 = vmatpush.msra.mxu0 0.0
  %2553 = vmatpush.msra.mxu0 0.0
  %2554 = vmatpush.msra.mxu0 0.0
  %2555 = vmatpush.msra.mxu0 0.0
  %2556 = vmatpush.msra.mxu0 0.0
  %2557 = vmatpush.msra.mxu0 %v2530
  %2558 = vmatpush.msra.mxu0 %v2529
  %2559 = vmatpush.msra.mxu0 %v2528
  %2560 = vmatpush.msra.mxu0 %v2527
  %2561 = vmatmul.f32.gmra.mxu0 %v2537
  %v2562 = vpop.f32.mrf.mxu0
  %v2563 = vadd.f32 %v2534, %v2562
  %2564 = vmatmul.f32.gmra.mxu0 %v2540
  %v2565 = vpop.f32.mrf.mxu0
  %v2566 = vadd.f32 %v2534, %v2565
  %2567 = vmatmul.f32.gmra.mxu0 %v2543
  %v2568 = vpop.f32.mrf.mxu0
  %v2569 = vadd.f32 %v2534, %v2568
  %2570 = vdwg.mxu0
  %v2571 = vmul.f32 %v2563, 0.5
  %v2572 = vmul.f32 %v2566, 0.5
  %v2573 = vmul.f32 %v2569, 0.5
  %v2574 = vmul.f32 %v2563, 0.044715
  %v2575 = vmul.f32 %v2566, 0.044715
  %v2576 = vmul.f32 %v2569, 0.044715
  %v2577 = vmul.f32 %v2574, %v2563
  %v2578 = vmul.f32 %v2575, %v2566
  %v2579 = vmul.f32 %v2576, %v2569
  %v2580 = vmul.f32 %v2577, %v2563
  %v2581 = vmul.f32 %v2578, %v2566
  %v2582 = vmul.f32 %v2579, %v2569
  %v2583 = vadd.f32 %v2563, %v2580
  %v2584 = vadd.f32 %v2566, %v2581
  %v2585 = vadd.f32 %v2569, %v2582
  %v2586 = vmul.f32 %v2583, 0.7978846
  %v2587 = vmul.f32 %v2584, 0.7978846
  %v2588 = vmul.f32 %v2585, 0.7978846
  %v2589 = vtanh.pop %v2586
  %v2590 = vtanh.pop %v2587
  %v2591 = vtanh.pop %v2588
  %v2592 = vadd.f32 %v2589, 1.0
  %v2593 = vadd.f32 %v2590, 1.0
  %v2594 = vadd.f32 %v2591, 1.0
  %v2595 = vmul.f32 %v2571, %v2592
  %v2596 = vmul.f32 %v2572, %v2593
  %v2597 = vmul.f32 %v2573, %v2594
  %s2598 = scalar_lea.vmem %s16, 64
  %v2599 = vld [vmem:[%s2598] sm:$0xff]
  %v2600 = vld [vmem:[%s2598 + $0x8] sm:$0xff]
  %v2601 = vld [vmem:[%s2598 + $0x10] sm:$0xff]
  %v2602 = vld [vmem:[%s2598 + $0x18] sm:$0xff]
  %v2603 = vld [vmem:[%s2598 + $0x20] sm:$0xff]
  %v2604 = vld [vmem:[%s2598 + $0x28] sm:$0xff]
  %v2605 = vld [vmem:[%s2598 + $0x30] sm:$0xff]
  %v2606 = vld [vmem:[%s2598 + $0x38] sm:$0xff]
  %v2608 = vsel %vm1364, %v2595, 0
  %v2611 = vsel %vm1364, %v2596, 0
  %v2614 = vsel %vm1364, %v2597, 0
  %2616 = vmatpush.msra.mxu0 0.0
  %2617 = vmatpush.msra.mxu0 0.0
  %2618 = vmatpush.msra.mxu0 0.0
  %2619 = vmatpush.msra.mxu0 0.0
  %2620 = vmatpush.msra.mxu0 0.0
  %2621 = vmatpush.msra.mxu0 0.0
  %2622 = vmatpush.msra.mxu0 0.0
  %2623 = vmatpush.msra.mxu0 0.0
  %2624 = vmatpush.msra.mxu0 %v2606
  %2625 = vmatpush.msra.mxu0 %v2605
  %2626 = vmatpush.msra.mxu0 %v2604
  %2627 = vmatpush.msra.mxu0 %v2603
  %2628 = vmatpush.msra.mxu0 %v2602
  %2629 = vmatpush.msra.mxu0 %v2601
  %2630 = vmatpush.msra.mxu0 %v2600
  %2631 = vmatpush.msra.mxu0 %v2599
  %2632 = vmatmul.f32.gmra.mxu0 %v2608
  %v2633 = vpop.f32.mrf.mxu0
  %v2634 = vadd.f32 0.0, %v2633
  %2635 = vmatmul.f32.gmra.mxu0 %v2611
  %v2636 = vpop.f32.mrf.mxu0
  %v2637 = vadd.f32 0.0, %v2636
  %2638 = vmatmul.f32.gmra.mxu0 %v2614
  %v2639 = vpop.f32.mrf.mxu0
  %2640 = vdwg.mxu0
  %v2641 = vadd.f32 %v2441, %v2634
  %v2642 = vadd.f32 %v2442, %v2637
  %s2643 = scalar_lea.vmem %s17, 1
  %v2644 = vld [vmem:[%s2643] sm:$0x1]
  %v2646 = vperm.slane %v2644, 0
  %v2648 = vadd.f32 %v2641, %v2646
  %v2649 = vadd.f32 %v2642, %v2646
  %v2650 = vsel %vm122, %v2648, %v2649
  %v2651 = vld [vmem:[%s18] sm:$0x1]
  %v2652 = vld [vmem:[%s19] sm:$0x1]
  %v2653 = vsel %vm172, %v2650, 0.0
  %2654 = vadd.xlane.f32.xlu0 %v2653
  %v2655 = vpop.xlane.xlu0 %2654
  %v2656 = vmul.f32 %v2655, %v182
  %v2657 = vsub.f32 %v2650, %v2656
  %v2658 = vmul.f32 %v2657, %v2657
  %v2659 = vsel %vm172, %v2658, 0.0
  %2660 = vadd.xlane.f32.xlu0 %v2659
  %v2661 = vpop.xlane.xlu0 %2660
  %v2662 = vmul.f32 %v2661, %v182
  %v2663 = vadd.f32 %v2662, 1e-06
  %v2664 = vrsqrt.pop %v2663
  %v2665 = vmul.f32 %v2664, %v2663
  %v2666 = vmul.f32 %v2665, %v2664
  %v2667 = vmul.f32 0.5, %v2666
  %v2668 = vsub.f32 1.5, %v2667
  %v2669 = vmul.f32 %v2664, %v2668
  %vm2670 = vweird.f32 %v2663
  %vm2671 = vweird.f32 %v2664
  %vm2672 = vmor %vm2670, %vm2671
  %v2673 = vsel %vm2672, %v2664, %v2669
  %v2674 = vmul.f32 %v2657, %v2673
  %v2676 = vperm.slane %v2651, 0
  %v2678 = vmul.f32 %v2674, %v2676
  %v2680 = vperm.slane %v2652, 0
  %v2682 = vadd.f32 %v2678, %v2680
  %v2683 = vld [vmem:[%s20] sm:$0xff]
  %v2684 = vld [vmem:[%s20 + $0x8] sm:$0xff]
  %v2685 = vld [vmem:[%s20 + $0x10] sm:$0xff]
  %v2686 = vld [vmem:[%s20 + $0x18] sm:$0xff]
  %v2687 = vld [vmem:[%s20 + $0x20] sm:$0xff]
  %v2688 = vld [vmem:[%s20 + $0x28] sm:$0xff]
  %v2689 = vld [vmem:[%s20 + $0x30] sm:$0xff]
  %v2690 = vld [vmem:[%s20 + $0x38] sm:$0xff]
  %v2691 = vld [vmem:[%s20 + $0x40] sm:$0xff]
  %v2692 = vld [vmem:[%s20 + $0x48] sm:$0xff]
  %v2693 = vld [vmem:[%s20 + $0x50] sm:$0xff]
  %v2694 = vld [vmem:[%s20 + $0x58] sm:$0xff]
  %v2695 = vld [vmem:[%s20 + $0x60] sm:$0xff]
  %v2696 = vld [vmem:[%s20 + $0x68] sm:$0xff]
  %v2697 = vld [vmem:[%s20 + $0x70] sm:$0xff]
  %v2698 = vld [vmem:[%s20 + $0x78] sm:$0xff]
  %v2699 = vld [vmem:[%s20 + $0x80] sm:$0xff]
  %v2700 = vld [vmem:[%s20 + $0x88] sm:$0xff]
  %v2701 = vld [vmem:[%s20 + $0x90] sm:$0xff]
  %v2702 = vld [vmem:[%s20 + $0x98] sm:$0xff]
  %v2703 = vld [vmem:[%s20 + $0xa0] sm:$0xff]
  %v2704 = vld [vmem:[%s20 + $0xa8] sm:$0xff]
  %v2705 = vld [vmem:[%s20 + $0xb0] sm:$0xff]
  %v2706 = vld [vmem:[%s20 + $0xb8] sm:$0xff]
  %v2707 = vld [vmem:[%s20 + $0xc0] sm:$0xff]
  %v2708 = vld [vmem:[%s20 + $0xc8] sm:$0xff]
  %v2709 = vld [vmem:[%s20 + $0xd0] sm:$0xff]
  %v2710 = vld [vmem:[%s20 + $0xd8] sm:$0xff]
  %v2711 = vld [vmem:[%s20 + $0xe0] sm:$0xff]
  %v2712 = vld [vmem:[%s20 + $0xe8] sm:$0xff]
  %v2713 = vld [vmem:[%s20 + $0xf0] sm:$0xff]
  %v2714 = vld [vmem:[%s20 + $0xf8] sm:$0xff]
  %v2715 = vld [vmem:[%s21] sm:$0xff]
  %v2717 = vperm.slane %v2715, 0
  %v2718 = vperm.slane %v2715, 1
  %v2719 = vperm.slane %v2715, 2
  %v2720 = vperm.slane %v2715, 3
  %v2721 = vperm.slane %v2715, 4
  %v2722 = vperm.slane %v2715, 5
  %v2723 = vperm.slane %v2715, 6
  %v2724 = vperm.slane %v2715, 7
  %v2734 = vsel %vm165, %v2682, 0
  %2736 = vmatpush.msra.mxu0 0.0
  %2737 = vmatpush.msra.mxu0 0.0
  %2738 = vmatpush.msra.mxu0 0.0
  %2739 = vmatpush.msra.mxu0 0.0
  %2740 = vmatpush.msra.mxu0 0.0
  %2741 = vmatpush.msra.mxu0 0.0
  %2742 = vmatpush.msra.mxu0 0.0
  %2743 = vmatpush.msra.mxu0 0.0
  %2744 = vmatpush.msra.mxu0 0.0
  %2745 = vmatpush.msra.mxu0 0.0
  %2746 = vmatpush.msra.mxu0 0.0
  %2747 = vmatpush.msra.mxu0 0.0
  %2748 = vmatpush.msra.mxu0 %v2707
  %2749 = vmatpush.msra.mxu0 %v2699
  %2750 = vmatpush.msra.mxu0 %v2691
  %2751 = vmatpush.msra.mxu0 %v2683
  %2752 = vmatmul.f32.gmra.mxu0 %v2734
  %v2753 = vpop.f32.mrf.mxu0
  %v2754 = vadd.f32 %v2717, %v2753
  %2755 = vdwg.mxu0
  %2756 = vmatpush.msra.mxu0 0.0
  %2757 = vmatpush.msra.mxu0 0.0
  %2758 = vmatpush.msra.mxu0 0.0
  %2759 = vmatpush.msra.mxu0 0.0
  %2760 = vmatpush.msra.mxu0 0.0
  %2761 = vmatpush.msra.mxu0 0.0
  %2762 = vmatpush.msra.mxu0 0.0
  %2763 = vmatpush.msra.mxu0 0.0
  %2764 = vmatpush.msra.mxu0 0.0
  %2765 = vmatpush.msra.mxu0 0.0
  %2766 = vmatpush.msra.mxu0 0.0
  %2767 = vmatpush.msra.mxu0 0.0
  %2768 = vmatpush.msra.mxu0 %v2708
  %2769 = vmatpush.msra.mxu0 %v2700
  %2770 = vmatpush.msra.mxu0 %v2692
  %2771 = vmatpush.msra.mxu0 %v2684
  %2772 = vmatmul.f32.gmra.mxu0 %v2734
  %v2773 = vpop.f32.mrf.mxu0
  %v2774 = vadd.f32 %v2718, %v2773
  %2775 = vdwg.mxu0
  %2776 = vmatpush.msra.mxu0 0.0
  %2777 = vmatpush.msra.mxu0 0.0
  %2778 = vmatpush.msra.mxu0 0.0
  %2779 = vmatpush.msra.mxu0 0.0
  %2780 = vmatpush.msra.mxu0 0.0
  %2781 = vmatpush.msra.mxu0 0.0
  %2782 = vmatpush.msra.mxu0 0.0
  %2783 = vmatpush.msra.mxu0 0.0
  %2784 = vmatpush.msra.mxu0 0.0
  %2785 = vmatpush.msra.mxu0 0.0
  %2786 = vmatpush.msra.mxu0 0.0
  %2787 = vmatpush.msra.mxu0 0.0
  %2788 = vmatpush.msra.mxu0 %v2709
  %2789 = vmatpush.msra.mxu0 %v2701
  %2790 = vmatpush.msra.mxu0 %v2693
  %2791 = vmatpush.msra.mxu0 %v2685
  %2792 = vmatmul.f32.gmra.mxu0 %v2734
  %v2793 = vpop.f32.mrf.mxu0
  %v2794 = vadd.f32 %v2719, %v2793
  %2795 = vdwg.mxu0
  %2796 = vmatpush.msra.mxu0 0.0
  %2797 = vmatpush.msra.mxu0 0.0
  %2798 = vmatpush.msra.mxu0 0.0
  %2799 = vmatpush.msra.mxu0 0.0
  %2800 = vmatpush.msra.mxu0 0.0
  %2801 = vmatpush.msra.mxu0 0.0
  %2802 = vmatpush.msra.mxu0 0.0
  %2803 = vmatpush.msra.mxu0 0.0
  %2804 = vmatpush.msra.mxu0 0.0
  %2805 = vmatpush.msra.mxu0 0.0
  %2806 = vmatpush.msra.mxu0 0.0
  %2807 = vmatpush.msra.mxu0 0.0
  %2808 = vmatpush.msra.mxu0 %v2710
  %2809 = vmatpush.msra.mxu0 %v2702
  %2810 = vmatpush.msra.mxu0 %v2694
  %2811 = vmatpush.msra.mxu0 %v2686
  %2812 = vmatmul.f32.gmra.mxu0 %v2734
  %v2813 = vpop.f32.mrf.mxu0
  %v2814 = vadd.f32 %v2720, %v2813
  %2815 = vdwg.mxu0
  %2816 = vmatpush.msra.mxu0 0.0
  %2817 = vmatpush.msra.mxu0 0.0
  %2818 = vmatpush.msra.mxu0 0.0
  %2819 = vmatpush.msra.mxu0 0.0
  %2820 = vmatpush.msra.mxu0 0.0
  %2821 = vmatpush.msra.mxu0 0.0
  %2822 = vmatpush.msra.mxu0 0.0
  %2823 = vmatpush.msra.mxu0 0.0
  %2824 = vmatpush.msra.mxu0 0.0
  %2825 = vmatpush.msra.mxu0 0.0
  %2826 = vmatpush.msra.mxu0 0.0
  %2827 = vmatpush.msra.mxu0 0.0
  %2828 = vmatpush.msra.mxu0 %v2711
  %2829 = vmatpush.msra.mxu0 %v2703
  %2830 = vmatpush.msra.mxu0 %v2695
  %2831 = vmatpush.msra.mxu0 %v2687
  %2832 = vmatmul.f32.gmra.mxu0 %v2734
  %v2833 = vpop.f32.mrf.mxu0
  %v2834 = vadd.f32 %v2721, %v2833
  %2835 = vdwg.mxu0
  %2836 = vmatpush.msra.mxu0 0.0
  %2837 = vmatpush.msra.mxu0 0.0
  %2838 = vmatpush.msra.mxu0 0.0
  %2839 = vmatpush.msra.mxu0 0.0
  %2840 = vmatpush.msra.mxu0 0.0
  %2841 = vmatpush.msra.mxu0 0.0
  %2842 = vmatpush.msra.mxu0 0.0
  %2843 = vmatpush.msra.mxu0 0.0
  %2844 = vmatpush.msra.mxu0 0.0
  %2845 = vmatpush.msra.mxu0 0.0
  %2846 = vmatpush.msra.mxu0 0.0
  %2847 = vmatpush.msra.mxu0 0.0
  %2848 = vmatpush.msra.mxu0 %v2712
  %2849 = vmatpush.msra.mxu0 %v2704
  %2850 = vmatpush.msra.mxu0 %v2696
  %2851 = vmatpush.msra.mxu0 %v2688
  %2852 = vmatmul.f32.gmra.mxu0 %v2734
  %v2853 = vpop.f32.mrf.mxu0
  %v2854 = vadd.f32 %v2722, %v2853
  %2855 = vdwg.mxu0
  %2856 = vmatpush.msra.mxu0 0.0
  %2857 = vmatpush.msra.mxu0 0.0
  %2858 = vmatpush.msra.mxu0 0.0
  %2859 = vmatpush.msra.mxu0 0.0
  %2860 = vmatpush.msra.mxu0 0.0
  %2861 = vmatpush.msra.mxu0 0.0
  %2862 = vmatpush.msra.mxu0 0.0
  %2863 = vmatpush.msra.mxu0 0.0
  %2864 = vmatpush.msra.mxu0 0.0
  %2865 = vmatpush.msra.mxu0 0.0
  %2866 = vmatpush.msra.mxu0 0.0
  %2867 = vmatpush.msra.mxu0 0.0
  %2868 = vmatpush.msra.mxu0 %v2713
  %2869 = vmatpush.msra.mxu0 %v2705
  %2870 = vmatpush.msra.mxu0 %v2697
  %2871 = vmatpush.msra.mxu0 %v2689
  %2872 = vmatmul.f32.gmra.mxu0 %v2734
  %v2873 = vpop.f32.mrf.mxu0
  %v2874 = vadd.f32 %v2723, %v2873
  %2875 = vdwg.mxu0
  %2876 = vmatpush.msra.mxu0 0.0
  %2877 = vmatpush.msra.mxu0 0.0
  %2878 = vmatpush.msra.mxu0 0.0
  %2879 = vmatpush.msra.mxu0 0.0
  %2880 = vmatpush.msra.mxu0 0.0
  %2881 = vmatpush.msra.mxu0 0.0
  %2882 = vmatpush.msra.mxu0 0.0
  %2883 = vmatpush.msra.mxu0 0.0
  %2884 = vmatpush.msra.mxu0 0.0
  %2885 = vmatpush.msra.mxu0 0.0
  %2886 = vmatpush.msra.mxu0 0.0
  %2887 = vmatpush.msra.mxu0 0.0
  %2888 = vmatpush.msra.mxu0 %v2714
  %2889 = vmatpush.msra.mxu0 %v2706
  %2890 = vmatpush.msra.mxu0 %v2698
  %2891 = vmatpush.msra.mxu0 %v2690
  %2892 = vmatmul.f32.gmra.mxu0 %v2734
  %v2893 = vpop.f32.mrf.mxu0
  %v2894 = vadd.f32 %v2724, %v2893
  %2895 = vdwg.mxu0
  %v2904 = vrot.slane %v2774, 7
  %v2905 = vrot.slane %v2794, 6
  %v2906 = vrot.slane %v2814, 5
  %v2907 = vrot.slane %v2834, 4
  %v2908 = vrot.slane %v2854, 3
  %v2909 = vrot.slane %v2874, 2
  %v2910 = vrot.slane %v2894, 1
  %v2911 = vsel %vm122, %v2754, %v2904
  %vm2912 = vcmask 1042434
  %v2913 = vsel %vm2912, %v2905, %v2906
  %v2914 = vsel %vm134, %v2911, %v2913
  %vm2915 = vcmask 1044484
  %v2916 = vsel %vm2915, %v2907, %v2908
  %vm2917 = vcmask 1046534
  %v2918 = vsel %vm2917, %v2909, %v2910
  %vm2919 = vcmask 1045508
  %v2920 = vsel %vm2919, %v2916, %v2918
  %vm2921 = vcmask 1043456
  %v2922 = vsel %vm2921, %v2914, %v2920
  %2924 = vst [vmem:[%s22] sm:$0xff] %v2922
  %2925 = vst [vmem:[#allocation1] sm:$0xff] %v2754
  %2926 = vst [vmem:[#allocation1 + $0x9] sm:$0xff] %v2774
  %2927 = vst [vmem:[#allocation1 + $0x12] sm:$0xff] %v2794
  %2928 = vst [vmem:[#allocation1 + $0x1b] sm:$0xff] %v2814
  %2929 = vst [vmem:[#allocation1 + $0x24] sm:$0xff] %v2834
  %2930 = vst [vmem:[#allocation1 + $0x2d] sm:$0xff] %v2854
  %2931 = vst [vmem:[#allocation1 + $0x36] sm:$0xff] %v2874
  %2932 = vst [vmem:[#allocation1 + $0x3f] sm:$0xff] %v2894
  %s2933 = scalar_lea.vmem [#allocation1], 1
  %v2934 = vld [vmem:[%s2933] ss:$9 sm:$0xff]
  %s2936 = scalar_lea.vmem %s22, 8
  %2937 = vst [vmem:[%s2936] sm:$0xff] %v2934
  // Predicated region
  $region90: #{_lambda_.1} parent=0 // pred_check
    _
  $region91: #{_lambda_.1} parent=0 // pred_check_branch
    %2939 = sbr.rel (0) target = $region93
  $region92: #{_lambda_.1} parent=0 // pred_region
    _
  $region93: #{_lambda_.1} parent=0 // pred_fallthru
    _
  // Predicated region
  $region94: #{_lambda_.1} parent=0 // pred_check
    _
  $region95: #{_lambda_.1} parent=0 // pred_check_branch
    %2941 = sbr.rel (0) target = $region97
  $region96: #{_lambda_.1} parent=0 // pred_region
    _
  $region97: #{_lambda_.1} parent=0 // pred_fallthru
    _

</llo_original>
